<compile_context>
chip_gen: v7x
topology: tpu7x:2x2x1
jax: 0.10.0
libtpu: 0.0.40
codegen_flags: <defaults>
</compile_context>

<pallas_src>
import functools

import jax
import jax.numpy as jnp
from jax.experimental import pallas as pl
from jax.experimental.pallas import tpu as pltpu


# -----------------------------------------------------------------------------
# Fused decoder-step kernel: everything VMEM-resident, single invocation.
# -----------------------------------------------------------------------------
def decoder_step_kernel(tok_ref, h_ref, enc_ref, tbl_ref,
                        wae_ref, wah_ref, ba_ref, v_ref,
                        wih_ref, bih_ref, whh_ref, bhh_ref,
                        wo_ref, bo_ref,
                        logits_ref, hnew_ref):
    f32 = jnp.float32
    B = tok_ref.shape[0]
    V, E = tbl_ref.shape
    S, _, He2 = enc_ref.shape
    Hd = h_ref.shape[1]
    A = wae_ref.shape[1]

    h = h_ref[...]                     # [B, Hd]
    enc = enc_ref[...]                 # [S, B, He2]  (time-major, as in PyTorch)

    # --- embedding lookup as a one-hot MXU matmul (no dynamic gather) --------
    # TODO(synk): nn.Dropout on the embedding omitted (inference identity).
    tok = tok_ref[...]                 # [B, 1] int32
    one_hot = (tok == jax.lax.broadcasted_iota(jnp.int32, (B, V), 1)).astype(f32)
    emb = jnp.dot(one_hot, tbl_ref[...], preferred_element_type=f32)       # [B, E]

    # --- additive attention: flat MXU matmuls, softmax over source length ----
    enc_flat = enc.reshape(S * B, He2)
    e_enc = jnp.dot(enc_flat, wae_ref[...], preferred_element_type=f32)    # [S*B, A]
    e_hid = jnp.dot(h, wah_ref[...], preferred_element_type=f32) + ba_ref[...]
    energy = jnp.tanh(e_enc.reshape(S, B, A) + e_hid[None, :, :])          # [S, B, A]
    scores = jnp.dot(energy.reshape(S * B, A), v_ref[...],
                     preferred_element_type=f32).reshape(S, B, 1)          # [S, B, 1]
    scores = scores - jnp.max(scores, axis=0, keepdims=True)
    w = jnp.exp(scores)
    attn = w / jnp.sum(w, axis=0, keepdims=True)                           # softmax_s
    ctx = jnp.sum(attn * enc, axis=0)                                      # [B, He2]

    # --- GRU cell: gates fused into lane-dense [*, 3*Hd] matmuls (r|z|n) -----
    x_cat = jnp.concatenate([emb, ctx], axis=-1)                           # [B, E+He2]
    gx = jnp.dot(x_cat, wih_ref[...], preferred_element_type=f32) + bih_ref[...]
    gh = jnp.dot(h, whh_ref[...], preferred_element_type=f32) + bhh_ref[...]
    r = jax.nn.sigmoid(gx[:, :Hd] + gh[:, :Hd])
    z = jax.nn.sigmoid(gx[:, Hd:2 * Hd] + gh[:, Hd:2 * Hd])
    n = jnp.tanh(gx[:, 2 * Hd:] + r * gh[:, 2 * Hd:])
    h_new = (1.0 - z) * n + z * h                                          # [B, Hd]

    # --- fused output projection over concat(h_new, ctx, emb) ---------------
    # vocab is zero-padded to a multiple of 128 lanes -> unmasked (lane-dense)
    # store of the logits.
    o_cat = jnp.concatenate([h_new, ctx, emb], axis=-1)                    # [B, Hd+He2+E]
    logits_ref[...] = (jnp.dot(o_cat, wo_ref[...], preferred_element_type=f32)
                       + bo_ref[...])
    hnew_ref[...] = h_new


@functools.partial(jax.jit, static_argnames=("output_dim",))
def decoder_forward(params, tokens, hidden, encoder_outputs, output_dim):
    """One decoder step. Returns (logits [B, output_dim], hidden [B, Hd])."""
    B = tokens.shape[0]
    Hd = hidden.shape[-1]
    Vp = params['w_out'].shape[-1]          # vocab padded to multiple of 128
    tok2d = tokens.reshape(B, 1).astype(jnp.int32)

    args = (tok2d, hidden, encoder_outputs,
            params['emb_tbl'],
            params['wa_enc'], params['wa_hid'], params['ba'], params['v'],
            params['w_ih'], params['b_ih'], params['w_hh'], params['b_hh'],
            params['w_out'], params['b_out'])
    vmem = pl.BlockSpec(memory_space=pltpu.MemorySpace.VMEM)

    logits_p, h_new = pl.pallas_call(
        decoder_step_kernel,
        out_shape=(jax.ShapeDtypeStruct((B, Vp), jnp.float32),
                   jax.ShapeDtypeStruct((B, Hd), jnp.float32)),
        in_specs=[vmem] * len(args),
        out_specs=(vmem, vmem),
    )(*args)
    return logits_p[:, :output_dim], h_new


# -----------------------------------------------------------------------------
# Parameters (weights already in the fused / lane-padded layout).
# If importing real torch weights: weight_ih_l0 [3Hd, E+He2] -> transpose,
# gate row blocks are already (r | z | n); Linear weights -> transpose.
# -----------------------------------------------------------------------------
def init_params(key, output_dim, emb_dim, enc_hid_dim, dec_hid_dim):
    He2 = 2 * enc_hid_dim
    Hd = dec_hid_dim
    A = dec_hid_dim          # canonical additive-attention projection dim
    E = emb_dim
    V = output_dim
    Vp = ((V + 127) // 128) * 128
    ks = jax.random.split(key, 10)
    nrm = lambda k, s: 0.1 * jax.random.normal(k, s, jnp.float32)

    w_out = nrm(ks[6], (Hd + He2 + E, V))
    b_out = nrm(ks[7], (1, V))
    w_out_p = jnp.zeros((Hd + He2 + E, Vp), jnp.float32).at[:, :V].set(w_out)
    b_out_p = jnp.zeros((1, Vp), jnp.float32).at[:, :V].set(b_out)

    return {
        'emb_tbl': nrm(ks[0], (V, E)),
        # attention Linear(2*He + Hd -> A), split by source + score vector v
        'wa_enc': nrm(ks[1], (He2, A)),
        'wa_hid': nrm(ks[2], (Hd, A)),
        'ba': nrm(ks[3], (1, A)),
        'v': nrm(ks[4], (A, 1)),
        # GRU: input rows ordered (emb, ctx); gate columns (r | z | n)
        'w_ih': nrm(ks[5], (E + He2, 3 * Hd)),
        'b_ih': nrm(ks[8], (1, 3 * Hd)),
        'w_hh': nrm(ks[9], (Hd, 3 * Hd)),
        'b_hh': jnp.zeros((1, 3 * Hd), jnp.float32),
        # output projection over concat(h_new, ctx, emb), vocab padded to Vp
        'w_out': w_out_p,
        'b_out': b_out_p,
    }


# -----------------------------------------------------------------------------
# Pure-JAX reference (mirrors the PyTorch forward) for a correctness check.
# -----------------------------------------------------------------------------
def decoder_ref(params, tokens, hidden, enc, output_dim):
    emb = params['emb_tbl'][tokens]                                       # [B, E]
    e_enc = jnp.einsum('sbh,ha->sba', enc, params['wa_enc'])
    e_hid = hidden @ params['wa_hid'] + params['ba']
    energy = jnp.tanh(e_enc + e_hid[None, :, :])
    scores = jnp.einsum('sba,az->sbz', energy, params['v'])[..., 0]       # [S, B]
    attn = jax.nn.softmax(scores, axis=0)
    ctx = jnp.einsum('sb,sbh->bh', attn, enc)                             # [B, He2]
    Hd = hidden.shape[1]
    x = jnp.concatenate([emb, ctx], axis=-1)
    gx = x @ params['w_ih'] + params['b_ih']
    gh = hidden @ params['w_hh'] + params['b_hh']
    r = jax.nn.sigmoid(gx[:, :Hd] + gh[:, :Hd])
    z = jax.nn.sigmoid(gx[:, Hd:2 * Hd] + gh[:, Hd:2 * Hd])
    n = jnp.tanh(gx[:, 2 * Hd:] + r * gh[:, 2 * Hd:])
    h_new = (1.0 - z) * n + z * hidden
    o = jnp.concatenate([h_new, ctx, emb], axis=-1)
    logits = o @ params['w_out'][:, :output_dim] + params['b_out'][:, :output_dim]
    return logits, h_new


if __name__ == "__main__":
    # keep the XLA reference and the kernel matmuls at the same (full) precision
    jax.config.update("jax_default_matmul_precision", "highest")

    S, B = 8, 8                 # src_len, batch
    OUTPUT_DIM = 24             # target vocab size
    EMB_DIM = 32
    ENC_HID = 32                # encoder hidden -> encoder_outputs last dim = 64
    DEC_HID = 64

    key = jax.random.PRNGKey(0)
    kp, k1, k2, k3 = jax.random.split(key, 4)
    params = init_params(kp, OUTPUT_DIM, EMB_DIM, ENC_HID, DEC_HID)

    tokens = jax.random.randint(k1, (B,), 0, OUTPUT_DIM, dtype=jnp.int32)
    hidden = 0.1 * jax.random.normal(k2, (B, DEC_HID), jnp.float32)
    encoder_outputs = 0.1 * jax.random.normal(k3, (S, B, 2 * ENC_HID), jnp.float32)

    logits, h_new = decoder_forward(params, tokens, hidden, encoder_outputs,
                                    OUTPUT_DIM)
    logits, h_new = jax.block_until_ready((logits, h_new))

    ref_logits, ref_h = decoder_ref(params, tokens, hidden, encoder_outputs,
                                    OUTPUT_DIM)

    assert logits.shape == (B, OUTPUT_DIM), logits.shape
    assert h_new.shape == (B, DEC_HID), h_new.shape
    assert bool(jnp.all(jnp.isfinite(logits))) and bool(jnp.all(jnp.isfinite(h_new)))
    assert jnp.allclose(logits, ref_logits, atol=2e-3, rtol=2e-2), \
        float(jnp.max(jnp.abs(logits - ref_logits)))
    assert jnp.allclose(h_new, ref_h, atol=2e-3, rtol=2e-2), \
        float(jnp.max(jnp.abs(h_new - ref_h)))
    print("KERNEL_OK")
</pallas_src>

<mosaic_0001>
module attributes {stable_mosaic.version = 11 : i64} {
  func.func @decoder_step_kernel(%arg0: memref<8x1xi32, #tpu.memory_space<vmem>>, %arg1: memref<8x64xf32, #tpu.memory_space<vmem>>, %arg2: memref<8x8x64xf32, #tpu.memory_space<vmem>>, %arg3: memref<24x32xf32, #tpu.memory_space<vmem>>, %arg4: memref<64x64xf32, #tpu.memory_space<vmem>>, %arg5: memref<64x64xf32, #tpu.memory_space<vmem>>, %arg6: memref<1x64xf32, #tpu.memory_space<vmem>>, %arg7: memref<64x1xf32, #tpu.memory_space<vmem>>, %arg8: memref<96x192xf32, #tpu.memory_space<vmem>>, %arg9: memref<1x192xf32, #tpu.memory_space<vmem>>, %arg10: memref<64x192xf32, #tpu.memory_space<vmem>>, %arg11: memref<1x192xf32, #tpu.memory_space<vmem>>, %arg12: memref<160x128xf32, #tpu.memory_space<vmem>>, %arg13: memref<1x128xf32, #tpu.memory_space<vmem>>, %arg14: memref<8x128xf32, #tpu.memory_space<vmem>>, %arg15: memref<8x64xf32, #tpu.memory_space<vmem>>) attributes {dimension_semantics = [], scalar_prefetch = 0 : i64, scratch_operands = 0 : i64, tpu.core_type = #tpu.core_type<tc>} {
    %c0 = arith.constant 0 : index
    %c0_0 = arith.constant 0 : index
    %0 = vector.load %arg1[%c0, %c0_0] : memref<8x64xf32, #tpu.memory_space<vmem>>, vector<8x64xf32>
    %c0_1 = arith.constant 0 : index
    %c0_2 = arith.constant 0 : index
    %c0_3 = arith.constant 0 : index
    %1 = vector.load %arg2[%c0_1, %c0_2, %c0_3] : memref<8x8x64xf32, #tpu.memory_space<vmem>>, vector<8x8x64xf32>
    %c0_4 = arith.constant 0 : index
    %c0_5 = arith.constant 0 : index
    %2 = vector.load %arg0[%c0_4, %c0_5] : memref<8x1xi32, #tpu.memory_space<vmem>>, vector<8x1xi32>
    %3 = tpu.iota {dimensions = array<i32: 1>} : vector<8x24xi32>
    %4 = vector.broadcast %2 : vector<8x1xi32> to vector<8x24xi32>
    %5 = arith.cmpi eq, %4, %3 : vector<8x24xi32>
    %6 = arith.extui %5 : vector<8x24xi1> to vector<8x24xi32>
    %7 = arith.sitofp %6 : vector<8x24xi32> to vector<8x24xf32>
    %c0_6 = arith.constant 0 : index
    %c0_7 = arith.constant 0 : index
    %8 = vector.load %arg3[%c0_6, %c0_7] : memref<24x32xf32, #tpu.memory_space<vmem>>, vector<24x32xf32>
    %cst = arith.constant dense<0.000000e+00> : vector<8x32xf32>
    %9 = tpu.matmul %7, %8, %cst {dimension_numbers = #tpu.dot_dimension_numbers<[1], [0], [0], [1], [0, 0, 1, 1], [], []>, precision = #tpu.contract_precision<fp32>} : vector<8x24xf32>, vector<24x32xf32>, vector<8x32xf32> -> vector<8x32xf32>
    %10 = vector.shape_cast %1 : vector<8x8x64xf32> to vector<64x64xf32>
    %c0_8 = arith.constant 0 : index
    %c0_9 = arith.constant 0 : index
    %11 = vector.load %arg4[%c0_8, %c0_9] : memref<64x64xf32, #tpu.memory_space<vmem>>, vector<64x64xf32>
    %cst_10 = arith.constant dense<0.000000e+00> : vector<64x64xf32>
    %12 = tpu.matmul %10, %11, %cst_10 {dimension_numbers = #tpu.dot_dimension_numbers<[1], [0], [0], [1], [0, 0, 1, 1], [], []>, precision = #tpu.contract_precision<fp32>} : vector<64x64xf32>, vector<64x64xf32>, vector<64x64xf32> -> vector<64x64xf32>
    %c0_11 = arith.constant 0 : index
    %c0_12 = arith.constant 0 : index
    %13 = vector.load %arg5[%c0_11, %c0_12] : memref<64x64xf32, #tpu.memory_space<vmem>>, vector<64x64xf32>
    %cst_13 = arith.constant dense<0.000000e+00> : vector<8x64xf32>
    %14 = tpu.matmul %0, %13, %cst_13 {dimension_numbers = #tpu.dot_dimension_numbers<[1], [0], [0], [1], [0, 0, 1, 1], [], []>, precision = #tpu.contract_precision<fp32>} : vector<8x64xf32>, vector<64x64xf32>, vector<8x64xf32> -> vector<8x64xf32>
    %c0_14 = arith.constant 0 : index
    %c0_15 = arith.constant 0 : index
    %15 = vector.load %arg6[%c0_14, %c0_15] : memref<1x64xf32, #tpu.memory_space<vmem>>, vector<1x64xf32>
    %16 = vector.broadcast %15 : vector<1x64xf32> to vector<8x64xf32>
    %17 = arith.addf %14, %16 : vector<8x64xf32>
    %18 = vector.shape_cast %12 : vector<64x64xf32> to vector<8x8x64xf32>
    %19 = vector.shape_cast %17 : vector<8x64xf32> to vector<1x8x64xf32>
    %20 = vector.broadcast %19 : vector<1x8x64xf32> to vector<8x8x64xf32>
    %21 = arith.addf %18, %20 : vector<8x8x64xf32>
    %22 = math.tanh %21 : vector<8x8x64xf32>
    %23 = vector.shape_cast %22 : vector<8x8x64xf32> to vector<64x64xf32>
    %c0_16 = arith.constant 0 : index
    %c0_17 = arith.constant 0 : index
    %24 = vector.load %arg7[%c0_16, %c0_17] : memref<64x1xf32, #tpu.memory_space<vmem>>, vector<64x1xf32>
    %cst_18 = arith.constant dense<0.000000e+00> : vector<64x1xf32>
    %25 = tpu.matmul %23, %24, %cst_18 {dimension_numbers = #tpu.dot_dimension_numbers<[1], [0], [0], [1], [0, 0, 1, 1], [], []>, precision = #tpu.contract_precision<fp32>} : vector<64x64xf32>, vector<64x1xf32>, vector<64x1xf32> -> vector<64x1xf32>
    %26 = vector.shape_cast %25 : vector<64x1xf32> to vector<8x8x1xf32>
    %cst_19 = arith.constant dense<0xFF800000> : vector<8x1xf32>
    %27 = vector.multi_reduction <maximumf>, %26, %cst_19 [0] : vector<8x8x1xf32> to vector<8x1xf32>
    %28 = vector.shape_cast %27 : vector<8x1xf32> to vector<1x8x1xf32>
    %29 = vector.broadcast %28 : vector<1x8x1xf32> to vector<8x8x1xf32>
    %30 = arith.subf %26, %29 : vector<8x8x1xf32>
    %31 = math.exp %30 : vector<8x8x1xf32>
    %cst_20 = arith.constant dense<0.000000e+00> : vector<8x1xf32>
    %32 = vector.multi_reduction <add>, %31, %cst_20 [0] : vector<8x8x1xf32> to vector<8x1xf32>
    %33 = vector.shape_cast %32 : vector<8x1xf32> to vector<1x8x1xf32>
    %34 = vector.broadcast %33 : vector<1x8x1xf32> to vector<8x8x1xf32>
    %35 = arith.divf %31, %34 : vector<8x8x1xf32>
    %36 = vector.broadcast %35 : vector<8x8x1xf32> to vector<8x8x64xf32>
    %37 = arith.mulf %36, %1 : vector<8x8x64xf32>
    %cst_21 = arith.constant dense<0.000000e+00> : vector<8x64xf32>
    %38 = vector.multi_reduction <add>, %37, %cst_21 [0] : vector<8x8x64xf32> to vector<8x64xf32>
    %39 = tpu.concatenate %9, %38 in 1 : vector<8x32xf32>, vector<8x64xf32> -> vector<8x96xf32>
    %c0_22 = arith.constant 0 : index
    %c0_23 = arith.constant 0 : index
    %40 = vector.load %arg8[%c0_22, %c0_23] : memref<96x192xf32, #tpu.memory_space<vmem>>, vector<96x192xf32>
    %cst_24 = arith.constant dense<0.000000e+00> : vector<8x192xf32>
    %41 = tpu.matmul %39, %40, %cst_24 {dimension_numbers = #tpu.dot_dimension_numbers<[1], [0], [0], [1], [0, 0, 1, 1], [], []>, precision = #tpu.contract_precision<fp32>} : vector<8x96xf32>, vector<96x192xf32>, vector<8x192xf32> -> vector<8x192xf32>
    %c0_25 = arith.constant 0 : index
    %c0_26 = arith.constant 0 : index
    %42 = vector.load %arg9[%c0_25, %c0_26] : memref<1x192xf32, #tpu.memory_space<vmem>>, vector<1x192xf32>
    %43 = vector.broadcast %42 : vector<1x192xf32> to vector<8x192xf32>
    %44 = arith.addf %41, %43 : vector<8x192xf32>
    %c0_27 = arith.constant 0 : index
    %c0_28 = arith.constant 0 : index
    %45 = vector.load %arg10[%c0_27, %c0_28] : memref<64x192xf32, #tpu.memory_space<vmem>>, vector<64x192xf32>
    %cst_29 = arith.constant dense<0.000000e+00> : vector<8x192xf32>
    %46 = tpu.matmul %0, %45, %cst_29 {dimension_numbers = #tpu.dot_dimension_numbers<[1], [0], [0], [1], [0, 0, 1, 1], [], []>, precision = #tpu.contract_precision<fp32>} : vector<8x64xf32>, vector<64x192xf32>, vector<8x192xf32> -> vector<8x192xf32>
    %c0_30 = arith.constant 0 : index
    %c0_31 = arith.constant 0 : index
    %47 = vector.load %arg11[%c0_30, %c0_31] : memref<1x192xf32, #tpu.memory_space<vmem>>, vector<1x192xf32>
    %48 = vector.broadcast %47 : vector<1x192xf32> to vector<8x192xf32>
    %49 = arith.addf %46, %48 : vector<8x192xf32>
    %50 = vector.extract_strided_slice %44 {offsets = [0, 0], sizes = [8, 64], strides = [1, 1]} : vector<8x192xf32> to vector<8x64xf32>
    %51 = vector.extract_strided_slice %49 {offsets = [0, 0], sizes = [8, 64], strides = [1, 1]} : vector<8x192xf32> to vector<8x64xf32>
    %52 = arith.addf %50, %51 : vector<8x64xf32>
    %53 = arith.negf %52 : vector<8x64xf32>
    %54 = math.exp %53 : vector<8x64xf32>
    %cst_32 = arith.constant 1.000000e+00 : f32
    %55 = vector.broadcast %cst_32 : f32 to vector<8x64xf32>
    %56 = arith.addf %55, %54 : vector<8x64xf32>
    %57 = arith.divf %55, %56 : vector<8x64xf32>
    %58 = vector.extract_strided_slice %44 {offsets = [0, 64], sizes = [8, 64], strides = [1, 1]} : vector<8x192xf32> to vector<8x64xf32>
    %59 = vector.extract_strided_slice %49 {offsets = [0, 64], sizes = [8, 64], strides = [1, 1]} : vector<8x192xf32> to vector<8x64xf32>
    %60 = arith.addf %58, %59 : vector<8x64xf32>
    %61 = arith.negf %60 : vector<8x64xf32>
    %62 = math.exp %61 : vector<8x64xf32>
    %cst_33 = arith.constant 1.000000e+00 : f32
    %63 = vector.broadcast %cst_33 : f32 to vector<8x64xf32>
    %64 = arith.addf %63, %62 : vector<8x64xf32>
    %65 = arith.divf %63, %64 : vector<8x64xf32>
    %66 = vector.extract_strided_slice %44 {offsets = [0, 128], sizes = [8, 64], strides = [1, 1]} : vector<8x192xf32> to vector<8x64xf32>
    %67 = vector.extract_strided_slice %49 {offsets = [0, 128], sizes = [8, 64], strides = [1, 1]} : vector<8x192xf32> to vector<8x64xf32>
    %68 = arith.mulf %57, %67 : vector<8x64xf32>
    %69 = arith.addf %66, %68 : vector<8x64xf32>
    %70 = math.tanh %69 : vector<8x64xf32>
    %cst_34 = arith.constant 1.000000e+00 : f32
    %71 = vector.broadcast %cst_34 : f32 to vector<8x64xf32>
    %72 = arith.subf %71, %65 : vector<8x64xf32>
    %73 = arith.mulf %72, %70 : vector<8x64xf32>
    %74 = arith.mulf %65, %0 : vector<8x64xf32>
    %75 = arith.addf %73, %74 : vector<8x64xf32>
    %76 = tpu.concatenate %75, %38, %9 in 1 : vector<8x64xf32>, vector<8x64xf32>, vector<8x32xf32> -> vector<8x160xf32>
    %c0_35 = arith.constant 0 : index
    %c0_36 = arith.constant 0 : index
    %77 = vector.load %arg12[%c0_35, %c0_36] : memref<160x128xf32, #tpu.memory_space<vmem>>, vector<160x128xf32>
    %cst_37 = arith.constant dense<0.000000e+00> : vector<8x128xf32>
    %78 = tpu.matmul %76, %77, %cst_37 {dimension_numbers = #tpu.dot_dimension_numbers<[1], [0], [0], [1], [0, 0, 1, 1], [], []>, precision = #tpu.contract_precision<fp32>} : vector<8x160xf32>, vector<160x128xf32>, vector<8x128xf32> -> vector<8x128xf32>
    %c0_38 = arith.constant 0 : index
    %c0_39 = arith.constant 0 : index
    %79 = vector.load %arg13[%c0_38, %c0_39] : memref<1x128xf32, #tpu.memory_space<vmem>>, vector<1x128xf32>
    %80 = vector.broadcast %79 : vector<1x128xf32> to vector<8x128xf32>
    %81 = arith.addf %78, %80 : vector<8x128xf32>
    %c0_40 = arith.constant 0 : index
    %c0_41 = arith.constant 0 : index
    %82 = vector.load %arg14[%c0_40, %c0_41] : memref<8x128xf32, #tpu.memory_space<vmem>>, vector<8x128xf32>
    tpu.vector_store %arg14[%c0_40, %c0_41], %81 {strides = array<i32>} : memref<8x128xf32, #tpu.memory_space<vmem>>, vector<8x128xf32>,
    %c0_42 = arith.constant 0 : index
    %c0_43 = arith.constant 0 : index
    %83 = vector.load %arg15[%c0_42, %c0_43] : memref<8x64xf32, #tpu.memory_space<vmem>>, vector<8x64xf32>
    tpu.vector_store %arg15[%c0_42, %c0_43], %75 {strides = array<i32>} : memref<8x64xf32, #tpu.memory_space<vmem>>, vector<8x64xf32>,
    return
  }
}

</mosaic_0001>

<llo_original>
// kernel: decoder_forward.1
$region0: #{decoder_forward.1}
  #allocation0 [shape = 'u32[]', space=smem, size = 0x4, offset = 0x4, fixed_abs, tag = 'smem constant byte address 0x4 - core index']
  #allocation1 [shape = 'u32[144,128]{1,0:T(1,128)}', space=vmem, size = 0x12000, scoped, tag = 'internal scratch']
  %s0 = inlined_call_operand.vmem [shape: s32[8,1], index: 0, kind: input, shape index: {}]
  %s1 = inlined_call_operand.vmem [shape: f32[8,64], index: 1, kind: input, shape index: {}]
  %s2 = inlined_call_operand.vmem [shape: f32[8,8,64], index: 2, kind: input, shape index: {}]
  %s3 = inlined_call_operand.vmem [shape: f32[24,32], index: 3, kind: input, shape index: {}]
  %s4 = inlined_call_operand.hbm [shape: f32[64,64], index: 4, kind: input, shape index: {}]
  %s5 = inlined_call_operand.hbm [shape: f32[64,64], index: 5, kind: input, shape index: {}]
  %s6 = inlined_call_operand.vmem [shape: f32[1,64], index: 6, kind: input, shape index: {}]
  %s7 = inlined_call_operand.vmem [shape: f32[64,1], index: 7, kind: input, shape index: {}]
  %s8 = inlined_call_operand.hbm [shape: f32[96,192], index: 8, kind: input, shape index: {}]
  %s9 = inlined_call_operand.vmem [shape: f32[1,192], index: 9, kind: input, shape index: {}]
  %s10 = inlined_call_operand.hbm [shape: f32[64,192], index: 10, kind: input, shape index: {}]
  %s11 = inlined_call_operand.vmem [shape: f32[1,192], index: 11, kind: input, shape index: {}]
  %s12 = inlined_call_operand.hbm [shape: f32[160,128], index: 12, kind: input, shape index: {}]
  %s13 = inlined_call_operand.vmem [shape: f32[1,128], index: 13, kind: input, shape index: {}]
  %s14 = inlined_call_operand.hbm [shape: f32[8,128], index: 14, kind: output, shape index: {0}]
  %s15 = inlined_call_operand.hbm [shape: f32[8,64], index: 15, kind: output, shape index: {1}]
  %16 = xla_tuple %s14, %s15
  %s17 = sld [smem:[#allocation0]]
  $region94: #{decoder_forward.1} parent=0
    _
  %s19 = ssub.s32 1, %s17
  %s20 = scalar_select 0, %s19, %s17
  $region1: #{decoder_forward.1} parent=0
    #allocation2 [shape = 'u8[32768]{0}', space=vmem, size = 0x8000, scoped, tag = 'input window, operand 4, single buffered']
    #allocation3 [shape = 's32[1]{0}', space=sflag, size = 0x4, scoped, tag = 'scoped memory for decoder_forward.1']
    #allocation4 [shape = 's32[1]{0}', space=sflag, size = 0x4, scoped, tag = 'scoped memory for decoder_forward.1']
    #allocation5 [shape = 'u8[32768]{0}', space=vmem, size = 0x8000, scoped, tag = 'input window, operand 5, single buffered']
    #allocation6 [shape = 's32[1]{0}', space=sflag, size = 0x4, scoped, tag = 'scoped memory for decoder_forward.1']
    #allocation7 [shape = 'u8[98304]{0}', space=vmem, size = 0x18000, scoped, tag = 'input window, operand 8, single buffered']
    #allocation8 [shape = 'u8[65536]{0}', space=vmem, size = 0x10000, scoped, tag = 'input window, operand 10, single buffered']
    #allocation9 [shape = 's32[1]{0}', space=sflag, size = 0x4, scoped, tag = 'scoped memory for decoder_forward.1']
    #allocation10 [shape = 'u8[81920]{0}', space=vmem, size = 0x14000, scoped, tag = 'input window, operand 12, single buffered']
    #allocation11 [shape = 'u8[4096]{0}', space=vmem, size = 0x1000, scoped, tag = 'output window, operand 0, single buffered']
    #allocation12 [shape = 'u8[4096]{0}', space=vmem, size = 0x1000, scoped, tag = 'output window, operand 1, single buffered']
    #allocation13 [shape = 's32[1]{0}', space=sflag, size = 0x4, scoped, tag = 'scoped memory for decoder_forward.1']
    %21 = vsyncpa [#allocation3], 0
    %22 = vsyncpa [#allocation6], 0
    %23 = vsyncpa [#allocation9], 0
    %24 = vsyncpa [#allocation4], 0
    %25 = vsyncpa [#allocation13], 0
    // Predicated region
    $region2: #{decoder_forward.1} parent=1 // pred_check
      _
    $region3: #{decoder_forward.1} parent=1 // pred_check_branch
      %27 = sbr.rel (0) target = $region5
    $region4: #{decoder_forward.1} parent=1 // pred_region
      _
    $region5: #{decoder_forward.1} parent=1 // pred_fallthru
      _
    // Predicated region
    $region6: #{decoder_forward.1} parent=1 // pred_check
      _
    $region7: #{decoder_forward.1} parent=1 // pred_check_branch
      %29 = sbr.rel (0) target = $region9
    $region8: #{decoder_forward.1} parent=1 // pred_region
      _
    $region9: #{decoder_forward.1} parent=1 // pred_fallthru
      _
    // Predicated region
    $region10: #{decoder_forward.1} parent=1 // pred_check
      _
    $region11: #{decoder_forward.1} parent=1 // pred_check_branch
      %31 = sbr.rel (0) target = $region13
    $region12: #{decoder_forward.1} parent=1 // pred_region
      _
    $region13: #{decoder_forward.1} parent=1 // pred_fallthru
      _
    // Predicated region
    $region14: #{decoder_forward.1} parent=1 // pred_check
      _
    $region15: #{decoder_forward.1} parent=1 // pred_check_branch
      %33 = sbr.rel (0) target = $region17
    $region16: #{decoder_forward.1} parent=1 // pred_region
      _
    $region17: #{decoder_forward.1} parent=1 // pred_fallthru
      _
    // Predicated region
    $region18: #{decoder_forward.1} parent=1 // pred_check
      _
    $region19: #{decoder_forward.1} parent=1 // pred_check_branch
      %35 = sbr.rel (0) target = $region21
    $region20: #{decoder_forward.1} parent=1 // pred_region
      %s37 = ssub.s32 1024, 1024
      %38 = vsyncadd [#allocation3], %s37
      %s39 = sshll.u32 [#allocation2], 4
      %s40 = int_to_ptr.vmem [resolvable:$true] %s39
      %45 = dma.hbm_to_vmem [thread:$0]  %s4, 1024, %s40, [#allocation3], 128, 128, 8
    $region21: #{decoder_forward.1} parent=1 // pred_fallthru
      _
    // Predicated region
    $region22: #{decoder_forward.1} parent=1 // pred_check
      _
    $region23: #{decoder_forward.1} parent=1 // pred_check_branch
      %47 = sbr.rel (0) target = $region25
    $region24: #{decoder_forward.1} parent=1 // pred_region
      %s49 = ssub.s32 1024, 1024
      %50 = vsyncadd [#allocation6], %s49
      %s51 = sshll.u32 [#allocation5], 4
      %s52 = int_to_ptr.vmem [resolvable:$true] %s51
      %57 = dma.hbm_to_vmem [thread:$0]  %s5, 1024, %s52, [#allocation6], 128, 128, 8
    $region25: #{decoder_forward.1} parent=1 // pred_fallthru
      _
    // Predicated region
    $region26: #{decoder_forward.1} parent=1 // pred_check
      _
    $region27: #{decoder_forward.1} parent=1 // pred_check_branch
      %59 = sbr.rel (0) target = $region29
    $region28: #{decoder_forward.1} parent=1 // pred_region
      _
    $region29: #{decoder_forward.1} parent=1 // pred_fallthru
      _
    // Predicated region
    $region30: #{decoder_forward.1} parent=1 // pred_check
      _
    $region31: #{decoder_forward.1} parent=1 // pred_check_branch
      %61 = sbr.rel (0) target = $region33
    $region32: #{decoder_forward.1} parent=1 // pred_region
      _
    $region33: #{decoder_forward.1} parent=1 // pred_fallthru
      _
    // Predicated region
    $region34: #{decoder_forward.1} parent=1 // pred_check
      _
    $region35: #{decoder_forward.1} parent=1 // pred_check_branch
      %63 = sbr.rel (0) target = $region37
    $region36: #{decoder_forward.1} parent=1 // pred_region
      %s65 = ssub.s32 3072, 3072
      %66 = vsyncadd [#allocation6], %s65
      %s67 = sshll.u32 [#allocation7], 4
      %s68 = int_to_ptr.vmem [resolvable:$true] %s67
      %73 = dma.hbm_to_vmem [thread:$0]  %s8, 3072, %s68, [#allocation6], 256, 256, 16
    $region37: #{decoder_forward.1} parent=1 // pred_fallthru
      _
    // Predicated region
    $region38: #{decoder_forward.1} parent=1 // pred_check
      _
    $region39: #{decoder_forward.1} parent=1 // pred_check_branch
      %75 = sbr.rel (0) target = $region41
    $region40: #{decoder_forward.1} parent=1 // pred_region
      _
    $region41: #{decoder_forward.1} parent=1 // pred_fallthru
      _
    // Predicated region
    $region42: #{decoder_forward.1} parent=1 // pred_check
      _
    $region43: #{decoder_forward.1} parent=1 // pred_check_branch
      %77 = sbr.rel (0) target = $region45
    $region44: #{decoder_forward.1} parent=1 // pred_region
      %s79 = ssub.s32 2048, 2048
      %80 = vsyncadd [#allocation9], %s79
      %s81 = sshll.u32 [#allocation8], 4
      %s82 = int_to_ptr.vmem [resolvable:$true] %s81
      %87 = dma.hbm_to_vmem [thread:$0]  %s10, 2048, %s82, [#allocation9], 256, 256, 16
    $region45: #{decoder_forward.1} parent=1 // pred_fallthru
      _
    // Predicated region
    $region46: #{decoder_forward.1} parent=1 // pred_check
      _
    $region47: #{decoder_forward.1} parent=1 // pred_check_branch
      %89 = sbr.rel (0) target = $region49
    $region48: #{decoder_forward.1} parent=1 // pred_region
      _
    $region49: #{decoder_forward.1} parent=1 // pred_fallthru
      _
    // Predicated region
    $region50: #{decoder_forward.1} parent=1 // pred_check
      _
    $region51: #{decoder_forward.1} parent=1 // pred_check_branch
      %91 = sbr.rel (0) target = $region53
    $region52: #{decoder_forward.1} parent=1 // pred_region
      %s93 = ssub.s32 2560, 2560
      %94 = vsyncadd [#allocation9], %s93
      %s95 = sshll.u32 [#allocation10], 4
      %s96 = int_to_ptr.vmem [resolvable:$true] %s95
      %101 = dma.hbm_to_vmem [thread:$0]  %s12, 2560, %s96, [#allocation9], 128, 128, 8
    $region53: #{decoder_forward.1} parent=1 // pred_fallthru
      _
    // Predicated region
    $region54: #{decoder_forward.1} parent=1 // pred_check
      _
    $region55: #{decoder_forward.1} parent=1 // pred_check_branch
      %103 = sbr.rel (0) target = $region57
    $region56: #{decoder_forward.1} parent=1 // pred_region
      _
    $region57: #{decoder_forward.1} parent=1 // pred_fallthru
      _
    // Predicated region
    $region58: #{decoder_forward.1} parent=1 // pred_check
      _
    $region59: #{decoder_forward.1} parent=1 // pred_check_branch
      %105 = sbr.rel (0) target = $region61
    $region60: #{decoder_forward.1} parent=1 // pred_region
      %106 = dma.done [#allocation3], 1024
    $region61: #{decoder_forward.1} parent=1 // pred_fallthru
      _
    // Predicated region
    $region62: #{decoder_forward.1} parent=1 // pred_check
      _
    $region63: #{decoder_forward.1} parent=1 // pred_check_branch
      %108 = sbr.rel (0) target = $region65
    $region64: #{decoder_forward.1} parent=1 // pred_region
      %109 = dma.done [#allocation6], 1024
    $region65: #{decoder_forward.1} parent=1 // pred_fallthru
      _
    // Predicated region
    $region66: #{decoder_forward.1} parent=1 // pred_check
      _
    $region67: #{decoder_forward.1} parent=1 // pred_check_branch
      %111 = sbr.rel (0) target = $region69
    $region68: #{decoder_forward.1} parent=1 // pred_region
      %112 = dma.done [#allocation6], 3072
    $region69: #{decoder_forward.1} parent=1 // pred_fallthru
      _
    // Predicated region
    $region70: #{decoder_forward.1} parent=1 // pred_check
      _
    $region71: #{decoder_forward.1} parent=1 // pred_check_branch
      %114 = sbr.rel (0) target = $region73
    $region72: #{decoder_forward.1} parent=1 // pred_region
      %115 = dma.done [#allocation9], 2048
    $region73: #{decoder_forward.1} parent=1 // pred_fallthru
      _
    // Predicated region
    $region74: #{decoder_forward.1} parent=1 // pred_check
      _
    $region75: #{decoder_forward.1} parent=1 // pred_check_branch
      %117 = sbr.rel (0) target = $region77
    $region76: #{decoder_forward.1} parent=1 // pred_region
      %118 = dma.done [#allocation9], 2560
    $region77: #{decoder_forward.1} parent=1 // pred_fallthru
      _
    %v119 = vld [vmem:[%s1] sm:$0xff]
    %v120 = vld [vmem:[%s2] sm:$0xff]
    %v121 = vld [vmem:[%s2 + $0x8] sm:$0xff]
    %v122 = vld [vmem:[%s2 + $0x10] sm:$0xff]
    %v123 = vld [vmem:[%s2 + $0x18] sm:$0xff]
    %v124 = vld [vmem:[%s2 + $0x20] sm:$0xff]
    %v125 = vld [vmem:[%s2 + $0x28] sm:$0xff]
    %v126 = vld [vmem:[%s2 + $0x30] sm:$0xff]
    %v127 = vld [vmem:[%s2 + $0x38] sm:$0xff]
    %v128 = vld [vmem:[%s0] sm:$0xff]
    %v129 = vlaneseq
    %v130 = vand.u32 %v129, 127
    %131 = vset.pattern.permute.xlu0 0
    %132 = vperm.xlu0 %131, %v128
    %v133 = vpop.permute.xlu0 %132
    %vm134 = vcmp.eq.s32.totalorder %v133, %v130
    %v135 = vsel %vm134, 1, 0
    %v136 = vcvt.s32.f32 %v135
    %v137 = vld [vmem:[%s3] sm:$0xff]
    %v138 = vld [vmem:[%s3 + $0x8] sm:$0xff]
    %v139 = vld [vmem:[%s3 + $0x10] sm:$0xff]
    %vm140 = vcmask 195584
    %v142 = vsel %vm140, %v136, 0
    %144 = vmatprep.subr.mxu0 0.0
    %v145 = vand.u32 %v137, 4294901760
    %146 = vmatpush1.msra.mxu0 %v145
    %147 = vmatprep.subr.mxu0 0.0
    %v148 = vand.u32 %v138, 4294901760
    %149 = vmatpush1.msra.mxu0 %v148
    %150 = vmatprep.subr.mxu0 0.0
    %v151 = vand.u32 %v139, 4294901760
    %152 = vmatpush1.msra.mxu0 %v151
    %153 = vmatprep.subr.mxu0 0.0
    %154 = vmatpush1.msra.mxu0 0.0
    %155 = vmatprep.subr.mxu0 0.0
    %156 = vmatpush1.msra.mxu0 0.0
    %157 = vmatprep.subr.mxu0 0.0
    %158 = vmatpush1.msra.mxu0 0.0
    %159 = vmatprep.subr.mxu0 0.0
    %160 = vmatpush1.msra.mxu0 0.0
    %161 = vmatprep.subr.mxu0 0.0
    %162 = vmatpush1.msra.mxu0 0.0
    %163 = vmatprep.subr.mxu0 0.0
    %164 = vmatpush1.msra.mxu0 0.0
    %165 = vmatprep.subr.mxu0 0.0
    %166 = vmatpush1.msra.mxu0 0.0
    %167 = vmatprep.subr.mxu0 0.0
    %168 = vmatpush1.msra.mxu0 0.0
    %169 = vmatprep.subr.mxu0 0.0
    %170 = vmatpush1.msra.mxu0 0.0
    %171 = vmatprep.subr.mxu0 0.0
    %172 = vmatpush1.msra.mxu0 0.0
    %173 = vmatprep.subr.mxu0 0.0
    %174 = vmatpush1.msra.mxu0 0.0
    %175 = vmatprep.subr.mxu0 0.0
    %176 = vmatpush1.msra.mxu0 0.0
    %177 = vmatprep.subr.mxu0 0.0
    %178 = vmatpush1.msra.mxu0 0.0
    %179 = vmatprep.subr.mxu0 0.0
    %180 = vmatpush1.msra.mxu0 0.0
    %181 = vmatprep.subr.mxu0 0.0
    %182 = vmatpush1.msra.mxu0 0.0
    %183 = vmatprep.subr.mxu0 0.0
    %184 = vmatpush1.msra.mxu0 0.0
    %185 = vmatprep.subr.mxu0 0.0
    %186 = vmatpush1.msra.mxu0 0.0
    %187 = vmatprep.subr.mxu0 0.0
    %188 = vmatpush1.msra.mxu0 0.0
    %189 = vmatprep.subr.mxu0 0.0
    %190 = vmatpush1.msra.mxu0 0.0
    %191 = vmatprep.subr.mxu0 0.0
    %192 = vmatpush1.msra.mxu0 0.0
    %193 = vmatprep.subr.mxu0 0.0
    %194 = vmatpush1.msra.mxu0 0.0
    %195 = vmatprep.subr.mxu0 0.0
    %196 = vmatpush1.msra.mxu0 0.0
    %197 = vmatprep.subr.mxu0 0.0
    %198 = vmatpush1.msra.mxu0 0.0
    %199 = vmatprep.subr.mxu0 0.0
    %200 = vmatpush1.msra.mxu0 0.0
    %201 = vmatprep.subr.mxu0 0.0
    %202 = vmatpush1.msra.mxu0 0.0
    %203 = vmatprep.subr.mxu0 0.0
    %204 = vmatpush1.msra.mxu0 0.0
    %205 = vmatprep.subr.mxu0 0.0
    %206 = vmatpush1.msra.mxu0 0.0
    %207 = vmatprep.subr.mxu0 0.0
    %208 = vmatpush1.msra.mxu0 0.0
    %209 = vmatprep.subr.mxu0 0.0
    %210 = vmatpush1.msra.mxu0 0.0
    %211 = vmatprep.mubr.f32.mxu0 0.0
    %v212 = vand.u32 %v142, 4294901760
    %v213 = vsub.f32 %v142, %v212
    %v214 = vand.u32 %v213, 4294901760
    %v215 = vsub.f32 %v213, %v214
    %v216 = vand.u32 %v215, 4294901760
    %217 = vmatmul.mubr.f32.gmra.mrb[0].mxu0 %v216
    %v218 = vpop.f32.mrb[0].mxu0
    %v219 = vadd.f32 0.0, %v218
    %v220 = vpop.f32.mrb[0].mxu0
    %221 = vdwg.mxu0
    %222 = vmatprep.subr.mxu0 0.0
    %v223 = vand.u32 %v137, 4294901760
    %v224 = vsub.f32 %v137, %v223
    %v225 = vand.u32 %v224, 4294901760
    %v226 = vsub.f32 %v224, %v225
    %v227 = vand.u32 %v226, 4294901760
    %228 = vmatpush1.msra.mxu0 %v227
    %229 = vmatprep.subr.mxu0 0.0
    %v230 = vand.u32 %v138, 4294901760
    %v231 = vsub.f32 %v138, %v230
    %v232 = vand.u32 %v231, 4294901760
    %v233 = vsub.f32 %v231, %v232
    %v234 = vand.u32 %v233, 4294901760
    %235 = vmatpush1.msra.mxu0 %v234
    %236 = vmatprep.subr.mxu0 0.0
    %v237 = vand.u32 %v139, 4294901760
    %v238 = vsub.f32 %v139, %v237
    %v239 = vand.u32 %v238, 4294901760
    %v240 = vsub.f32 %v238, %v239
    %v241 = vand.u32 %v240, 4294901760
    %242 = vmatpush1.msra.mxu0 %v241
    %243 = vmatprep.subr.mxu0 0.0
    %244 = vmatpush1.msra.mxu0 0.0
    %245 = vmatprep.subr.mxu0 0.0
    %246 = vmatpush1.msra.mxu0 0.0
    %247 = vmatprep.subr.mxu0 0.0
    %248 = vmatpush1.msra.mxu0 0.0
    %249 = vmatprep.subr.mxu0 0.0
    %250 = vmatpush1.msra.mxu0 0.0
    %251 = vmatprep.subr.mxu0 0.0
    %252 = vmatpush1.msra.mxu0 0.0
    %253 = vmatprep.subr.mxu0 0.0
    %254 = vmatpush1.msra.mxu0 0.0
    %255 = vmatprep.subr.mxu0 0.0
    %256 = vmatpush1.msra.mxu0 0.0
    %257 = vmatprep.subr.mxu0 0.0
    %258 = vmatpush1.msra.mxu0 0.0
    %259 = vmatprep.subr.mxu0 0.0
    %260 = vmatpush1.msra.mxu0 0.0
    %261 = vmatprep.subr.mxu0 0.0
    %262 = vmatpush1.msra.mxu0 0.0
    %263 = vmatprep.subr.mxu0 0.0
    %264 = vmatpush1.msra.mxu0 0.0
    %265 = vmatprep.subr.mxu0 0.0
    %266 = vmatpush1.msra.mxu0 0.0
    %267 = vmatprep.subr.mxu0 0.0
    %268 = vmatpush1.msra.mxu0 0.0
    %269 = vmatprep.subr.mxu0 0.0
    %270 = vmatpush1.msra.mxu0 0.0
    %271 = vmatprep.subr.mxu0 0.0
    %272 = vmatpush1.msra.mxu0 0.0
    %273 = vmatprep.subr.mxu0 0.0
    %274 = vmatpush1.msra.mxu0 0.0
    %275 = vmatprep.subr.mxu0 0.0
    %276 = vmatpush1.msra.mxu0 0.0
    %277 = vmatprep.subr.mxu0 0.0
    %278 = vmatpush1.msra.mxu0 0.0
    %279 = vmatprep.subr.mxu0 0.0
    %280 = vmatpush1.msra.mxu0 0.0
    %281 = vmatprep.subr.mxu0 0.0
    %282 = vmatpush1.msra.mxu0 0.0
    %283 = vmatprep.subr.mxu0 0.0
    %284 = vmatpush1.msra.mxu0 0.0
    %285 = vmatprep.subr.mxu0 0.0
    %286 = vmatpush1.msra.mxu0 0.0
    %287 = vmatprep.subr.mxu0 0.0
    %288 = vmatpush1.msra.mxu0 0.0
    %289 = vmatprep.subr.mxu0 0.0
    %290 = vmatpush1.msra.mxu0 0.0
    %291 = vmatprep.subr.mxu0 0.0
    %292 = vmatpush1.msra.mxu0 0.0
    %293 = vmatprep.subr.mxu0 0.0
    %294 = vmatpush1.msra.mxu0 0.0
    %295 = vmatprep.subr.mxu0 0.0
    %296 = vmatpush1.msra.mxu0 0.0
    %297 = vmatprep.subr.mxu0 0.0
    %298 = vmatpush1.msra.mxu0 0.0
    %299 = vmatprep.subr.mxu0 0.0
    %300 = vmatpush1.msra.mxu0 0.0
    %301 = vmatprep.mubr.f32.mxu0 0.0
    %v302 = vand.u32 %v142, 4294901760
    %303 = vmatmul.mubr.f32.gmra.mrb[0].mxu0 %v302
    %v304 = vpop.f32.mrb[0].mxu0
    %v305 = vadd.f32 %v219, %v304
    %v306 = vpop.f32.mrb[0].mxu0
    %307 = vdwg.mxu0
    %308 = vmatprep.subr.mxu0 0.0
    %v309 = vand.u32 %v137, 4294901760
    %v310 = vsub.f32 %v137, %v309
    %311 = vmatpush1.msra.mxu0 %v310
    %312 = vmatprep.subr.mxu0 0.0
    %v313 = vand.u32 %v138, 4294901760
    %v314 = vsub.f32 %v138, %v313
    %315 = vmatpush1.msra.mxu0 %v314
    %316 = vmatprep.subr.mxu0 0.0
    %v317 = vand.u32 %v139, 4294901760
    %v318 = vsub.f32 %v139, %v317
    %319 = vmatpush1.msra.mxu0 %v318
    %320 = vmatprep.subr.mxu0 0.0
    %321 = vmatpush1.msra.mxu0 0.0
    %322 = vmatprep.subr.mxu0 0.0
    %323 = vmatpush1.msra.mxu0 0.0
    %324 = vmatprep.subr.mxu0 0.0
    %325 = vmatpush1.msra.mxu0 0.0
    %326 = vmatprep.subr.mxu0 0.0
    %327 = vmatpush1.msra.mxu0 0.0
    %328 = vmatprep.subr.mxu0 0.0
    %329 = vmatpush1.msra.mxu0 0.0
    %330 = vmatprep.subr.mxu0 0.0
    %331 = vmatpush1.msra.mxu0 0.0
    %332 = vmatprep.subr.mxu0 0.0
    %333 = vmatpush1.msra.mxu0 0.0
    %334 = vmatprep.subr.mxu0 0.0
    %335 = vmatpush1.msra.mxu0 0.0
    %336 = vmatprep.subr.mxu0 0.0
    %337 = vmatpush1.msra.mxu0 0.0
    %338 = vmatprep.subr.mxu0 0.0
    %339 = vmatpush1.msra.mxu0 0.0
    %340 = vmatprep.subr.mxu0 0.0
    %341 = vmatpush1.msra.mxu0 0.0
    %342 = vmatprep.subr.mxu0 0.0
    %343 = vmatpush1.msra.mxu0 0.0
    %344 = vmatprep.subr.mxu0 0.0
    %345 = vmatpush1.msra.mxu0 0.0
    %346 = vmatprep.subr.mxu0 0.0
    %347 = vmatpush1.msra.mxu0 0.0
    %348 = vmatprep.subr.mxu0 0.0
    %349 = vmatpush1.msra.mxu0 0.0
    %350 = vmatprep.subr.mxu0 0.0
    %351 = vmatpush1.msra.mxu0 0.0
    %352 = vmatprep.subr.mxu0 0.0
    %353 = vmatpush1.msra.mxu0 0.0
    %354 = vmatprep.subr.mxu0 0.0
    %355 = vmatpush1.msra.mxu0 0.0
    %356 = vmatprep.subr.mxu0 0.0
    %357 = vmatpush1.msra.mxu0 0.0
    %358 = vmatprep.subr.mxu0 0.0
    %359 = vmatpush1.msra.mxu0 0.0
    %360 = vmatprep.subr.mxu0 0.0
    %361 = vmatpush1.msra.mxu0 0.0
    %362 = vmatprep.subr.mxu0 0.0
    %363 = vmatpush1.msra.mxu0 0.0
    %364 = vmatprep.subr.mxu0 0.0
    %365 = vmatpush1.msra.mxu0 0.0
    %366 = vmatprep.subr.mxu0 0.0
    %367 = vmatpush1.msra.mxu0 0.0
    %368 = vmatprep.subr.mxu0 0.0
    %369 = vmatpush1.msra.mxu0 0.0
    %370 = vmatprep.subr.mxu0 0.0
    %371 = vmatpush1.msra.mxu0 0.0
    %372 = vmatprep.subr.mxu0 0.0
    %373 = vmatpush1.msra.mxu0 0.0
    %374 = vmatprep.subr.mxu0 0.0
    %375 = vmatpush1.msra.mxu0 0.0
    %376 = vmatprep.subr.mxu0 0.0
    %377 = vmatpush1.msra.mxu0 0.0
    %378 = vmatprep.mubr.f32.mxu0 0.0
    %v379 = vand.u32 %v142, 4294901760
    %v380 = vsub.f32 %v142, %v379
    %381 = vmatmul.mubr.f32.gmra.mrb[0].mxu0 %v380
    %v382 = vpop.f32.mrb[0].mxu0
    %v383 = vadd.f32 %v305, %v382
    %v384 = vpop.f32.mrb[0].mxu0
    %385 = vdwg.mxu0
    %386 = vmatprep.subr.mxu0 0.0
    %v387 = vand.u32 %v137, 4294901760
    %388 = vmatpush1.msra.mxu0 %v387
    %389 = vmatprep.subr.mxu0 0.0
    %v390 = vand.u32 %v138, 4294901760
    %391 = vmatpush1.msra.mxu0 %v390
    %392 = vmatprep.subr.mxu0 0.0
    %v393 = vand.u32 %v139, 4294901760
    %394 = vmatpush1.msra.mxu0 %v393
    %395 = vmatprep.subr.mxu0 0.0
    %396 = vmatpush1.msra.mxu0 0.0
    %397 = vmatprep.subr.mxu0 0.0
    %398 = vmatpush1.msra.mxu0 0.0
    %399 = vmatprep.subr.mxu0 0.0
    %400 = vmatpush1.msra.mxu0 0.0
    %401 = vmatprep.subr.mxu0 0.0
    %402 = vmatpush1.msra.mxu0 0.0
    %403 = vmatprep.subr.mxu0 0.0
    %404 = vmatpush1.msra.mxu0 0.0
    %405 = vmatprep.subr.mxu0 0.0
    %406 = vmatpush1.msra.mxu0 0.0
    %407 = vmatprep.subr.mxu0 0.0
    %408 = vmatpush1.msra.mxu0 0.0
    %409 = vmatprep.subr.mxu0 0.0
    %410 = vmatpush1.msra.mxu0 0.0
    %411 = vmatprep.subr.mxu0 0.0
    %412 = vmatpush1.msra.mxu0 0.0
    %413 = vmatprep.subr.mxu0 0.0
    %414 = vmatpush1.msra.mxu0 0.0
    %415 = vmatprep.subr.mxu0 0.0
    %416 = vmatpush1.msra.mxu0 0.0
    %417 = vmatprep.subr.mxu0 0.0
    %418 = vmatpush1.msra.mxu0 0.0
    %419 = vmatprep.subr.mxu0 0.0
    %420 = vmatpush1.msra.mxu0 0.0
    %421 = vmatprep.subr.mxu0 0.0
    %422 = vmatpush1.msra.mxu0 0.0
    %423 = vmatprep.subr.mxu0 0.0
    %424 = vmatpush1.msra.mxu0 0.0
    %425 = vmatprep.subr.mxu0 0.0
    %426 = vmatpush1.msra.mxu0 0.0
    %427 = vmatprep.subr.mxu0 0.0
    %428 = vmatpush1.msra.mxu0 0.0
    %429 = vmatprep.subr.mxu0 0.0
    %430 = vmatpush1.msra.mxu0 0.0
    %431 = vmatprep.subr.mxu0 0.0
    %432 = vmatpush1.msra.mxu0 0.0
    %433 = vmatprep.subr.mxu0 0.0
    %434 = vmatpush1.msra.mxu0 0.0
    %435 = vmatprep.subr.mxu0 0.0
    %436 = vmatpush1.msra.mxu0 0.0
    %437 = vmatprep.subr.mxu0 0.0
    %438 = vmatpush1.msra.mxu0 0.0
    %439 = vmatprep.subr.mxu0 0.0
    %440 = vmatpush1.msra.mxu0 0.0
    %441 = vmatprep.subr.mxu0 0.0
    %442 = vmatpush1.msra.mxu0 0.0
    %443 = vmatprep.subr.mxu0 0.0
    %444 = vmatpush1.msra.mxu0 0.0
    %445 = vmatprep.subr.mxu0 0.0
    %446 = vmatpush1.msra.mxu0 0.0
    %447 = vmatprep.subr.mxu0 0.0
    %448 = vmatpush1.msra.mxu0 0.0
    %449 = vmatprep.subr.mxu0 0.0
    %450 = vmatpush1.msra.mxu0 0.0
    %451 = vmatprep.subr.mxu0 0.0
    %452 = vmatpush1.msra.mxu0 0.0
    %453 = vmatprep.mubr.f32.mxu0 0.0
    %v454 = vand.u32 %v142, 4294901760
    %v455 = vsub.f32 %v142, %v454
    %v456 = vand.u32 %v455, 4294901760
    %457 = vmatmul.mubr.f32.gmra.mrb[0].mxu0 %v456
    %v458 = vpop.f32.mrb[0].mxu0
    %v459 = vadd.f32 %v383, %v458
    %v460 = vpop.f32.mrb[0].mxu0
    %461 = vdwg.mxu0
    %462 = vmatprep.subr.mxu0 0.0
    %v463 = vand.u32 %v137, 4294901760
    %v464 = vsub.f32 %v137, %v463
    %v465 = vand.u32 %v464, 4294901760
    %466 = vmatpush1.msra.mxu0 %v465
    %467 = vmatprep.subr.mxu0 0.0
    %v468 = vand.u32 %v138, 4294901760
    %v469 = vsub.f32 %v138, %v468
    %v470 = vand.u32 %v469, 4294901760
    %471 = vmatpush1.msra.mxu0 %v470
    %472 = vmatprep.subr.mxu0 0.0
    %v473 = vand.u32 %v139, 4294901760
    %v474 = vsub.f32 %v139, %v473
    %v475 = vand.u32 %v474, 4294901760
    %476 = vmatpush1.msra.mxu0 %v475
    %477 = vmatprep.subr.mxu0 0.0
    %478 = vmatpush1.msra.mxu0 0.0
    %479 = vmatprep.subr.mxu0 0.0
    %480 = vmatpush1.msra.mxu0 0.0
    %481 = vmatprep.subr.mxu0 0.0
    %482 = vmatpush1.msra.mxu0 0.0
    %483 = vmatprep.subr.mxu0 0.0
    %484 = vmatpush1.msra.mxu0 0.0
    %485 = vmatprep.subr.mxu0 0.0
    %486 = vmatpush1.msra.mxu0 0.0
    %487 = vmatprep.subr.mxu0 0.0
    %488 = vmatpush1.msra.mxu0 0.0
    %489 = vmatprep.subr.mxu0 0.0
    %490 = vmatpush1.msra.mxu0 0.0
    %491 = vmatprep.subr.mxu0 0.0
    %492 = vmatpush1.msra.mxu0 0.0
    %493 = vmatprep.subr.mxu0 0.0
    %494 = vmatpush1.msra.mxu0 0.0
    %495 = vmatprep.subr.mxu0 0.0
    %496 = vmatpush1.msra.mxu0 0.0
    %497 = vmatprep.subr.mxu0 0.0
    %498 = vmatpush1.msra.mxu0 0.0
    %499 = vmatprep.subr.mxu0 0.0
    %500 = vmatpush1.msra.mxu0 0.0
    %501 = vmatprep.subr.mxu0 0.0
    %502 = vmatpush1.msra.mxu0 0.0
    %503 = vmatprep.subr.mxu0 0.0
    %504 = vmatpush1.msra.mxu0 0.0
    %505 = vmatprep.subr.mxu0 0.0
    %506 = vmatpush1.msra.mxu0 0.0
    %507 = vmatprep.subr.mxu0 0.0
    %508 = vmatpush1.msra.mxu0 0.0
    %509 = vmatprep.subr.mxu0 0.0
    %510 = vmatpush1.msra.mxu0 0.0
    %511 = vmatprep.subr.mxu0 0.0
    %512 = vmatpush1.msra.mxu0 0.0
    %513 = vmatprep.subr.mxu0 0.0
    %514 = vmatpush1.msra.mxu0 0.0
    %515 = vmatprep.subr.mxu0 0.0
    %516 = vmatpush1.msra.mxu0 0.0
    %517 = vmatprep.subr.mxu0 0.0
    %518 = vmatpush1.msra.mxu0 0.0
    %519 = vmatprep.subr.mxu0 0.0
    %520 = vmatpush1.msra.mxu0 0.0
    %521 = vmatprep.subr.mxu0 0.0
    %522 = vmatpush1.msra.mxu0 0.0
    %523 = vmatprep.subr.mxu0 0.0
    %524 = vmatpush1.msra.mxu0 0.0
    %525 = vmatprep.subr.mxu0 0.0
    %526 = vmatpush1.msra.mxu0 0.0
    %527 = vmatprep.subr.mxu0 0.0
    %528 = vmatpush1.msra.mxu0 0.0
    %529 = vmatprep.subr.mxu0 0.0
    %530 = vmatpush1.msra.mxu0 0.0
    %531 = vmatprep.subr.mxu0 0.0
    %532 = vmatpush1.msra.mxu0 0.0
    %533 = vmatprep.subr.mxu0 0.0
    %534 = vmatpush1.msra.mxu0 0.0
    %535 = vmatprep.mubr.f32.mxu0 0.0
    %v536 = vand.u32 %v142, 4294901760
    %537 = vmatmul.mubr.f32.gmra.mrb[0].mxu0 %v536
    %v538 = vpop.f32.mrb[0].mxu0
    %v539 = vadd.f32 %v459, %v538
    %v540 = vpop.f32.mrb[0].mxu0
    %541 = vdwg.mxu0
    %542 = vmatprep.subr.mxu0 0.0
    %v543 = vand.u32 %v137, 4294901760
    %544 = vmatpush1.msra.mxu0 %v543
    %545 = vmatprep.subr.mxu0 0.0
    %v546 = vand.u32 %v138, 4294901760
    %547 = vmatpush1.msra.mxu0 %v546
    %548 = vmatprep.subr.mxu0 0.0
    %v549 = vand.u32 %v139, 4294901760
    %550 = vmatpush1.msra.mxu0 %v549
    %551 = vmatprep.subr.mxu0 0.0
    %552 = vmatpush1.msra.mxu0 0.0
    %553 = vmatprep.subr.mxu0 0.0
    %554 = vmatpush1.msra.mxu0 0.0
    %555 = vmatprep.subr.mxu0 0.0
    %556 = vmatpush1.msra.mxu0 0.0
    %557 = vmatprep.subr.mxu0 0.0
    %558 = vmatpush1.msra.mxu0 0.0
    %559 = vmatprep.subr.mxu0 0.0
    %560 = vmatpush1.msra.mxu0 0.0
    %561 = vmatprep.subr.mxu0 0.0
    %562 = vmatpush1.msra.mxu0 0.0
    %563 = vmatprep.subr.mxu0 0.0
    %564 = vmatpush1.msra.mxu0 0.0
    %565 = vmatprep.subr.mxu0 0.0
    %566 = vmatpush1.msra.mxu0 0.0
    %567 = vmatprep.subr.mxu0 0.0
    %568 = vmatpush1.msra.mxu0 0.0
    %569 = vmatprep.subr.mxu0 0.0
    %570 = vmatpush1.msra.mxu0 0.0
    %571 = vmatprep.subr.mxu0 0.0
    %572 = vmatpush1.msra.mxu0 0.0
    %573 = vmatprep.subr.mxu0 0.0
    %574 = vmatpush1.msra.mxu0 0.0
    %575 = vmatprep.subr.mxu0 0.0
    %576 = vmatpush1.msra.mxu0 0.0
    %577 = vmatprep.subr.mxu0 0.0
    %578 = vmatpush1.msra.mxu0 0.0
    %579 = vmatprep.subr.mxu0 0.0
    %580 = vmatpush1.msra.mxu0 0.0
    %581 = vmatprep.subr.mxu0 0.0
    %582 = vmatpush1.msra.mxu0 0.0
    %583 = vmatprep.subr.mxu0 0.0
    %584 = vmatpush1.msra.mxu0 0.0
    %585 = vmatprep.subr.mxu0 0.0
    %586 = vmatpush1.msra.mxu0 0.0
    %587 = vmatprep.subr.mxu0 0.0
    %588 = vmatpush1.msra.mxu0 0.0
    %589 = vmatprep.subr.mxu0 0.0
    %590 = vmatpush1.msra.mxu0 0.0
    %591 = vmatprep.subr.mxu0 0.0
    %592 = vmatpush1.msra.mxu0 0.0
    %593 = vmatprep.subr.mxu0 0.0
    %594 = vmatpush1.msra.mxu0 0.0
    %595 = vmatprep.subr.mxu0 0.0
    %596 = vmatpush1.msra.mxu0 0.0
    %597 = vmatprep.subr.mxu0 0.0
    %598 = vmatpush1.msra.mxu0 0.0
    %599 = vmatprep.subr.mxu0 0.0
    %600 = vmatpush1.msra.mxu0 0.0
    %601 = vmatprep.subr.mxu0 0.0
    %602 = vmatpush1.msra.mxu0 0.0
    %603 = vmatprep.subr.mxu0 0.0
    %604 = vmatpush1.msra.mxu0 0.0
    %605 = vmatprep.subr.mxu0 0.0
    %606 = vmatpush1.msra.mxu0 0.0
    %607 = vmatprep.subr.mxu0 0.0
    %608 = vmatpush1.msra.mxu0 0.0
    %609 = vmatprep.mubr.f32.mxu0 0.0
    %v610 = vand.u32 %v142, 4294901760
    %611 = vmatmul.mubr.f32.gmra.mrb[0].mxu0 %v610
    %v612 = vpop.f32.mrb[0].mxu0
    %v613 = vadd.f32 %v539, %v612
    %v614 = vpop.f32.mrb[0].mxu0
    %615 = vdwg.mxu0
    %v616 = vld [vmem:[#allocation2] sm:$0xff]
    %v617 = vld [vmem:[#allocation2 + $0x8] sm:$0xff]
    %v618 = vld [vmem:[#allocation2 + $0x10] sm:$0xff]
    %v619 = vld [vmem:[#allocation2 + $0x18] sm:$0xff]
    %v620 = vld [vmem:[#allocation2 + $0x20] sm:$0xff]
    %v621 = vld [vmem:[#allocation2 + $0x28] sm:$0xff]
    %v622 = vld [vmem:[#allocation2 + $0x30] sm:$0xff]
    %v623 = vld [vmem:[#allocation2 + $0x38] sm:$0xff]
    %vm624 = vcmask 523264
    %v626 = vsel %vm624, %v120, 0
    %v629 = vsel %vm624, %v121, 0
    %v632 = vsel %vm624, %v122, 0
    %v635 = vsel %vm624, %v123, 0
    %v638 = vsel %vm624, %v124, 0
    %v641 = vsel %vm624, %v125, 0
    %v644 = vsel %vm624, %v126, 0
    %v647 = vsel %vm624, %v127, 0
    %649 = vmatprep.subr.mxu0 0.0
    %v650 = vand.u32 %v616, 4294901760
    %651 = vmatpush1.msra.mxu0 %v650
    %652 = vmatprep.subr.mxu0 0.0
    %v653 = vand.u32 %v617, 4294901760
    %654 = vmatpush1.msra.mxu0 %v653
    %655 = vmatprep.subr.mxu0 0.0
    %v656 = vand.u32 %v618, 4294901760
    %657 = vmatpush1.msra.mxu0 %v656
    %658 = vmatprep.subr.mxu0 0.0
    %v659 = vand.u32 %v619, 4294901760
    %660 = vmatpush1.msra.mxu0 %v659
    %661 = vmatprep.subr.mxu0 0.0
    %v662 = vand.u32 %v620, 4294901760
    %663 = vmatpush1.msra.mxu0 %v662
    %664 = vmatprep.subr.mxu0 0.0
    %v665 = vand.u32 %v621, 4294901760
    %666 = vmatpush1.msra.mxu0 %v665
    %667 = vmatprep.subr.mxu0 0.0
    %v668 = vand.u32 %v622, 4294901760
    %669 = vmatpush1.msra.mxu0 %v668
    %670 = vmatprep.subr.mxu0 0.0
    %v671 = vand.u32 %v623, 4294901760
    %672 = vmatpush1.msra.mxu0 %v671
    %673 = vmatprep.subr.mxu0 0.0
    %674 = vmatpush1.msra.mxu0 0.0
    %675 = vmatprep.subr.mxu0 0.0
    %676 = vmatpush1.msra.mxu0 0.0
    %677 = vmatprep.subr.mxu0 0.0
    %678 = vmatpush1.msra.mxu0 0.0
    %679 = vmatprep.subr.mxu0 0.0
    %680 = vmatpush1.msra.mxu0 0.0
    %681 = vmatprep.subr.mxu0 0.0
    %682 = vmatpush1.msra.mxu0 0.0
    %683 = vmatprep.subr.mxu0 0.0
    %684 = vmatpush1.msra.mxu0 0.0
    %685 = vmatprep.subr.mxu0 0.0
    %686 = vmatpush1.msra.mxu0 0.0
    %687 = vmatprep.subr.mxu0 0.0
    %688 = vmatpush1.msra.mxu0 0.0
    %689 = vmatprep.subr.mxu0 0.0
    %690 = vmatpush1.msra.mxu0 0.0
    %691 = vmatprep.subr.mxu0 0.0
    %692 = vmatpush1.msra.mxu0 0.0
    %693 = vmatprep.subr.mxu0 0.0
    %694 = vmatpush1.msra.mxu0 0.0
    %695 = vmatprep.subr.mxu0 0.0
    %696 = vmatpush1.msra.mxu0 0.0
    %697 = vmatprep.subr.mxu0 0.0
    %698 = vmatpush1.msra.mxu0 0.0
    %699 = vmatprep.subr.mxu0 0.0
    %700 = vmatpush1.msra.mxu0 0.0
    %701 = vmatprep.subr.mxu0 0.0
    %702 = vmatpush1.msra.mxu0 0.0
    %703 = vmatprep.subr.mxu0 0.0
    %704 = vmatpush1.msra.mxu0 0.0
    %705 = vmatprep.subr.mxu0 0.0
    %706 = vmatpush1.msra.mxu0 0.0
    %707 = vmatprep.subr.mxu0 0.0
    %708 = vmatpush1.msra.mxu0 0.0
    %709 = vmatprep.subr.mxu0 0.0
    %710 = vmatpush1.msra.mxu0 0.0
    %711 = vmatprep.subr.mxu0 0.0
    %712 = vmatpush1.msra.mxu0 0.0
    %713 = vmatprep.subr.mxu0 0.0
    %714 = vmatpush1.msra.mxu0 0.0
    %715 = vmatprep.subr.mxu0 0.0
    %716 = vmatpush1.msra.mxu0 0.0
    %717 = vmatprep.subr.mxu0 0.0
    %718 = vmatpush1.msra.mxu0 0.0
    %719 = vmatprep.subr.mxu0 0.0
    %720 = vmatpush1.msra.mxu0 0.0
    %721 = vmatprep.mubr.f32.mxu0 0.0
    %v722 = vand.u32 %v626, 4294901760
    %v723 = vsub.f32 %v626, %v722
    %v724 = vand.u32 %v723, 4294901760
    %v725 = vsub.f32 %v723, %v724
    %v726 = vand.u32 %v725, 4294901760
    %727 = vmatmul.mubr.f32.gmra.mrb[0].mxu0 %v726
    %v728 = vpop.f32.mrb[0].mxu0
    %v729 = vadd.f32 0.0, %v728
    %v730 = vpop.f32.mrb[0].mxu0
    %731 = vmatprep.mubr.f32.mxu0 0.0
    %v732 = vand.u32 %v629, 4294901760
    %v733 = vsub.f32 %v629, %v732
    %v734 = vand.u32 %v733, 4294901760
    %v735 = vsub.f32 %v733, %v734
    %v736 = vand.u32 %v735, 4294901760
    %737 = vmatmul.mubr.f32.gmra.mrb[0].mxu0 %v736
    %v738 = vpop.f32.mrb[0].mxu0
    %v739 = vadd.f32 0.0, %v738
    %v740 = vpop.f32.mrb[0].mxu0
    %741 = vmatprep.mubr.f32.mxu0 0.0
    %v742 = vand.u32 %v632, 4294901760
    %v743 = vsub.f32 %v632, %v742
    %v744 = vand.u32 %v743, 4294901760
    %v745 = vsub.f32 %v743, %v744
    %v746 = vand.u32 %v745, 4294901760
    %747 = vmatmul.mubr.f32.gmra.mrb[0].mxu0 %v746
    %v748 = vpop.f32.mrb[0].mxu0
    %v749 = vadd.f32 0.0, %v748
    %v750 = vpop.f32.mrb[0].mxu0
    %751 = vmatprep.mubr.f32.mxu0 0.0
    %v752 = vand.u32 %v635, 4294901760
    %v753 = vsub.f32 %v635, %v752
    %v754 = vand.u32 %v753, 4294901760
    %v755 = vsub.f32 %v753, %v754
    %v756 = vand.u32 %v755, 4294901760
    %757 = vmatmul.mubr.f32.gmra.mrb[0].mxu0 %v756
    %v758 = vpop.f32.mrb[0].mxu0
    %v759 = vadd.f32 0.0, %v758
    %v760 = vpop.f32.mrb[0].mxu0
    %761 = vmatprep.mubr.f32.mxu0 0.0
    %v762 = vand.u32 %v638, 4294901760
    %v763 = vsub.f32 %v638, %v762
    %v764 = vand.u32 %v763, 4294901760
    %v765 = vsub.f32 %v763, %v764
    %v766 = vand.u32 %v765, 4294901760
    %767 = vmatmul.mubr.f32.gmra.mrb[0].mxu0 %v766
    %v768 = vpop.f32.mrb[0].mxu0
    %v769 = vadd.f32 0.0, %v768
    %v770 = vpop.f32.mrb[0].mxu0
    %771 = vmatprep.mubr.f32.mxu0 0.0
    %v772 = vand.u32 %v641, 4294901760
    %v773 = vsub.f32 %v641, %v772
    %v774 = vand.u32 %v773, 4294901760
    %v775 = vsub.f32 %v773, %v774
    %v776 = vand.u32 %v775, 4294901760
    %777 = vmatmul.mubr.f32.gmra.mrb[0].mxu0 %v776
    %v778 = vpop.f32.mrb[0].mxu0
    %v779 = vadd.f32 0.0, %v778
    %v780 = vpop.f32.mrb[0].mxu0
    %781 = vmatprep.mubr.f32.mxu0 0.0
    %v782 = vand.u32 %v644, 4294901760
    %v783 = vsub.f32 %v644, %v782
    %v784 = vand.u32 %v783, 4294901760
    %v785 = vsub.f32 %v783, %v784
    %v786 = vand.u32 %v785, 4294901760
    %787 = vmatmul.mubr.f32.gmra.mrb[0].mxu0 %v786
    %v788 = vpop.f32.mrb[0].mxu0
    %v789 = vadd.f32 0.0, %v788
    %v790 = vpop.f32.mrb[0].mxu0
    %791 = vmatprep.mubr.f32.mxu0 0.0
    %v792 = vand.u32 %v647, 4294901760
    %v793 = vsub.f32 %v647, %v792
    %v794 = vand.u32 %v793, 4294901760
    %v795 = vsub.f32 %v793, %v794
    %v796 = vand.u32 %v795, 4294901760
    %797 = vmatmul.mubr.f32.gmra.mrb[0].mxu0 %v796
    %v798 = vpop.f32.mrb[0].mxu0
    %v799 = vadd.f32 0.0, %v798
    %v800 = vpop.f32.mrb[0].mxu0
    %801 = vdwg.mxu0
    %802 = vmatprep.subr.mxu0 0.0
    %v803 = vand.u32 %v616, 4294901760
    %v804 = vsub.f32 %v616, %v803
    %v805 = vand.u32 %v804, 4294901760
    %v806 = vsub.f32 %v804, %v805
    %v807 = vand.u32 %v806, 4294901760
    %808 = vmatpush1.msra.mxu0 %v807
    %809 = vmatprep.subr.mxu0 0.0
    %v810 = vand.u32 %v617, 4294901760
    %v811 = vsub.f32 %v617, %v810
    %v812 = vand.u32 %v811, 4294901760
    %v813 = vsub.f32 %v811, %v812
    %v814 = vand.u32 %v813, 4294901760
    %815 = vmatpush1.msra.mxu0 %v814
    %816 = vmatprep.subr.mxu0 0.0
    %v817 = vand.u32 %v618, 4294901760
    %v818 = vsub.f32 %v618, %v817
    %v819 = vand.u32 %v818, 4294901760
    %v820 = vsub.f32 %v818, %v819
    %v821 = vand.u32 %v820, 4294901760
    %822 = vmatpush1.msra.mxu0 %v821
    %823 = vmatprep.subr.mxu0 0.0
    %v824 = vand.u32 %v619, 4294901760
    %v825 = vsub.f32 %v619, %v824
    %v826 = vand.u32 %v825, 4294901760
    %v827 = vsub.f32 %v825, %v826
    %v828 = vand.u32 %v827, 4294901760
    %829 = vmatpush1.msra.mxu0 %v828
    %830 = vmatprep.subr.mxu0 0.0
    %v831 = vand.u32 %v620, 4294901760
    %v832 = vsub.f32 %v620, %v831
    %v833 = vand.u32 %v832, 4294901760
    %v834 = vsub.f32 %v832, %v833
    %v835 = vand.u32 %v834, 4294901760
    %836 = vmatpush1.msra.mxu0 %v835
    %837 = vmatprep.subr.mxu0 0.0
    %v838 = vand.u32 %v621, 4294901760
    %v839 = vsub.f32 %v621, %v838
    %v840 = vand.u32 %v839, 4294901760
    %v841 = vsub.f32 %v839, %v840
    %v842 = vand.u32 %v841, 4294901760
    %843 = vmatpush1.msra.mxu0 %v842
    %844 = vmatprep.subr.mxu0 0.0
    %v845 = vand.u32 %v622, 4294901760
    %v846 = vsub.f32 %v622, %v845
    %v847 = vand.u32 %v846, 4294901760
    %v848 = vsub.f32 %v846, %v847
    %v849 = vand.u32 %v848, 4294901760
    %850 = vmatpush1.msra.mxu0 %v849
    %851 = vmatprep.subr.mxu0 0.0
    %v852 = vand.u32 %v623, 4294901760
    %v853 = vsub.f32 %v623, %v852
    %v854 = vand.u32 %v853, 4294901760
    %v855 = vsub.f32 %v853, %v854
    %v856 = vand.u32 %v855, 4294901760
    %857 = vmatpush1.msra.mxu0 %v856
    %858 = vmatprep.subr.mxu0 0.0
    %859 = vmatpush1.msra.mxu0 0.0
    %860 = vmatprep.subr.mxu0 0.0
    %861 = vmatpush1.msra.mxu0 0.0
    %862 = vmatprep.subr.mxu0 0.0
    %863 = vmatpush1.msra.mxu0 0.0
    %864 = vmatprep.subr.mxu0 0.0
    %865 = vmatpush1.msra.mxu0 0.0
    %866 = vmatprep.subr.mxu0 0.0
    %867 = vmatpush1.msra.mxu0 0.0
    %868 = vmatprep.subr.mxu0 0.0
    %869 = vmatpush1.msra.mxu0 0.0
    %870 = vmatprep.subr.mxu0 0.0
    %871 = vmatpush1.msra.mxu0 0.0
    %872 = vmatprep.subr.mxu0 0.0
    %873 = vmatpush1.msra.mxu0 0.0
    %874 = vmatprep.subr.mxu0 0.0
    %875 = vmatpush1.msra.mxu0 0.0
    %876 = vmatprep.subr.mxu0 0.0
    %877 = vmatpush1.msra.mxu0 0.0
    %878 = vmatprep.subr.mxu0 0.0
    %879 = vmatpush1.msra.mxu0 0.0
    %880 = vmatprep.subr.mxu0 0.0
    %881 = vmatpush1.msra.mxu0 0.0
    %882 = vmatprep.subr.mxu0 0.0
    %883 = vmatpush1.msra.mxu0 0.0
    %884 = vmatprep.subr.mxu0 0.0
    %885 = vmatpush1.msra.mxu0 0.0
    %886 = vmatprep.subr.mxu0 0.0
    %887 = vmatpush1.msra.mxu0 0.0
    %888 = vmatprep.subr.mxu0 0.0
    %889 = vmatpush1.msra.mxu0 0.0
    %890 = vmatprep.subr.mxu0 0.0
    %891 = vmatpush1.msra.mxu0 0.0
    %892 = vmatprep.subr.mxu0 0.0
    %893 = vmatpush1.msra.mxu0 0.0
    %894 = vmatprep.subr.mxu0 0.0
    %895 = vmatpush1.msra.mxu0 0.0
    %896 = vmatprep.subr.mxu0 0.0
    %897 = vmatpush1.msra.mxu0 0.0
    %898 = vmatprep.subr.mxu0 0.0
    %899 = vmatpush1.msra.mxu0 0.0
    %900 = vmatprep.subr.mxu0 0.0
    %901 = vmatpush1.msra.mxu0 0.0
    %902 = vmatprep.subr.mxu0 0.0
    %903 = vmatpush1.msra.mxu0 0.0
    %904 = vmatprep.subr.mxu0 0.0
    %905 = vmatpush1.msra.mxu0 0.0
    %906 = vmatprep.mubr.f32.mxu0 0.0
    %v907 = vand.u32 %v626, 4294901760
    %908 = vmatmul.mubr.f32.gmra.mrb[0].mxu0 %v907
    %v909 = vpop.f32.mrb[0].mxu0
    %v910 = vadd.f32 %v729, %v909
    %v911 = vpop.f32.mrb[0].mxu0
    %912 = vmatprep.mubr.f32.mxu0 0.0
    %v913 = vand.u32 %v629, 4294901760
    %914 = vmatmul.mubr.f32.gmra.mrb[0].mxu0 %v913
    %v915 = vpop.f32.mrb[0].mxu0
    %v916 = vadd.f32 %v739, %v915
    %v917 = vpop.f32.mrb[0].mxu0
    %918 = vmatprep.mubr.f32.mxu0 0.0
    %v919 = vand.u32 %v632, 4294901760
    %920 = vmatmul.mubr.f32.gmra.mrb[0].mxu0 %v919
    %v921 = vpop.f32.mrb[0].mxu0
    %v922 = vadd.f32 %v749, %v921
    %v923 = vpop.f32.mrb[0].mxu0
    %924 = vmatprep.mubr.f32.mxu0 0.0
    %v925 = vand.u32 %v635, 4294901760
    %926 = vmatmul.mubr.f32.gmra.mrb[0].mxu0 %v925
    %v927 = vpop.f32.mrb[0].mxu0
    %v928 = vadd.f32 %v759, %v927
    %v929 = vpop.f32.mrb[0].mxu0
    %930 = vmatprep.mubr.f32.mxu0 0.0
    %v931 = vand.u32 %v638, 4294901760
    %932 = vmatmul.mubr.f32.gmra.mrb[0].mxu0 %v931
    %v933 = vpop.f32.mrb[0].mxu0
    %v934 = vadd.f32 %v769, %v933
    %v935 = vpop.f32.mrb[0].mxu0
    %936 = vmatprep.mubr.f32.mxu0 0.0
    %v937 = vand.u32 %v641, 4294901760
    %938 = vmatmul.mubr.f32.gmra.mrb[0].mxu0 %v937
    %v939 = vpop.f32.mrb[0].mxu0
    %v940 = vadd.f32 %v779, %v939
    %v941 = vpop.f32.mrb[0].mxu0
    %942 = vmatprep.mubr.f32.mxu0 0.0
    %v943 = vand.u32 %v644, 4294901760
    %944 = vmatmul.mubr.f32.gmra.mrb[0].mxu0 %v943
    %v945 = vpop.f32.mrb[0].mxu0
    %v946 = vadd.f32 %v789, %v945
    %v947 = vpop.f32.mrb[0].mxu0
    %948 = vmatprep.mubr.f32.mxu0 0.0
    %v949 = vand.u32 %v647, 4294901760
    %950 = vmatmul.mubr.f32.gmra.mrb[0].mxu0 %v949
    %v951 = vpop.f32.mrb[0].mxu0
    %v952 = vadd.f32 %v799, %v951
    %v953 = vpop.f32.mrb[0].mxu0
    %954 = vdwg.mxu0
    %955 = vmatprep.subr.mxu0 0.0
    %v956 = vand.u32 %v616, 4294901760
    %v957 = vsub.f32 %v616, %v956
    %958 = vmatpush1.msra.mxu0 %v957
    %959 = vmatprep.subr.mxu0 0.0
    %v960 = vand.u32 %v617, 4294901760
    %v961 = vsub.f32 %v617, %v960
    %962 = vmatpush1.msra.mxu0 %v961
    %963 = vmatprep.subr.mxu0 0.0
    %v964 = vand.u32 %v618, 4294901760
    %v965 = vsub.f32 %v618, %v964
    %966 = vmatpush1.msra.mxu0 %v965
    %967 = vmatprep.subr.mxu0 0.0
    %v968 = vand.u32 %v619, 4294901760
    %v969 = vsub.f32 %v619, %v968
    %970 = vmatpush1.msra.mxu0 %v969
    %971 = vmatprep.subr.mxu0 0.0
    %v972 = vand.u32 %v620, 4294901760
    %v973 = vsub.f32 %v620, %v972
    %974 = vmatpush1.msra.mxu0 %v973
    %975 = vmatprep.subr.mxu0 0.0
    %v976 = vand.u32 %v621, 4294901760
    %v977 = vsub.f32 %v621, %v976
    %978 = vmatpush1.msra.mxu0 %v977
    %979 = vmatprep.subr.mxu0 0.0
    %v980 = vand.u32 %v622, 4294901760
    %v981 = vsub.f32 %v622, %v980
    %982 = vmatpush1.msra.mxu0 %v981
    %983 = vmatprep.subr.mxu0 0.0
    %v984 = vand.u32 %v623, 4294901760
    %v985 = vsub.f32 %v623, %v984
    %986 = vmatpush1.msra.mxu0 %v985
    %987 = vmatprep.subr.mxu0 0.0
    %988 = vmatpush1.msra.mxu0 0.0
    %989 = vmatprep.subr.mxu0 0.0
    %990 = vmatpush1.msra.mxu0 0.0
    %991 = vmatprep.subr.mxu0 0.0
    %992 = vmatpush1.msra.mxu0 0.0
    %993 = vmatprep.subr.mxu0 0.0
    %994 = vmatpush1.msra.mxu0 0.0
    %995 = vmatprep.subr.mxu0 0.0
    %996 = vmatpush1.msra.mxu0 0.0
    %997 = vmatprep.subr.mxu0 0.0
    %998 = vmatpush1.msra.mxu0 0.0
    %999 = vmatprep.subr.mxu0 0.0
    %1000 = vmatpush1.msra.mxu0 0.0
    %1001 = vmatprep.subr.mxu0 0.0
    %1002 = vmatpush1.msra.mxu0 0.0
    %1003 = vmatprep.subr.mxu0 0.0
    %1004 = vmatpush1.msra.mxu0 0.0
    %1005 = vmatprep.subr.mxu0 0.0
    %1006 = vmatpush1.msra.mxu0 0.0
    %1007 = vmatprep.subr.mxu0 0.0
    %1008 = vmatpush1.msra.mxu0 0.0
    %1009 = vmatprep.subr.mxu0 0.0
    %1010 = vmatpush1.msra.mxu0 0.0
    %1011 = vmatprep.subr.mxu0 0.0
    %1012 = vmatpush1.msra.mxu0 0.0
    %1013 = vmatprep.subr.mxu0 0.0
    %1014 = vmatpush1.msra.mxu0 0.0
    %1015 = vmatprep.subr.mxu0 0.0
    %1016 = vmatpush1.msra.mxu0 0.0
    %1017 = vmatprep.subr.mxu0 0.0
    %1018 = vmatpush1.msra.mxu0 0.0
    %1019 = vmatprep.subr.mxu0 0.0
    %1020 = vmatpush1.msra.mxu0 0.0
    %1021 = vmatprep.subr.mxu0 0.0
    %1022 = vmatpush1.msra.mxu0 0.0
    %1023 = vmatprep.subr.mxu0 0.0
    %1024 = vmatpush1.msra.mxu0 0.0
    %1025 = vmatprep.subr.mxu0 0.0
    %1026 = vmatpush1.msra.mxu0 0.0
    %1027 = vmatprep.subr.mxu0 0.0
    %1028 = vmatpush1.msra.mxu0 0.0
    %1029 = vmatprep.subr.mxu0 0.0
    %1030 = vmatpush1.msra.mxu0 0.0
    %1031 = vmatprep.subr.mxu0 0.0
    %1032 = vmatpush1.msra.mxu0 0.0
    %1033 = vmatprep.subr.mxu0 0.0
    %1034 = vmatpush1.msra.mxu0 0.0
    %1035 = vmatprep.mubr.f32.mxu0 0.0
    %v1036 = vand.u32 %v626, 4294901760
    %v1037 = vsub.f32 %v626, %v1036
    %1038 = vmatmul.mubr.f32.gmra.mrb[0].mxu0 %v1037
    %v1039 = vpop.f32.mrb[0].mxu0
    %v1040 = vadd.f32 %v910, %v1039
    %v1041 = vpop.f32.mrb[0].mxu0
    %1042 = vmatprep.mubr.f32.mxu0 0.0
    %v1043 = vand.u32 %v629, 4294901760
    %v1044 = vsub.f32 %v629, %v1043
    %1045 = vmatmul.mubr.f32.gmra.mrb[0].mxu0 %v1044
    %v1046 = vpop.f32.mrb[0].mxu0
    %v1047 = vadd.f32 %v916, %v1046
    %v1048 = vpop.f32.mrb[0].mxu0
    %1049 = vmatprep.mubr.f32.mxu0 0.0
    %v1050 = vand.u32 %v632, 4294901760
    %v1051 = vsub.f32 %v632, %v1050
    %1052 = vmatmul.mubr.f32.gmra.mrb[0].mxu0 %v1051
    %v1053 = vpop.f32.mrb[0].mxu0
    %v1054 = vadd.f32 %v922, %v1053
    %v1055 = vpop.f32.mrb[0].mxu0
    %1056 = vmatprep.mubr.f32.mxu0 0.0
    %v1057 = vand.u32 %v635, 4294901760
    %v1058 = vsub.f32 %v635, %v1057
    %1059 = vmatmul.mubr.f32.gmra.mrb[0].mxu0 %v1058
    %v1060 = vpop.f32.mrb[0].mxu0
    %v1061 = vadd.f32 %v928, %v1060
    %v1062 = vpop.f32.mrb[0].mxu0
    %1063 = vmatprep.mubr.f32.mxu0 0.0
    %v1064 = vand.u32 %v638, 4294901760
    %v1065 = vsub.f32 %v638, %v1064
    %1066 = vmatmul.mubr.f32.gmra.mrb[0].mxu0 %v1065
    %v1067 = vpop.f32.mrb[0].mxu0
    %v1068 = vadd.f32 %v934, %v1067
    %v1069 = vpop.f32.mrb[0].mxu0
    %1070 = vmatprep.mubr.f32.mxu0 0.0
    %v1071 = vand.u32 %v641, 4294901760
    %v1072 = vsub.f32 %v641, %v1071
    %1073 = vmatmul.mubr.f32.gmra.mrb[0].mxu0 %v1072
    %v1074 = vpop.f32.mrb[0].mxu0
    %v1075 = vadd.f32 %v940, %v1074
    %v1076 = vpop.f32.mrb[0].mxu0
    %1077 = vmatprep.mubr.f32.mxu0 0.0
    %v1078 = vand.u32 %v644, 4294901760
    %v1079 = vsub.f32 %v644, %v1078
    %1080 = vmatmul.mubr.f32.gmra.mrb[0].mxu0 %v1079
    %v1081 = vpop.f32.mrb[0].mxu0
    %v1082 = vadd.f32 %v946, %v1081
    %v1083 = vpop.f32.mrb[0].mxu0
    %1084 = vmatprep.mubr.f32.mxu0 0.0
    %v1085 = vand.u32 %v647, 4294901760
    %v1086 = vsub.f32 %v647, %v1085
    %1087 = vmatmul.mubr.f32.gmra.mrb[0].mxu0 %v1086
    %v1088 = vpop.f32.mrb[0].mxu0
    %v1089 = vadd.f32 %v952, %v1088
    %v1090 = vpop.f32.mrb[0].mxu0
    %1091 = vdwg.mxu0
    %1092 = vmatprep.subr.mxu0 0.0
    %v1093 = vand.u32 %v616, 4294901760
    %1094 = vmatpush1.msra.mxu0 %v1093
    %1095 = vmatprep.subr.mxu0 0.0
    %v1096 = vand.u32 %v617, 4294901760
    %1097 = vmatpush1.msra.mxu0 %v1096
    %1098 = vmatprep.subr.mxu0 0.0
    %v1099 = vand.u32 %v618, 4294901760
    %1100 = vmatpush1.msra.mxu0 %v1099
    %1101 = vmatprep.subr.mxu0 0.0
    %v1102 = vand.u32 %v619, 4294901760
    %1103 = vmatpush1.msra.mxu0 %v1102
    %1104 = vmatprep.subr.mxu0 0.0
    %v1105 = vand.u32 %v620, 4294901760
    %1106 = vmatpush1.msra.mxu0 %v1105
    %1107 = vmatprep.subr.mxu0 0.0
    %v1108 = vand.u32 %v621, 4294901760
    %1109 = vmatpush1.msra.mxu0 %v1108
    %1110 = vmatprep.subr.mxu0 0.0
    %v1111 = vand.u32 %v622, 4294901760
    %1112 = vmatpush1.msra.mxu0 %v1111
    %1113 = vmatprep.subr.mxu0 0.0
    %v1114 = vand.u32 %v623, 4294901760
    %1115 = vmatpush1.msra.mxu0 %v1114
    %1116 = vmatprep.subr.mxu0 0.0
    %1117 = vmatpush1.msra.mxu0 0.0
    %1118 = vmatprep.subr.mxu0 0.0
    %1119 = vmatpush1.msra.mxu0 0.0
    %1120 = vmatprep.subr.mxu0 0.0
    %1121 = vmatpush1.msra.mxu0 0.0
    %1122 = vmatprep.subr.mxu0 0.0
    %1123 = vmatpush1.msra.mxu0 0.0
    %1124 = vmatprep.subr.mxu0 0.0
    %1125 = vmatpush1.msra.mxu0 0.0
    %1126 = vmatprep.subr.mxu0 0.0
    %1127 = vmatpush1.msra.mxu0 0.0
    %1128 = vmatprep.subr.mxu0 0.0
    %1129 = vmatpush1.msra.mxu0 0.0
    %1130 = vmatprep.subr.mxu0 0.0
    %1131 = vmatpush1.msra.mxu0 0.0
    %1132 = vmatprep.subr.mxu0 0.0
    %1133 = vmatpush1.msra.mxu0 0.0
    %1134 = vmatprep.subr.mxu0 0.0
    %1135 = vmatpush1.msra.mxu0 0.0
    %1136 = vmatprep.subr.mxu0 0.0
    %1137 = vmatpush1.msra.mxu0 0.0
    %1138 = vmatprep.subr.mxu0 0.0
    %1139 = vmatpush1.msra.mxu0 0.0
    %1140 = vmatprep.subr.mxu0 0.0
    %1141 = vmatpush1.msra.mxu0 0.0
    %1142 = vmatprep.subr.mxu0 0.0
    %1143 = vmatpush1.msra.mxu0 0.0
    %1144 = vmatprep.subr.mxu0 0.0
    %1145 = vmatpush1.msra.mxu0 0.0
    %1146 = vmatprep.subr.mxu0 0.0
    %1147 = vmatpush1.msra.mxu0 0.0
    %1148 = vmatprep.subr.mxu0 0.0
    %1149 = vmatpush1.msra.mxu0 0.0
    %1150 = vmatprep.subr.mxu0 0.0
    %1151 = vmatpush1.msra.mxu0 0.0
    %1152 = vmatprep.subr.mxu0 0.0
    %1153 = vmatpush1.msra.mxu0 0.0
    %1154 = vmatprep.subr.mxu0 0.0
    %1155 = vmatpush1.msra.mxu0 0.0
    %1156 = vmatprep.subr.mxu0 0.0
    %1157 = vmatpush1.msra.mxu0 0.0
    %1158 = vmatprep.subr.mxu0 0.0
    %1159 = vmatpush1.msra.mxu0 0.0
    %1160 = vmatprep.subr.mxu0 0.0
    %1161 = vmatpush1.msra.mxu0 0.0
    %1162 = vmatprep.subr.mxu0 0.0
    %1163 = vmatpush1.msra.mxu0 0.0
    %1164 = vmatprep.mubr.f32.mxu0 0.0
    %v1165 = vand.u32 %v626, 4294901760
    %v1166 = vsub.f32 %v626, %v1165
    %v1167 = vand.u32 %v1166, 4294901760
    %1168 = vmatmul.mubr.f32.gmra.mrb[0].mxu0 %v1167
    %v1169 = vpop.f32.mrb[0].mxu0
    %v1170 = vadd.f32 %v1040, %v1169
    %v1171 = vpop.f32.mrb[0].mxu0
    %1172 = vmatprep.mubr.f32.mxu0 0.0
    %v1173 = vand.u32 %v629, 4294901760
    %v1174 = vsub.f32 %v629, %v1173
    %v1175 = vand.u32 %v1174, 4294901760
    %1176 = vmatmul.mubr.f32.gmra.mrb[0].mxu0 %v1175
    %v1177 = vpop.f32.mrb[0].mxu0
    %v1178 = vadd.f32 %v1047, %v1177
    %v1179 = vpop.f32.mrb[0].mxu0
    %1180 = vmatprep.mubr.f32.mxu0 0.0
    %v1181 = vand.u32 %v632, 4294901760
    %v1182 = vsub.f32 %v632, %v1181
    %v1183 = vand.u32 %v1182, 4294901760
    %1184 = vmatmul.mubr.f32.gmra.mrb[0].mxu0 %v1183
    %v1185 = vpop.f32.mrb[0].mxu0
    %v1186 = vadd.f32 %v1054, %v1185
    %v1187 = vpop.f32.mrb[0].mxu0
    %1188 = vmatprep.mubr.f32.mxu0 0.0
    %v1189 = vand.u32 %v635, 4294901760
    %v1190 = vsub.f32 %v635, %v1189
    %v1191 = vand.u32 %v1190, 4294901760
    %1192 = vmatmul.mubr.f32.gmra.mrb[0].mxu0 %v1191
    %v1193 = vpop.f32.mrb[0].mxu0
    %v1194 = vadd.f32 %v1061, %v1193
    %v1195 = vpop.f32.mrb[0].mxu0
    %1196 = vmatprep.mubr.f32.mxu0 0.0
    %v1197 = vand.u32 %v638, 4294901760
    %v1198 = vsub.f32 %v638, %v1197
    %v1199 = vand.u32 %v1198, 4294901760
    %1200 = vmatmul.mubr.f32.gmra.mrb[0].mxu0 %v1199
    %v1201 = vpop.f32.mrb[0].mxu0
    %v1202 = vadd.f32 %v1068, %v1201
    %v1203 = vpop.f32.mrb[0].mxu0
    %1204 = vmatprep.mubr.f32.mxu0 0.0
    %v1205 = vand.u32 %v641, 4294901760
    %v1206 = vsub.f32 %v641, %v1205
    %v1207 = vand.u32 %v1206, 4294901760
    %1208 = vmatmul.mubr.f32.gmra.mrb[0].mxu0 %v1207
    %v1209 = vpop.f32.mrb[0].mxu0
    %v1210 = vadd.f32 %v1075, %v1209
    %v1211 = vpop.f32.mrb[0].mxu0
    %1212 = vmatprep.mubr.f32.mxu0 0.0
    %v1213 = vand.u32 %v644, 4294901760
    %v1214 = vsub.f32 %v644, %v1213
    %v1215 = vand.u32 %v1214, 4294901760
    %1216 = vmatmul.mubr.f32.gmra.mrb[0].mxu0 %v1215
    %v1217 = vpop.f32.mrb[0].mxu0
    %v1218 = vadd.f32 %v1082, %v1217
    %v1219 = vpop.f32.mrb[0].mxu0
    %1220 = vmatprep.mubr.f32.mxu0 0.0
    %v1221 = vand.u32 %v647, 4294901760
    %v1222 = vsub.f32 %v647, %v1221
    %v1223 = vand.u32 %v1222, 4294901760
    %1224 = vmatmul.mubr.f32.gmra.mrb[0].mxu0 %v1223
    %v1225 = vpop.f32.mrb[0].mxu0
    %v1226 = vadd.f32 %v1089, %v1225
    %v1227 = vpop.f32.mrb[0].mxu0
    %1228 = vdwg.mxu0
    %1229 = vmatprep.subr.mxu0 0.0
    %v1230 = vand.u32 %v616, 4294901760
    %v1231 = vsub.f32 %v616, %v1230
    %v1232 = vand.u32 %v1231, 4294901760
    %1233 = vmatpush1.msra.mxu0 %v1232
    %1234 = vmatprep.subr.mxu0 0.0
    %v1235 = vand.u32 %v617, 4294901760
    %v1236 = vsub.f32 %v617, %v1235
    %v1237 = vand.u32 %v1236, 4294901760
    %1238 = vmatpush1.msra.mxu0 %v1237
    %1239 = vmatprep.subr.mxu0 0.0
    %v1240 = vand.u32 %v618, 4294901760
    %v1241 = vsub.f32 %v618, %v1240
    %v1242 = vand.u32 %v1241, 4294901760
    %1243 = vmatpush1.msra.mxu0 %v1242
    %1244 = vmatprep.subr.mxu0 0.0
    %v1245 = vand.u32 %v619, 4294901760
    %v1246 = vsub.f32 %v619, %v1245
    %v1247 = vand.u32 %v1246, 4294901760
    %1248 = vmatpush1.msra.mxu0 %v1247
    %1249 = vmatprep.subr.mxu0 0.0
    %v1250 = vand.u32 %v620, 4294901760
    %v1251 = vsub.f32 %v620, %v1250
    %v1252 = vand.u32 %v1251, 4294901760
    %1253 = vmatpush1.msra.mxu0 %v1252
    %1254 = vmatprep.subr.mxu0 0.0
    %v1255 = vand.u32 %v621, 4294901760
    %v1256 = vsub.f32 %v621, %v1255
    %v1257 = vand.u32 %v1256, 4294901760
    %1258 = vmatpush1.msra.mxu0 %v1257
    %1259 = vmatprep.subr.mxu0 0.0
    %v1260 = vand.u32 %v622, 4294901760
    %v1261 = vsub.f32 %v622, %v1260
    %v1262 = vand.u32 %v1261, 4294901760
    %1263 = vmatpush1.msra.mxu0 %v1262
    %1264 = vmatprep.subr.mxu0 0.0
    %v1265 = vand.u32 %v623, 4294901760
    %v1266 = vsub.f32 %v623, %v1265
    %v1267 = vand.u32 %v1266, 4294901760
    %1268 = vmatpush1.msra.mxu0 %v1267
    %1269 = vmatprep.subr.mxu0 0.0
    %1270 = vmatpush1.msra.mxu0 0.0
    %1271 = vmatprep.subr.mxu0 0.0
    %1272 = vmatpush1.msra.mxu0 0.0
    %1273 = vmatprep.subr.mxu0 0.0
    %1274 = vmatpush1.msra.mxu0 0.0
    %1275 = vmatprep.subr.mxu0 0.0
    %1276 = vmatpush1.msra.mxu0 0.0
    %1277 = vmatprep.subr.mxu0 0.0
    %1278 = vmatpush1.msra.mxu0 0.0
    %1279 = vmatprep.subr.mxu0 0.0
    %1280 = vmatpush1.msra.mxu0 0.0
    %1281 = vmatprep.subr.mxu0 0.0
    %1282 = vmatpush1.msra.mxu0 0.0
    %1283 = vmatprep.subr.mxu0 0.0
    %1284 = vmatpush1.msra.mxu0 0.0
    %1285 = vmatprep.subr.mxu0 0.0
    %1286 = vmatpush1.msra.mxu0 0.0
    %1287 = vmatprep.subr.mxu0 0.0
    %1288 = vmatpush1.msra.mxu0 0.0
    %1289 = vmatprep.subr.mxu0 0.0
    %1290 = vmatpush1.msra.mxu0 0.0
    %1291 = vmatprep.subr.mxu0 0.0
    %1292 = vmatpush1.msra.mxu0 0.0
    %1293 = vmatprep.subr.mxu0 0.0
    %1294 = vmatpush1.msra.mxu0 0.0
    %1295 = vmatprep.subr.mxu0 0.0
    %1296 = vmatpush1.msra.mxu0 0.0
    %1297 = vmatprep.subr.mxu0 0.0
    %1298 = vmatpush1.msra.mxu0 0.0
    %1299 = vmatprep.subr.mxu0 0.0
    %1300 = vmatpush1.msra.mxu0 0.0
    %1301 = vmatprep.subr.mxu0 0.0
    %1302 = vmatpush1.msra.mxu0 0.0
    %1303 = vmatprep.subr.mxu0 0.0
    %1304 = vmatpush1.msra.mxu0 0.0
    %1305 = vmatprep.subr.mxu0 0.0
    %1306 = vmatpush1.msra.mxu0 0.0
    %1307 = vmatprep.subr.mxu0 0.0
    %1308 = vmatpush1.msra.mxu0 0.0
    %1309 = vmatprep.subr.mxu0 0.0
    %1310 = vmatpush1.msra.mxu0 0.0
    %1311 = vmatprep.subr.mxu0 0.0
    %1312 = vmatpush1.msra.mxu0 0.0
    %1313 = vmatprep.subr.mxu0 0.0
    %1314 = vmatpush1.msra.mxu0 0.0
    %1315 = vmatprep.subr.mxu0 0.0
    %1316 = vmatpush1.msra.mxu0 0.0
    %1317 = vmatprep.mubr.f32.mxu0 0.0
    %v1318 = vand.u32 %v626, 4294901760
    %1319 = vmatmul.mubr.f32.gmra.mrb[0].mxu0 %v1318
    %v1320 = vpop.f32.mrb[0].mxu0
    %v1321 = vadd.f32 %v1170, %v1320
    %v1322 = vpop.f32.mrb[0].mxu0
    %1323 = vmatprep.mubr.f32.mxu0 0.0
    %v1324 = vand.u32 %v629, 4294901760
    %1325 = vmatmul.mubr.f32.gmra.mrb[0].mxu0 %v1324
    %v1326 = vpop.f32.mrb[0].mxu0
    %v1327 = vadd.f32 %v1178, %v1326
    %v1328 = vpop.f32.mrb[0].mxu0
    %1329 = vmatprep.mubr.f32.mxu0 0.0
    %v1330 = vand.u32 %v632, 4294901760
    %1331 = vmatmul.mubr.f32.gmra.mrb[0].mxu0 %v1330
    %v1332 = vpop.f32.mrb[0].mxu0
    %v1333 = vadd.f32 %v1186, %v1332
    %v1334 = vpop.f32.mrb[0].mxu0
    %1335 = vmatprep.mubr.f32.mxu0 0.0
    %v1336 = vand.u32 %v635, 4294901760
    %1337 = vmatmul.mubr.f32.gmra.mrb[0].mxu0 %v1336
    %v1338 = vpop.f32.mrb[0].mxu0
    %v1339 = vadd.f32 %v1194, %v1338
    %v1340 = vpop.f32.mrb[0].mxu0
    %1341 = vmatprep.mubr.f32.mxu0 0.0
    %v1342 = vand.u32 %v638, 4294901760
    %1343 = vmatmul.mubr.f32.gmra.mrb[0].mxu0 %v1342
    %v1344 = vpop.f32.mrb[0].mxu0
    %v1345 = vadd.f32 %v1202, %v1344
    %v1346 = vpop.f32.mrb[0].mxu0
    %1347 = vmatprep.mubr.f32.mxu0 0.0
    %v1348 = vand.u32 %v641, 4294901760
    %1349 = vmatmul.mubr.f32.gmra.mrb[0].mxu0 %v1348
    %v1350 = vpop.f32.mrb[0].mxu0
    %v1351 = vadd.f32 %v1210, %v1350
    %v1352 = vpop.f32.mrb[0].mxu0
    %1353 = vmatprep.mubr.f32.mxu0 0.0
    %v1354 = vand.u32 %v644, 4294901760
    %1355 = vmatmul.mubr.f32.gmra.mrb[0].mxu0 %v1354
    %v1356 = vpop.f32.mrb[0].mxu0
    %v1357 = vadd.f32 %v1218, %v1356
    %v1358 = vpop.f32.mrb[0].mxu0
    %1359 = vmatprep.mubr.f32.mxu0 0.0
    %v1360 = vand.u32 %v647, 4294901760
    %1361 = vmatmul.mubr.f32.gmra.mrb[0].mxu0 %v1360
    %v1362 = vpop.f32.mrb[0].mxu0
    %v1363 = vadd.f32 %v1226, %v1362
    %v1364 = vpop.f32.mrb[0].mxu0
    %1365 = vdwg.mxu0
    %1366 = vmatprep.subr.mxu0 0.0
    %v1367 = vand.u32 %v616, 4294901760
    %1368 = vmatpush1.msra.mxu0 %v1367
    %1369 = vmatprep.subr.mxu0 0.0
    %v1370 = vand.u32 %v617, 4294901760
    %1371 = vmatpush1.msra.mxu0 %v1370
    %1372 = vmatprep.subr.mxu0 0.0
    %v1373 = vand.u32 %v618, 4294901760
    %1374 = vmatpush1.msra.mxu0 %v1373
    %1375 = vmatprep.subr.mxu0 0.0
    %v1376 = vand.u32 %v619, 4294901760
    %1377 = vmatpush1.msra.mxu0 %v1376
    %1378 = vmatprep.subr.mxu0 0.0
    %v1379 = vand.u32 %v620, 4294901760
    %1380 = vmatpush1.msra.mxu0 %v1379
    %1381 = vmatprep.subr.mxu0 0.0
    %v1382 = vand.u32 %v621, 4294901760
    %1383 = vmatpush1.msra.mxu0 %v1382
    %1384 = vmatprep.subr.mxu0 0.0
    %v1385 = vand.u32 %v622, 4294901760
    %1386 = vmatpush1.msra.mxu0 %v1385
    %1387 = vmatprep.subr.mxu0 0.0
    %v1388 = vand.u32 %v623, 4294901760
    %1389 = vmatpush1.msra.mxu0 %v1388
    %1390 = vmatprep.subr.mxu0 0.0
    %1391 = vmatpush1.msra.mxu0 0.0
    %1392 = vmatprep.subr.mxu0 0.0
    %1393 = vmatpush1.msra.mxu0 0.0
    %1394 = vmatprep.subr.mxu0 0.0
    %1395 = vmatpush1.msra.mxu0 0.0
    %1396 = vmatprep.subr.mxu0 0.0
    %1397 = vmatpush1.msra.mxu0 0.0
    %1398 = vmatprep.subr.mxu0 0.0
    %1399 = vmatpush1.msra.mxu0 0.0
    %1400 = vmatprep.subr.mxu0 0.0
    %1401 = vmatpush1.msra.mxu0 0.0
    %1402 = vmatprep.subr.mxu0 0.0
    %1403 = vmatpush1.msra.mxu0 0.0
    %1404 = vmatprep.subr.mxu0 0.0
    %1405 = vmatpush1.msra.mxu0 0.0
    %1406 = vmatprep.subr.mxu0 0.0
    %1407 = vmatpush1.msra.mxu0 0.0
    %1408 = vmatprep.subr.mxu0 0.0
    %1409 = vmatpush1.msra.mxu0 0.0
    %1410 = vmatprep.subr.mxu0 0.0
    %1411 = vmatpush1.msra.mxu0 0.0
    %1412 = vmatprep.subr.mxu0 0.0
    %1413 = vmatpush1.msra.mxu0 0.0
    %1414 = vmatprep.subr.mxu0 0.0
    %1415 = vmatpush1.msra.mxu0 0.0
    %1416 = vmatprep.subr.mxu0 0.0
    %1417 = vmatpush1.msra.mxu0 0.0
    %1418 = vmatprep.subr.mxu0 0.0
    %1419 = vmatpush1.msra.mxu0 0.0
    %1420 = vmatprep.subr.mxu0 0.0
    %1421 = vmatpush1.msra.mxu0 0.0
    %1422 = vmatprep.subr.mxu0 0.0
    %1423 = vmatpush1.msra.mxu0 0.0
    %1424 = vmatprep.subr.mxu0 0.0
    %1425 = vmatpush1.msra.mxu0 0.0
    %1426 = vmatprep.subr.mxu0 0.0
    %1427 = vmatpush1.msra.mxu0 0.0
    %1428 = vmatprep.subr.mxu0 0.0
    %1429 = vmatpush1.msra.mxu0 0.0
    %1430 = vmatprep.subr.mxu0 0.0
    %1431 = vmatpush1.msra.mxu0 0.0
    %1432 = vmatprep.subr.mxu0 0.0
    %1433 = vmatpush1.msra.mxu0 0.0
    %1434 = vmatprep.subr.mxu0 0.0
    %1435 = vmatpush1.msra.mxu0 0.0
    %1436 = vmatprep.subr.mxu0 0.0
    %1437 = vmatpush1.msra.mxu0 0.0
    %1438 = vmatprep.mubr.f32.mxu0 0.0
    %v1439 = vand.u32 %v626, 4294901760
    %1440 = vmatmul.mubr.f32.gmra.mrb[0].mxu0 %v1439
    %v1441 = vpop.f32.mrb[0].mxu0
    %v1442 = vadd.f32 %v1321, %v1441
    %v1443 = vpop.f32.mrb[0].mxu0
    %1444 = vmatprep.mubr.f32.mxu0 0.0
    %v1445 = vand.u32 %v629, 4294901760
    %1446 = vmatmul.mubr.f32.gmra.mrb[0].mxu0 %v1445
    %v1447 = vpop.f32.mrb[0].mxu0
    %v1448 = vadd.f32 %v1327, %v1447
    %v1449 = vpop.f32.mrb[0].mxu0
    %1450 = vmatprep.mubr.f32.mxu0 0.0
    %v1451 = vand.u32 %v632, 4294901760
    %1452 = vmatmul.mubr.f32.gmra.mrb[0].mxu0 %v1451
    %v1453 = vpop.f32.mrb[0].mxu0
    %v1454 = vadd.f32 %v1333, %v1453
    %v1455 = vpop.f32.mrb[0].mxu0
    %1456 = vmatprep.mubr.f32.mxu0 0.0
    %v1457 = vand.u32 %v635, 4294901760
    %1458 = vmatmul.mubr.f32.gmra.mrb[0].mxu0 %v1457
    %v1459 = vpop.f32.mrb[0].mxu0
    %v1460 = vadd.f32 %v1339, %v1459
    %v1461 = vpop.f32.mrb[0].mxu0
    %1462 = vmatprep.mubr.f32.mxu0 0.0
    %v1463 = vand.u32 %v638, 4294901760
    %1464 = vmatmul.mubr.f32.gmra.mrb[0].mxu0 %v1463
    %v1465 = vpop.f32.mrb[0].mxu0
    %v1466 = vadd.f32 %v1345, %v1465
    %v1467 = vpop.f32.mrb[0].mxu0
    %1468 = vmatprep.mubr.f32.mxu0 0.0
    %v1469 = vand.u32 %v641, 4294901760
    %1470 = vmatmul.mubr.f32.gmra.mrb[0].mxu0 %v1469
    %v1471 = vpop.f32.mrb[0].mxu0
    %v1472 = vadd.f32 %v1351, %v1471
    %v1473 = vpop.f32.mrb[0].mxu0
    %1474 = vmatprep.mubr.f32.mxu0 0.0
    %v1475 = vand.u32 %v644, 4294901760
    %1476 = vmatmul.mubr.f32.gmra.mrb[0].mxu0 %v1475
    %v1477 = vpop.f32.mrb[0].mxu0
    %v1478 = vadd.f32 %v1357, %v1477
    %v1479 = vpop.f32.mrb[0].mxu0
    %1480 = vmatprep.mubr.f32.mxu0 0.0
    %v1481 = vand.u32 %v647, 4294901760
    %1482 = vmatmul.mubr.f32.gmra.mrb[0].mxu0 %v1481
    %v1483 = vpop.f32.mrb[0].mxu0
    %v1484 = vadd.f32 %v1363, %v1483
    %v1485 = vpop.f32.mrb[0].mxu0
    %1486 = vdwg.mxu0
    %v1487 = vld [vmem:[#allocation5] sm:$0xff]
    %v1488 = vld [vmem:[#allocation5 + $0x8] sm:$0xff]
    %v1489 = vld [vmem:[#allocation5 + $0x10] sm:$0xff]
    %v1490 = vld [vmem:[#allocation5 + $0x18] sm:$0xff]
    %v1491 = vld [vmem:[#allocation5 + $0x20] sm:$0xff]
    %v1492 = vld [vmem:[#allocation5 + $0x28] sm:$0xff]
    %v1493 = vld [vmem:[#allocation5 + $0x30] sm:$0xff]
    %v1494 = vld [vmem:[#allocation5 + $0x38] sm:$0xff]
    %v1495 = vld [vmem:[%s6] sm:$0x1]
    %v1497 = vlaneseq
    %v1498 = vshrl.u32 %v1497, 7
    %v1499 = vsub.s32 0, %v1498
    %v1500 = vrot.slane %v1495, %v1499
    %v1503 = vsel %vm624, %v119, 0
    %1505 = vmatprep.subr.mxu0 0.0
    %v1506 = vand.u32 %v1487, 4294901760
    %1507 = vmatpush1.msra.mxu0 %v1506
    %1508 = vmatprep.subr.mxu0 0.0
    %v1509 = vand.u32 %v1488, 4294901760
    %1510 = vmatpush1.msra.mxu0 %v1509
    %1511 = vmatprep.subr.mxu0 0.0
    %v1512 = vand.u32 %v1489, 4294901760
    %1513 = vmatpush1.msra.mxu0 %v1512
    %1514 = vmatprep.subr.mxu0 0.0
    %v1515 = vand.u32 %v1490, 4294901760
    %1516 = vmatpush1.msra.mxu0 %v1515
    %1517 = vmatprep.subr.mxu0 0.0
    %v1518 = vand.u32 %v1491, 4294901760
    %1519 = vmatpush1.msra.mxu0 %v1518
    %1520 = vmatprep.subr.mxu0 0.0
    %v1521 = vand.u32 %v1492, 4294901760
    %1522 = vmatpush1.msra.mxu0 %v1521
    %1523 = vmatprep.subr.mxu0 0.0
    %v1524 = vand.u32 %v1493, 4294901760
    %1525 = vmatpush1.msra.mxu0 %v1524
    %1526 = vmatprep.subr.mxu0 0.0
    %v1527 = vand.u32 %v1494, 4294901760
    %1528 = vmatpush1.msra.mxu0 %v1527
    %1529 = vmatprep.subr.mxu0 0.0
    %1530 = vmatpush1.msra.mxu0 0.0
    %1531 = vmatprep.subr.mxu0 0.0
    %1532 = vmatpush1.msra.mxu0 0.0
    %1533 = vmatprep.subr.mxu0 0.0
    %1534 = vmatpush1.msra.mxu0 0.0
    %1535 = vmatprep.subr.mxu0 0.0
    %1536 = vmatpush1.msra.mxu0 0.0
    %1537 = vmatprep.subr.mxu0 0.0
    %1538 = vmatpush1.msra.mxu0 0.0
    %1539 = vmatprep.subr.mxu0 0.0
    %1540 = vmatpush1.msra.mxu0 0.0
    %1541 = vmatprep.subr.mxu0 0.0
    %1542 = vmatpush1.msra.mxu0 0.0
    %1543 = vmatprep.subr.mxu0 0.0
    %1544 = vmatpush1.msra.mxu0 0.0
    %1545 = vmatprep.subr.mxu0 0.0
    %1546 = vmatpush1.msra.mxu0 0.0
    %1547 = vmatprep.subr.mxu0 0.0
    %1548 = vmatpush1.msra.mxu0 0.0
    %1549 = vmatprep.subr.mxu0 0.0
    %1550 = vmatpush1.msra.mxu0 0.0
    %1551 = vmatprep.subr.mxu0 0.0
    %1552 = vmatpush1.msra.mxu0 0.0
    %1553 = vmatprep.subr.mxu0 0.0
    %1554 = vmatpush1.msra.mxu0 0.0
    %1555 = vmatprep.subr.mxu0 0.0
    %1556 = vmatpush1.msra.mxu0 0.0
    %1557 = vmatprep.subr.mxu0 0.0
    %1558 = vmatpush1.msra.mxu0 0.0
    %1559 = vmatprep.subr.mxu0 0.0
    %1560 = vmatpush1.msra.mxu0 0.0
    %1561 = vmatprep.subr.mxu0 0.0
    %1562 = vmatpush1.msra.mxu0 0.0
    %1563 = vmatprep.subr.mxu0 0.0
    %1564 = vmatpush1.msra.mxu0 0.0
    %1565 = vmatprep.subr.mxu0 0.0
    %1566 = vmatpush1.msra.mxu0 0.0
    %1567 = vmatprep.subr.mxu0 0.0
    %1568 = vmatpush1.msra.mxu0 0.0
    %1569 = vmatprep.subr.mxu0 0.0
    %1570 = vmatpush1.msra.mxu0 0.0
    %1571 = vmatprep.subr.mxu0 0.0
    %1572 = vmatpush1.msra.mxu0 0.0
    %1573 = vmatprep.subr.mxu0 0.0
    %1574 = vmatpush1.msra.mxu0 0.0
    %1575 = vmatprep.subr.mxu0 0.0
    %1576 = vmatpush1.msra.mxu0 0.0
    %1577 = vmatprep.mubr.f32.mxu0 0.0
    %v1578 = vand.u32 %v1503, 4294901760
    %v1579 = vsub.f32 %v1503, %v1578
    %v1580 = vand.u32 %v1579, 4294901760
    %v1581 = vsub.f32 %v1579, %v1580
    %v1582 = vand.u32 %v1581, 4294901760
    %1583 = vmatmul.mubr.f32.gmra.mrb[0].mxu0 %v1582
    %v1584 = vpop.f32.mrb[0].mxu0
    %v1585 = vadd.f32 %v1500, %v1584
    %v1586 = vpop.f32.mrb[0].mxu0
    %1587 = vdwg.mxu0
    %1588 = vmatprep.subr.mxu0 0.0
    %v1589 = vand.u32 %v1487, 4294901760
    %v1590 = vsub.f32 %v1487, %v1589
    %v1591 = vand.u32 %v1590, 4294901760
    %v1592 = vsub.f32 %v1590, %v1591
    %v1593 = vand.u32 %v1592, 4294901760
    %1594 = vmatpush1.msra.mxu0 %v1593
    %1595 = vmatprep.subr.mxu0 0.0
    %v1596 = vand.u32 %v1488, 4294901760
    %v1597 = vsub.f32 %v1488, %v1596
    %v1598 = vand.u32 %v1597, 4294901760
    %v1599 = vsub.f32 %v1597, %v1598
    %v1600 = vand.u32 %v1599, 4294901760
    %1601 = vmatpush1.msra.mxu0 %v1600
    %1602 = vmatprep.subr.mxu0 0.0
    %v1603 = vand.u32 %v1489, 4294901760
    %v1604 = vsub.f32 %v1489, %v1603
    %v1605 = vand.u32 %v1604, 4294901760
    %v1606 = vsub.f32 %v1604, %v1605
    %v1607 = vand.u32 %v1606, 4294901760
    %1608 = vmatpush1.msra.mxu0 %v1607
    %1609 = vmatprep.subr.mxu0 0.0
    %v1610 = vand.u32 %v1490, 4294901760
    %v1611 = vsub.f32 %v1490, %v1610
    %v1612 = vand.u32 %v1611, 4294901760
    %v1613 = vsub.f32 %v1611, %v1612
    %v1614 = vand.u32 %v1613, 4294901760
    %1615 = vmatpush1.msra.mxu0 %v1614
    %1616 = vmatprep.subr.mxu0 0.0
    %v1617 = vand.u32 %v1491, 4294901760
    %v1618 = vsub.f32 %v1491, %v1617
    %v1619 = vand.u32 %v1618, 4294901760
    %v1620 = vsub.f32 %v1618, %v1619
    %v1621 = vand.u32 %v1620, 4294901760
    %1622 = vmatpush1.msra.mxu0 %v1621
    %1623 = vmatprep.subr.mxu0 0.0
    %v1624 = vand.u32 %v1492, 4294901760
    %v1625 = vsub.f32 %v1492, %v1624
    %v1626 = vand.u32 %v1625, 4294901760
    %v1627 = vsub.f32 %v1625, %v1626
    %v1628 = vand.u32 %v1627, 4294901760
    %1629 = vmatpush1.msra.mxu0 %v1628
    %1630 = vmatprep.subr.mxu0 0.0
    %v1631 = vand.u32 %v1493, 4294901760
    %v1632 = vsub.f32 %v1493, %v1631
    %v1633 = vand.u32 %v1632, 4294901760
    %v1634 = vsub.f32 %v1632, %v1633
    %v1635 = vand.u32 %v1634, 4294901760
    %1636 = vmatpush1.msra.mxu0 %v1635
    %1637 = vmatprep.subr.mxu0 0.0
    %v1638 = vand.u32 %v1494, 4294901760
    %v1639 = vsub.f32 %v1494, %v1638
    %v1640 = vand.u32 %v1639, 4294901760
    %v1641 = vsub.f32 %v1639, %v1640
    %v1642 = vand.u32 %v1641, 4294901760
    %1643 = vmatpush1.msra.mxu0 %v1642
    %1644 = vmatprep.subr.mxu0 0.0
    %1645 = vmatpush1.msra.mxu0 0.0
    %1646 = vmatprep.subr.mxu0 0.0
    %1647 = vmatpush1.msra.mxu0 0.0
    %1648 = vmatprep.subr.mxu0 0.0
    %1649 = vmatpush1.msra.mxu0 0.0
    %1650 = vmatprep.subr.mxu0 0.0
    %1651 = vmatpush1.msra.mxu0 0.0
    %1652 = vmatprep.subr.mxu0 0.0
    %1653 = vmatpush1.msra.mxu0 0.0
    %1654 = vmatprep.subr.mxu0 0.0
    %1655 = vmatpush1.msra.mxu0 0.0
    %1656 = vmatprep.subr.mxu0 0.0
    %1657 = vmatpush1.msra.mxu0 0.0
    %1658 = vmatprep.subr.mxu0 0.0
    %1659 = vmatpush1.msra.mxu0 0.0
    %1660 = vmatprep.subr.mxu0 0.0
    %1661 = vmatpush1.msra.mxu0 0.0
    %1662 = vmatprep.subr.mxu0 0.0
    %1663 = vmatpush1.msra.mxu0 0.0
    %1664 = vmatprep.subr.mxu0 0.0
    %1665 = vmatpush1.msra.mxu0 0.0
    %1666 = vmatprep.subr.mxu0 0.0
    %1667 = vmatpush1.msra.mxu0 0.0
    %1668 = vmatprep.subr.mxu0 0.0
    %1669 = vmatpush1.msra.mxu0 0.0
    %1670 = vmatprep.subr.mxu0 0.0
    %1671 = vmatpush1.msra.mxu0 0.0
    %1672 = vmatprep.subr.mxu0 0.0
    %1673 = vmatpush1.msra.mxu0 0.0
    %1674 = vmatprep.subr.mxu0 0.0
    %1675 = vmatpush1.msra.mxu0 0.0
    %1676 = vmatprep.subr.mxu0 0.0
    %1677 = vmatpush1.msra.mxu0 0.0
    %1678 = vmatprep.subr.mxu0 0.0
    %1679 = vmatpush1.msra.mxu0 0.0
    %1680 = vmatprep.subr.mxu0 0.0
    %1681 = vmatpush1.msra.mxu0 0.0
    %1682 = vmatprep.subr.mxu0 0.0
    %1683 = vmatpush1.msra.mxu0 0.0
    %1684 = vmatprep.subr.mxu0 0.0
    %1685 = vmatpush1.msra.mxu0 0.0
    %1686 = vmatprep.subr.mxu0 0.0
    %1687 = vmatpush1.msra.mxu0 0.0
    %1688 = vmatprep.subr.mxu0 0.0
    %1689 = vmatpush1.msra.mxu0 0.0
    %1690 = vmatprep.subr.mxu0 0.0
    %1691 = vmatpush1.msra.mxu0 0.0
    %1692 = vmatprep.mubr.f32.mxu0 0.0
    %v1693 = vand.u32 %v1503, 4294901760
    %1694 = vmatmul.mubr.f32.gmra.mrb[0].mxu0 %v1693
    %v1695 = vpop.f32.mrb[0].mxu0
    %v1696 = vadd.f32 %v1585, %v1695
    %v1697 = vpop.f32.mrb[0].mxu0
    %1698 = vdwg.mxu0
    %1699 = vmatprep.subr.mxu0 0.0
    %v1700 = vand.u32 %v1487, 4294901760
    %v1701 = vsub.f32 %v1487, %v1700
    %1702 = vmatpush1.msra.mxu0 %v1701
    %1703 = vmatprep.subr.mxu0 0.0
    %v1704 = vand.u32 %v1488, 4294901760
    %v1705 = vsub.f32 %v1488, %v1704
    %1706 = vmatpush1.msra.mxu0 %v1705
    %1707 = vmatprep.subr.mxu0 0.0
    %v1708 = vand.u32 %v1489, 4294901760
    %v1709 = vsub.f32 %v1489, %v1708
    %1710 = vmatpush1.msra.mxu0 %v1709
    %1711 = vmatprep.subr.mxu0 0.0
    %v1712 = vand.u32 %v1490, 4294901760
    %v1713 = vsub.f32 %v1490, %v1712
    %1714 = vmatpush1.msra.mxu0 %v1713
    %1715 = vmatprep.subr.mxu0 0.0
    %v1716 = vand.u32 %v1491, 4294901760
    %v1717 = vsub.f32 %v1491, %v1716
    %1718 = vmatpush1.msra.mxu0 %v1717
    %1719 = vmatprep.subr.mxu0 0.0
    %v1720 = vand.u32 %v1492, 4294901760
    %v1721 = vsub.f32 %v1492, %v1720
    %1722 = vmatpush1.msra.mxu0 %v1721
    %1723 = vmatprep.subr.mxu0 0.0
    %v1724 = vand.u32 %v1493, 4294901760
    %v1725 = vsub.f32 %v1493, %v1724
    %1726 = vmatpush1.msra.mxu0 %v1725
    %1727 = vmatprep.subr.mxu0 0.0
    %v1728 = vand.u32 %v1494, 4294901760
    %v1729 = vsub.f32 %v1494, %v1728
    %1730 = vmatpush1.msra.mxu0 %v1729
    %1731 = vmatprep.subr.mxu0 0.0
    %1732 = vmatpush1.msra.mxu0 0.0
    %1733 = vmatprep.subr.mxu0 0.0
    %1734 = vmatpush1.msra.mxu0 0.0
    %1735 = vmatprep.subr.mxu0 0.0
    %1736 = vmatpush1.msra.mxu0 0.0
    %1737 = vmatprep.subr.mxu0 0.0
    %1738 = vmatpush1.msra.mxu0 0.0
    %1739 = vmatprep.subr.mxu0 0.0
    %1740 = vmatpush1.msra.mxu0 0.0
    %1741 = vmatprep.subr.mxu0 0.0
    %1742 = vmatpush1.msra.mxu0 0.0
    %1743 = vmatprep.subr.mxu0 0.0
    %1744 = vmatpush1.msra.mxu0 0.0
    %1745 = vmatprep.subr.mxu0 0.0
    %1746 = vmatpush1.msra.mxu0 0.0
    %1747 = vmatprep.subr.mxu0 0.0
    %1748 = vmatpush1.msra.mxu0 0.0
    %1749 = vmatprep.subr.mxu0 0.0
    %1750 = vmatpush1.msra.mxu0 0.0
    %1751 = vmatprep.subr.mxu0 0.0
    %1752 = vmatpush1.msra.mxu0 0.0
    %1753 = vmatprep.subr.mxu0 0.0
    %1754 = vmatpush1.msra.mxu0 0.0
    %1755 = vmatprep.subr.mxu0 0.0
    %1756 = vmatpush1.msra.mxu0 0.0
    %1757 = vmatprep.subr.mxu0 0.0
    %1758 = vmatpush1.msra.mxu0 0.0
    %1759 = vmatprep.subr.mxu0 0.0
    %1760 = vmatpush1.msra.mxu0 0.0
    %1761 = vmatprep.subr.mxu0 0.0
    %1762 = vmatpush1.msra.mxu0 0.0
    %1763 = vmatprep.subr.mxu0 0.0
    %1764 = vmatpush1.msra.mxu0 0.0
    %1765 = vmatprep.subr.mxu0 0.0
    %1766 = vmatpush1.msra.mxu0 0.0
    %1767 = vmatprep.subr.mxu0 0.0
    %1768 = vmatpush1.msra.mxu0 0.0
    %1769 = vmatprep.subr.mxu0 0.0
    %1770 = vmatpush1.msra.mxu0 0.0
    %1771 = vmatprep.subr.mxu0 0.0
    %1772 = vmatpush1.msra.mxu0 0.0
    %1773 = vmatprep.subr.mxu0 0.0
    %1774 = vmatpush1.msra.mxu0 0.0
    %1775 = vmatprep.subr.mxu0 0.0
    %1776 = vmatpush1.msra.mxu0 0.0
    %1777 = vmatprep.subr.mxu0 0.0
    %1778 = vmatpush1.msra.mxu0 0.0
    %1779 = vmatprep.mubr.f32.mxu0 0.0
    %v1780 = vand.u32 %v1503, 4294901760
    %v1781 = vsub.f32 %v1503, %v1780
    %1782 = vmatmul.mubr.f32.gmra.mrb[0].mxu0 %v1781
    %v1783 = vpop.f32.mrb[0].mxu0
    %v1784 = vadd.f32 %v1696, %v1783
    %v1785 = vpop.f32.mrb[0].mxu0
    %1786 = vdwg.mxu0
    %1787 = vmatprep.subr.mxu0 0.0
    %v1788 = vand.u32 %v1487, 4294901760
    %1789 = vmatpush1.msra.mxu0 %v1788
    %1790 = vmatprep.subr.mxu0 0.0
    %v1791 = vand.u32 %v1488, 4294901760
    %1792 = vmatpush1.msra.mxu0 %v1791
    %1793 = vmatprep.subr.mxu0 0.0
    %v1794 = vand.u32 %v1489, 4294901760
    %1795 = vmatpush1.msra.mxu0 %v1794
    %1796 = vmatprep.subr.mxu0 0.0
    %v1797 = vand.u32 %v1490, 4294901760
    %1798 = vmatpush1.msra.mxu0 %v1797
    %1799 = vmatprep.subr.mxu0 0.0
    %v1800 = vand.u32 %v1491, 4294901760
    %1801 = vmatpush1.msra.mxu0 %v1800
    %1802 = vmatprep.subr.mxu0 0.0
    %v1803 = vand.u32 %v1492, 4294901760
    %1804 = vmatpush1.msra.mxu0 %v1803
    %1805 = vmatprep.subr.mxu0 0.0
    %v1806 = vand.u32 %v1493, 4294901760
    %1807 = vmatpush1.msra.mxu0 %v1806
    %1808 = vmatprep.subr.mxu0 0.0
    %v1809 = vand.u32 %v1494, 4294901760
    %1810 = vmatpush1.msra.mxu0 %v1809
    %1811 = vmatprep.subr.mxu0 0.0
    %1812 = vmatpush1.msra.mxu0 0.0
    %1813 = vmatprep.subr.mxu0 0.0
    %1814 = vmatpush1.msra.mxu0 0.0
    %1815 = vmatprep.subr.mxu0 0.0
    %1816 = vmatpush1.msra.mxu0 0.0
    %1817 = vmatprep.subr.mxu0 0.0
    %1818 = vmatpush1.msra.mxu0 0.0
    %1819 = vmatprep.subr.mxu0 0.0
    %1820 = vmatpush1.msra.mxu0 0.0
    %1821 = vmatprep.subr.mxu0 0.0
    %1822 = vmatpush1.msra.mxu0 0.0
    %1823 = vmatprep.subr.mxu0 0.0
    %1824 = vmatpush1.msra.mxu0 0.0
    %1825 = vmatprep.subr.mxu0 0.0
    %1826 = vmatpush1.msra.mxu0 0.0
    %1827 = vmatprep.subr.mxu0 0.0
    %1828 = vmatpush1.msra.mxu0 0.0
    %1829 = vmatprep.subr.mxu0 0.0
    %1830 = vmatpush1.msra.mxu0 0.0
    %1831 = vmatprep.subr.mxu0 0.0
    %1832 = vmatpush1.msra.mxu0 0.0
    %1833 = vmatprep.subr.mxu0 0.0
    %1834 = vmatpush1.msra.mxu0 0.0
    %1835 = vmatprep.subr.mxu0 0.0
    %1836 = vmatpush1.msra.mxu0 0.0
    %1837 = vmatprep.subr.mxu0 0.0
    %1838 = vmatpush1.msra.mxu0 0.0
    %1839 = vmatprep.subr.mxu0 0.0
    %1840 = vmatpush1.msra.mxu0 0.0
    %1841 = vmatprep.subr.mxu0 0.0
    %1842 = vmatpush1.msra.mxu0 0.0
    %1843 = vmatprep.subr.mxu0 0.0
    %1844 = vmatpush1.msra.mxu0 0.0
    %1845 = vmatprep.subr.mxu0 0.0
    %1846 = vmatpush1.msra.mxu0 0.0
    %1847 = vmatprep.subr.mxu0 0.0
    %1848 = vmatpush1.msra.mxu0 0.0
    %1849 = vmatprep.subr.mxu0 0.0
    %1850 = vmatpush1.msra.mxu0 0.0
    %1851 = vmatprep.subr.mxu0 0.0
    %1852 = vmatpush1.msra.mxu0 0.0
    %1853 = vmatprep.subr.mxu0 0.0
    %1854 = vmatpush1.msra.mxu0 0.0
    %1855 = vmatprep.subr.mxu0 0.0
    %1856 = vmatpush1.msra.mxu0 0.0
    %1857 = vmatprep.subr.mxu0 0.0
    %1858 = vmatpush1.msra.mxu0 0.0
    %1859 = vmatprep.mubr.f32.mxu0 0.0
    %v1860 = vand.u32 %v1503, 4294901760
    %v1861 = vsub.f32 %v1503, %v1860
    %v1862 = vand.u32 %v1861, 4294901760
    %1863 = vmatmul.mubr.f32.gmra.mrb[0].mxu0 %v1862
    %v1864 = vpop.f32.mrb[0].mxu0
    %v1865 = vadd.f32 %v1784, %v1864
    %v1866 = vpop.f32.mrb[0].mxu0
    %1867 = vdwg.mxu0
    %1868 = vmatprep.subr.mxu0 0.0
    %v1869 = vand.u32 %v1487, 4294901760
    %v1870 = vsub.f32 %v1487, %v1869
    %v1871 = vand.u32 %v1870, 4294901760
    %1872 = vmatpush1.msra.mxu0 %v1871
    %1873 = vmatprep.subr.mxu0 0.0
    %v1874 = vand.u32 %v1488, 4294901760
    %v1875 = vsub.f32 %v1488, %v1874
    %v1876 = vand.u32 %v1875, 4294901760
    %1877 = vmatpush1.msra.mxu0 %v1876
    %1878 = vmatprep.subr.mxu0 0.0
    %v1879 = vand.u32 %v1489, 4294901760
    %v1880 = vsub.f32 %v1489, %v1879
    %v1881 = vand.u32 %v1880, 4294901760
    %1882 = vmatpush1.msra.mxu0 %v1881
    %1883 = vmatprep.subr.mxu0 0.0
    %v1884 = vand.u32 %v1490, 4294901760
    %v1885 = vsub.f32 %v1490, %v1884
    %v1886 = vand.u32 %v1885, 4294901760
    %1887 = vmatpush1.msra.mxu0 %v1886
    %1888 = vmatprep.subr.mxu0 0.0
    %v1889 = vand.u32 %v1491, 4294901760
    %v1890 = vsub.f32 %v1491, %v1889
    %v1891 = vand.u32 %v1890, 4294901760
    %1892 = vmatpush1.msra.mxu0 %v1891
    %1893 = vmatprep.subr.mxu0 0.0
    %v1894 = vand.u32 %v1492, 4294901760
    %v1895 = vsub.f32 %v1492, %v1894
    %v1896 = vand.u32 %v1895, 4294901760
    %1897 = vmatpush1.msra.mxu0 %v1896
    %1898 = vmatprep.subr.mxu0 0.0
    %v1899 = vand.u32 %v1493, 4294901760
    %v1900 = vsub.f32 %v1493, %v1899
    %v1901 = vand.u32 %v1900, 4294901760
    %1902 = vmatpush1.msra.mxu0 %v1901
    %1903 = vmatprep.subr.mxu0 0.0
    %v1904 = vand.u32 %v1494, 4294901760
    %v1905 = vsub.f32 %v1494, %v1904
    %v1906 = vand.u32 %v1905, 4294901760
    %1907 = vmatpush1.msra.mxu0 %v1906
    %1908 = vmatprep.subr.mxu0 0.0
    %1909 = vmatpush1.msra.mxu0 0.0
    %1910 = vmatprep.subr.mxu0 0.0
    %1911 = vmatpush1.msra.mxu0 0.0
    %1912 = vmatprep.subr.mxu0 0.0
    %1913 = vmatpush1.msra.mxu0 0.0
    %1914 = vmatprep.subr.mxu0 0.0
    %1915 = vmatpush1.msra.mxu0 0.0
    %1916 = vmatprep.subr.mxu0 0.0
    %1917 = vmatpush1.msra.mxu0 0.0
    %1918 = vmatprep.subr.mxu0 0.0
    %1919 = vmatpush1.msra.mxu0 0.0
    %1920 = vmatprep.subr.mxu0 0.0
    %1921 = vmatpush1.msra.mxu0 0.0
    %1922 = vmatprep.subr.mxu0 0.0
    %1923 = vmatpush1.msra.mxu0 0.0
    %1924 = vmatprep.subr.mxu0 0.0
    %1925 = vmatpush1.msra.mxu0 0.0
    %1926 = vmatprep.subr.mxu0 0.0
    %1927 = vmatpush1.msra.mxu0 0.0
    %1928 = vmatprep.subr.mxu0 0.0
    %1929 = vmatpush1.msra.mxu0 0.0
    %1930 = vmatprep.subr.mxu0 0.0
    %1931 = vmatpush1.msra.mxu0 0.0
    %1932 = vmatprep.subr.mxu0 0.0
    %1933 = vmatpush1.msra.mxu0 0.0
    %1934 = vmatprep.subr.mxu0 0.0
    %1935 = vmatpush1.msra.mxu0 0.0
    %1936 = vmatprep.subr.mxu0 0.0
    %1937 = vmatpush1.msra.mxu0 0.0
    %1938 = vmatprep.subr.mxu0 0.0
    %1939 = vmatpush1.msra.mxu0 0.0
    %1940 = vmatprep.subr.mxu0 0.0
    %1941 = vmatpush1.msra.mxu0 0.0
    %1942 = vmatprep.subr.mxu0 0.0
    %1943 = vmatpush1.msra.mxu0 0.0
    %1944 = vmatprep.subr.mxu0 0.0
    %1945 = vmatpush1.msra.mxu0 0.0
    %1946 = vmatprep.subr.mxu0 0.0
    %1947 = vmatpush1.msra.mxu0 0.0
    %1948 = vmatprep.subr.mxu0 0.0
    %1949 = vmatpush1.msra.mxu0 0.0
    %1950 = vmatprep.subr.mxu0 0.0
    %1951 = vmatpush1.msra.mxu0 0.0
    %1952 = vmatprep.subr.mxu0 0.0
    %1953 = vmatpush1.msra.mxu0 0.0
    %1954 = vmatprep.subr.mxu0 0.0
    %1955 = vmatpush1.msra.mxu0 0.0
    %1956 = vmatprep.mubr.f32.mxu0 0.0
    %v1957 = vand.u32 %v1503, 4294901760
    %1958 = vmatmul.mubr.f32.gmra.mrb[0].mxu0 %v1957
    %v1959 = vpop.f32.mrb[0].mxu0
    %v1960 = vadd.f32 %v1865, %v1959
    %v1961 = vpop.f32.mrb[0].mxu0
    %1962 = vdwg.mxu0
    %1963 = vmatprep.subr.mxu0 0.0
    %v1964 = vand.u32 %v1487, 4294901760
    %1965 = vmatpush1.msra.mxu0 %v1964
    %1966 = vmatprep.subr.mxu0 0.0
    %v1967 = vand.u32 %v1488, 4294901760
    %1968 = vmatpush1.msra.mxu0 %v1967
    %1969 = vmatprep.subr.mxu0 0.0
    %v1970 = vand.u32 %v1489, 4294901760
    %1971 = vmatpush1.msra.mxu0 %v1970
    %1972 = vmatprep.subr.mxu0 0.0
    %v1973 = vand.u32 %v1490, 4294901760
    %1974 = vmatpush1.msra.mxu0 %v1973
    %1975 = vmatprep.subr.mxu0 0.0
    %v1976 = vand.u32 %v1491, 4294901760
    %1977 = vmatpush1.msra.mxu0 %v1976
    %1978 = vmatprep.subr.mxu0 0.0
    %v1979 = vand.u32 %v1492, 4294901760
    %1980 = vmatpush1.msra.mxu0 %v1979
    %1981 = vmatprep.subr.mxu0 0.0
    %v1982 = vand.u32 %v1493, 4294901760
    %1983 = vmatpush1.msra.mxu0 %v1982
    %1984 = vmatprep.subr.mxu0 0.0
    %v1985 = vand.u32 %v1494, 4294901760
    %1986 = vmatpush1.msra.mxu0 %v1985
    %1987 = vmatprep.subr.mxu0 0.0
    %1988 = vmatpush1.msra.mxu0 0.0
    %1989 = vmatprep.subr.mxu0 0.0
    %1990 = vmatpush1.msra.mxu0 0.0
    %1991 = vmatprep.subr.mxu0 0.0
    %1992 = vmatpush1.msra.mxu0 0.0
    %1993 = vmatprep.subr.mxu0 0.0
    %1994 = vmatpush1.msra.mxu0 0.0
    %1995 = vmatprep.subr.mxu0 0.0
    %1996 = vmatpush1.msra.mxu0 0.0
    %1997 = vmatprep.subr.mxu0 0.0
    %1998 = vmatpush1.msra.mxu0 0.0
    %1999 = vmatprep.subr.mxu0 0.0
    %2000 = vmatpush1.msra.mxu0 0.0
    %2001 = vmatprep.subr.mxu0 0.0
    %2002 = vmatpush1.msra.mxu0 0.0
    %2003 = vmatprep.subr.mxu0 0.0
    %2004 = vmatpush1.msra.mxu0 0.0
    %2005 = vmatprep.subr.mxu0 0.0
    %2006 = vmatpush1.msra.mxu0 0.0
    %2007 = vmatprep.subr.mxu0 0.0
    %2008 = vmatpush1.msra.mxu0 0.0
    %2009 = vmatprep.subr.mxu0 0.0
    %2010 = vmatpush1.msra.mxu0 0.0
    %2011 = vmatprep.subr.mxu0 0.0
    %2012 = vmatpush1.msra.mxu0 0.0
    %2013 = vmatprep.subr.mxu0 0.0
    %2014 = vmatpush1.msra.mxu0 0.0
    %2015 = vmatprep.subr.mxu0 0.0
    %2016 = vmatpush1.msra.mxu0 0.0
    %2017 = vmatprep.subr.mxu0 0.0
    %2018 = vmatpush1.msra.mxu0 0.0
    %2019 = vmatprep.subr.mxu0 0.0
    %2020 = vmatpush1.msra.mxu0 0.0
    %2021 = vmatprep.subr.mxu0 0.0
    %2022 = vmatpush1.msra.mxu0 0.0
    %2023 = vmatprep.subr.mxu0 0.0
    %2024 = vmatpush1.msra.mxu0 0.0
    %2025 = vmatprep.subr.mxu0 0.0
    %2026 = vmatpush1.msra.mxu0 0.0
    %2027 = vmatprep.subr.mxu0 0.0
    %2028 = vmatpush1.msra.mxu0 0.0
    %2029 = vmatprep.subr.mxu0 0.0
    %2030 = vmatpush1.msra.mxu0 0.0
    %2031 = vmatprep.subr.mxu0 0.0
    %2032 = vmatpush1.msra.mxu0 0.0
    %2033 = vmatprep.subr.mxu0 0.0
    %2034 = vmatpush1.msra.mxu0 0.0
    %2035 = vmatprep.mubr.f32.mxu0 0.0
    %v2036 = vand.u32 %v1503, 4294901760
    %2037 = vmatmul.mubr.f32.gmra.mrb[0].mxu0 %v2036
    %v2038 = vpop.f32.mrb[0].mxu0
    %v2039 = vadd.f32 %v1960, %v2038
    %v2040 = vpop.f32.mrb[0].mxu0
    %2041 = vdwg.mxu0
    %v2042 = vadd.f32 %v1442, %v2039
    %v2043 = vadd.f32 %v1448, %v2039
    %v2044 = vadd.f32 %v1454, %v2039
    %v2045 = vadd.f32 %v1460, %v2039
    %v2046 = vadd.f32 %v1466, %v2039
    %v2047 = vadd.f32 %v1472, %v2039
    %v2048 = vadd.f32 %v1478, %v2039
    %v2049 = vadd.f32 %v1484, %v2039
    %v2050 = vtanh.pop %v2042
    %v2051 = vtanh.pop %v2043
    %v2052 = vtanh.pop %v2044
    %v2053 = vtanh.pop %v2045
    %v2054 = vtanh.pop %v2046
    %v2055 = vtanh.pop %v2047
    %v2056 = vtanh.pop %v2048
    %v2057 = vtanh.pop %v2049
    %v2058 = vld [vmem:[%s7] sm:$0xff]
    %v2059 = vld [vmem:[%s7 + $0x8] sm:$0xff]
    %v2060 = vld [vmem:[%s7 + $0x10] sm:$0xff]
    %v2061 = vld [vmem:[%s7 + $0x18] sm:$0xff]
    %v2062 = vld [vmem:[%s7 + $0x20] sm:$0xff]
    %v2063 = vld [vmem:[%s7 + $0x28] sm:$0xff]
    %v2064 = vld [vmem:[%s7 + $0x30] sm:$0xff]
    %v2065 = vld [vmem:[%s7 + $0x38] sm:$0xff]
    %v2067 = vsel %vm624, %v2050, 0
    %v2070 = vsel %vm624, %v2051, 0
    %v2073 = vsel %vm624, %v2052, 0
    %v2076 = vsel %vm624, %v2053, 0
    %v2079 = vsel %vm624, %v2054, 0
    %v2082 = vsel %vm624, %v2055, 0
    %v2085 = vsel %vm624, %v2056, 0
    %v2088 = vsel %vm624, %v2057, 0
    %2090 = vmatprep.subr.mxu0 0.0
    %v2091 = vand.u32 %v2058, 4294901760
    %2092 = vmatpush1.msra.mxu0 %v2091
    %2093 = vmatprep.subr.mxu0 0.0
    %v2094 = vand.u32 %v2059, 4294901760
    %2095 = vmatpush1.msra.mxu0 %v2094
    %2096 = vmatprep.subr.mxu0 0.0
    %v2097 = vand.u32 %v2060, 4294901760
    %2098 = vmatpush1.msra.mxu0 %v2097
    %2099 = vmatprep.subr.mxu0 0.0
    %v2100 = vand.u32 %v2061, 4294901760
    %2101 = vmatpush1.msra.mxu0 %v2100
    %2102 = vmatprep.subr.mxu0 0.0
    %v2103 = vand.u32 %v2062, 4294901760
    %2104 = vmatpush1.msra.mxu0 %v2103
    %2105 = vmatprep.subr.mxu0 0.0
    %v2106 = vand.u32 %v2063, 4294901760
    %2107 = vmatpush1.msra.mxu0 %v2106
    %2108 = vmatprep.subr.mxu0 0.0
    %v2109 = vand.u32 %v2064, 4294901760
    %2110 = vmatpush1.msra.mxu0 %v2109
    %2111 = vmatprep.subr.mxu0 0.0
    %v2112 = vand.u32 %v2065, 4294901760
    %2113 = vmatpush1.msra.mxu0 %v2112
    %2114 = vmatprep.subr.mxu0 0.0
    %2115 = vmatpush1.msra.mxu0 0.0
    %2116 = vmatprep.subr.mxu0 0.0
    %2117 = vmatpush1.msra.mxu0 0.0
    %2118 = vmatprep.subr.mxu0 0.0
    %2119 = vmatpush1.msra.mxu0 0.0
    %2120 = vmatprep.subr.mxu0 0.0
    %2121 = vmatpush1.msra.mxu0 0.0
    %2122 = vmatprep.subr.mxu0 0.0
    %2123 = vmatpush1.msra.mxu0 0.0
    %2124 = vmatprep.subr.mxu0 0.0
    %2125 = vmatpush1.msra.mxu0 0.0
    %2126 = vmatprep.subr.mxu0 0.0
    %2127 = vmatpush1.msra.mxu0 0.0
    %2128 = vmatprep.subr.mxu0 0.0
    %2129 = vmatpush1.msra.mxu0 0.0
    %2130 = vmatprep.subr.mxu0 0.0
    %2131 = vmatpush1.msra.mxu0 0.0
    %2132 = vmatprep.subr.mxu0 0.0
    %2133 = vmatpush1.msra.mxu0 0.0
    %2134 = vmatprep.subr.mxu0 0.0
    %2135 = vmatpush1.msra.mxu0 0.0
    %2136 = vmatprep.subr.mxu0 0.0
    %2137 = vmatpush1.msra.mxu0 0.0
    %2138 = vmatprep.subr.mxu0 0.0
    %2139 = vmatpush1.msra.mxu0 0.0
    %2140 = vmatprep.subr.mxu0 0.0
    %2141 = vmatpush1.msra.mxu0 0.0
    %2142 = vmatprep.subr.mxu0 0.0
    %2143 = vmatpush1.msra.mxu0 0.0
    %2144 = vmatprep.subr.mxu0 0.0
    %2145 = vmatpush1.msra.mxu0 0.0
    %2146 = vmatprep.subr.mxu0 0.0
    %2147 = vmatpush1.msra.mxu0 0.0
    %2148 = vmatprep.subr.mxu0 0.0
    %2149 = vmatpush1.msra.mxu0 0.0
    %2150 = vmatprep.subr.mxu0 0.0
    %2151 = vmatpush1.msra.mxu0 0.0
    %2152 = vmatprep.subr.mxu0 0.0
    %2153 = vmatpush1.msra.mxu0 0.0
    %2154 = vmatprep.subr.mxu0 0.0
    %2155 = vmatpush1.msra.mxu0 0.0
    %2156 = vmatprep.subr.mxu0 0.0
    %2157 = vmatpush1.msra.mxu0 0.0
    %2158 = vmatprep.subr.mxu0 0.0
    %2159 = vmatpush1.msra.mxu0 0.0
    %2160 = vmatprep.subr.mxu0 0.0
    %2161 = vmatpush1.msra.mxu0 0.0
    %2162 = vmatprep.mubr.f32.mxu0 0.0
    %v2163 = vand.u32 %v2067, 4294901760
    %v2164 = vsub.f32 %v2067, %v2163
    %v2165 = vand.u32 %v2164, 4294901760
    %v2166 = vsub.f32 %v2164, %v2165
    %v2167 = vand.u32 %v2166, 4294901760
    %2168 = vmatmul.mubr.f32.gmra.mrb[0].mxu0 %v2167
    %v2169 = vpop.f32.mrb[0].mxu0
    %v2170 = vadd.f32 0.0, %v2169
    %v2171 = vpop.f32.mrb[0].mxu0
    %2172 = vmatprep.mubr.f32.mxu0 0.0
    %v2173 = vand.u32 %v2070, 4294901760
    %v2174 = vsub.f32 %v2070, %v2173
    %v2175 = vand.u32 %v2174, 4294901760
    %v2176 = vsub.f32 %v2174, %v2175
    %v2177 = vand.u32 %v2176, 4294901760
    %2178 = vmatmul.mubr.f32.gmra.mrb[0].mxu0 %v2177
    %v2179 = vpop.f32.mrb[0].mxu0
    %v2180 = vadd.f32 0.0, %v2179
    %v2181 = vpop.f32.mrb[0].mxu0
    %2182 = vmatprep.mubr.f32.mxu0 0.0
    %v2183 = vand.u32 %v2073, 4294901760
    %v2184 = vsub.f32 %v2073, %v2183
    %v2185 = vand.u32 %v2184, 4294901760
    %v2186 = vsub.f32 %v2184, %v2185
    %v2187 = vand.u32 %v2186, 4294901760
    %2188 = vmatmul.mubr.f32.gmra.mrb[0].mxu0 %v2187
    %v2189 = vpop.f32.mrb[0].mxu0
    %v2190 = vadd.f32 0.0, %v2189
    %v2191 = vpop.f32.mrb[0].mxu0
    %2192 = vmatprep.mubr.f32.mxu0 0.0
    %v2193 = vand.u32 %v2076, 4294901760
    %v2194 = vsub.f32 %v2076, %v2193
    %v2195 = vand.u32 %v2194, 4294901760
    %v2196 = vsub.f32 %v2194, %v2195
    %v2197 = vand.u32 %v2196, 4294901760
    %2198 = vmatmul.mubr.f32.gmra.mrb[0].mxu0 %v2197
    %v2199 = vpop.f32.mrb[0].mxu0
    %v2200 = vadd.f32 0.0, %v2199
    %v2201 = vpop.f32.mrb[0].mxu0
    %2202 = vmatprep.mubr.f32.mxu0 0.0
    %v2203 = vand.u32 %v2079, 4294901760
    %v2204 = vsub.f32 %v2079, %v2203
    %v2205 = vand.u32 %v2204, 4294901760
    %v2206 = vsub.f32 %v2204, %v2205
    %v2207 = vand.u32 %v2206, 4294901760
    %2208 = vmatmul.mubr.f32.gmra.mrb[0].mxu0 %v2207
    %v2209 = vpop.f32.mrb[0].mxu0
    %v2210 = vadd.f32 0.0, %v2209
    %v2211 = vpop.f32.mrb[0].mxu0
    %2212 = vmatprep.mubr.f32.mxu0 0.0
    %v2213 = vand.u32 %v2082, 4294901760
    %v2214 = vsub.f32 %v2082, %v2213
    %v2215 = vand.u32 %v2214, 4294901760
    %v2216 = vsub.f32 %v2214, %v2215
    %v2217 = vand.u32 %v2216, 4294901760
    %2218 = vmatmul.mubr.f32.gmra.mrb[0].mxu0 %v2217
    %v2219 = vpop.f32.mrb[0].mxu0
    %v2220 = vadd.f32 0.0, %v2219
    %v2221 = vpop.f32.mrb[0].mxu0
    %2222 = vmatprep.mubr.f32.mxu0 0.0
    %v2223 = vand.u32 %v2085, 4294901760
    %v2224 = vsub.f32 %v2085, %v2223
    %v2225 = vand.u32 %v2224, 4294901760
    %v2226 = vsub.f32 %v2224, %v2225
    %v2227 = vand.u32 %v2226, 4294901760
    %2228 = vmatmul.mubr.f32.gmra.mrb[0].mxu0 %v2227
    %v2229 = vpop.f32.mrb[0].mxu0
    %v2230 = vadd.f32 0.0, %v2229
    %v2231 = vpop.f32.mrb[0].mxu0
    %2232 = vmatprep.mubr.f32.mxu0 0.0
    %v2233 = vand.u32 %v2088, 4294901760
    %v2234 = vsub.f32 %v2088, %v2233
    %v2235 = vand.u32 %v2234, 4294901760
    %v2236 = vsub.f32 %v2234, %v2235
    %v2237 = vand.u32 %v2236, 4294901760
    %2238 = vmatmul.mubr.f32.gmra.mrb[0].mxu0 %v2237
    %v2239 = vpop.f32.mrb[0].mxu0
    %v2240 = vadd.f32 0.0, %v2239
    %v2241 = vpop.f32.mrb[0].mxu0
    %2242 = vdwg.mxu0
    %2243 = vmatprep.subr.mxu0 0.0
    %v2244 = vand.u32 %v2058, 4294901760
    %v2245 = vsub.f32 %v2058, %v2244
    %v2246 = vand.u32 %v2245, 4294901760
    %v2247 = vsub.f32 %v2245, %v2246
    %v2248 = vand.u32 %v2247, 4294901760
    %2249 = vmatpush1.msra.mxu0 %v2248
    %2250 = vmatprep.subr.mxu0 0.0
    %v2251 = vand.u32 %v2059, 4294901760
    %v2252 = vsub.f32 %v2059, %v2251
    %v2253 = vand.u32 %v2252, 4294901760
    %v2254 = vsub.f32 %v2252, %v2253
    %v2255 = vand.u32 %v2254, 4294901760
    %2256 = vmatpush1.msra.mxu0 %v2255
    %2257 = vmatprep.subr.mxu0 0.0
    %v2258 = vand.u32 %v2060, 4294901760
    %v2259 = vsub.f32 %v2060, %v2258
    %v2260 = vand.u32 %v2259, 4294901760
    %v2261 = vsub.f32 %v2259, %v2260
    %v2262 = vand.u32 %v2261, 4294901760
    %2263 = vmatpush1.msra.mxu0 %v2262
    %2264 = vmatprep.subr.mxu0 0.0
    %v2265 = vand.u32 %v2061, 4294901760
    %v2266 = vsub.f32 %v2061, %v2265
    %v2267 = vand.u32 %v2266, 4294901760
    %v2268 = vsub.f32 %v2266, %v2267
    %v2269 = vand.u32 %v2268, 4294901760
    %2270 = vmatpush1.msra.mxu0 %v2269
    %2271 = vmatprep.subr.mxu0 0.0
    %v2272 = vand.u32 %v2062, 4294901760
    %v2273 = vsub.f32 %v2062, %v2272
    %v2274 = vand.u32 %v2273, 4294901760
    %v2275 = vsub.f32 %v2273, %v2274
    %v2276 = vand.u32 %v2275, 4294901760
    %2277 = vmatpush1.msra.mxu0 %v2276
    %2278 = vmatprep.subr.mxu0 0.0
    %v2279 = vand.u32 %v2063, 4294901760
    %v2280 = vsub.f32 %v2063, %v2279
    %v2281 = vand.u32 %v2280, 4294901760
    %v2282 = vsub.f32 %v2280, %v2281
    %v2283 = vand.u32 %v2282, 4294901760
    %2284 = vmatpush1.msra.mxu0 %v2283
    %2285 = vmatprep.subr.mxu0 0.0
    %v2286 = vand.u32 %v2064, 4294901760
    %v2287 = vsub.f32 %v2064, %v2286
    %v2288 = vand.u32 %v2287, 4294901760
    %v2289 = vsub.f32 %v2287, %v2288
    %v2290 = vand.u32 %v2289, 4294901760
    %2291 = vmatpush1.msra.mxu0 %v2290
    %2292 = vmatprep.subr.mxu0 0.0
    %v2293 = vand.u32 %v2065, 4294901760
    %v2294 = vsub.f32 %v2065, %v2293
    %v2295 = vand.u32 %v2294, 4294901760
    %v2296 = vsub.f32 %v2294, %v2295
    %v2297 = vand.u32 %v2296, 4294901760
    %2298 = vmatpush1.msra.mxu0 %v2297
    %2299 = vmatprep.subr.mxu0 0.0
    %2300 = vmatpush1.msra.mxu0 0.0
    %2301 = vmatprep.subr.mxu0 0.0
    %2302 = vmatpush1.msra.mxu0 0.0
    %2303 = vmatprep.subr.mxu0 0.0
    %2304 = vmatpush1.msra.mxu0 0.0
    %2305 = vmatprep.subr.mxu0 0.0
    %2306 = vmatpush1.msra.mxu0 0.0
    %2307 = vmatprep.subr.mxu0 0.0
    %2308 = vmatpush1.msra.mxu0 0.0
    %2309 = vmatprep.subr.mxu0 0.0
    %2310 = vmatpush1.msra.mxu0 0.0
    %2311 = vmatprep.subr.mxu0 0.0
    %2312 = vmatpush1.msra.mxu0 0.0
    %2313 = vmatprep.subr.mxu0 0.0
    %2314 = vmatpush1.msra.mxu0 0.0
    %2315 = vmatprep.subr.mxu0 0.0
    %2316 = vmatpush1.msra.mxu0 0.0
    %2317 = vmatprep.subr.mxu0 0.0
    %2318 = vmatpush1.msra.mxu0 0.0
    %2319 = vmatprep.subr.mxu0 0.0
    %2320 = vmatpush1.msra.mxu0 0.0
    %2321 = vmatprep.subr.mxu0 0.0
    %2322 = vmatpush1.msra.mxu0 0.0
    %2323 = vmatprep.subr.mxu0 0.0
    %2324 = vmatpush1.msra.mxu0 0.0
    %2325 = vmatprep.subr.mxu0 0.0
    %2326 = vmatpush1.msra.mxu0 0.0
    %2327 = vmatprep.subr.mxu0 0.0
    %2328 = vmatpush1.msra.mxu0 0.0
    %2329 = vmatprep.subr.mxu0 0.0
    %2330 = vmatpush1.msra.mxu0 0.0
    %2331 = vmatprep.subr.mxu0 0.0
    %2332 = vmatpush1.msra.mxu0 0.0
    %2333 = vmatprep.subr.mxu0 0.0
    %2334 = vmatpush1.msra.mxu0 0.0
    %2335 = vmatprep.subr.mxu0 0.0
    %2336 = vmatpush1.msra.mxu0 0.0
    %2337 = vmatprep.subr.mxu0 0.0
    %2338 = vmatpush1.msra.mxu0 0.0
    %2339 = vmatprep.subr.mxu0 0.0
    %2340 = vmatpush1.msra.mxu0 0.0
    %2341 = vmatprep.subr.mxu0 0.0
    %2342 = vmatpush1.msra.mxu0 0.0
    %2343 = vmatprep.subr.mxu0 0.0
    %2344 = vmatpush1.msra.mxu0 0.0
    %2345 = vmatprep.subr.mxu0 0.0
    %2346 = vmatpush1.msra.mxu0 0.0
    %2347 = vmatprep.mubr.f32.mxu0 0.0
    %v2348 = vand.u32 %v2067, 4294901760
    %2349 = vmatmul.mubr.f32.gmra.mrb[0].mxu0 %v2348
    %v2350 = vpop.f32.mrb[0].mxu0
    %v2351 = vadd.f32 %v2170, %v2350
    %v2352 = vpop.f32.mrb[0].mxu0
    %2353 = vmatprep.mubr.f32.mxu0 0.0
    %v2354 = vand.u32 %v2070, 4294901760
    %2355 = vmatmul.mubr.f32.gmra.mrb[0].mxu0 %v2354
    %v2356 = vpop.f32.mrb[0].mxu0
    %v2357 = vadd.f32 %v2180, %v2356
    %v2358 = vpop.f32.mrb[0].mxu0
    %2359 = vmatprep.mubr.f32.mxu0 0.0
    %v2360 = vand.u32 %v2073, 4294901760
    %2361 = vmatmul.mubr.f32.gmra.mrb[0].mxu0 %v2360
    %v2362 = vpop.f32.mrb[0].mxu0
    %v2363 = vadd.f32 %v2190, %v2362
    %v2364 = vpop.f32.mrb[0].mxu0
    %2365 = vmatprep.mubr.f32.mxu0 0.0
    %v2366 = vand.u32 %v2076, 4294901760
    %2367 = vmatmul.mubr.f32.gmra.mrb[0].mxu0 %v2366
    %v2368 = vpop.f32.mrb[0].mxu0
    %v2369 = vadd.f32 %v2200, %v2368
    %v2370 = vpop.f32.mrb[0].mxu0
    %2371 = vmatprep.mubr.f32.mxu0 0.0
    %v2372 = vand.u32 %v2079, 4294901760
    %2373 = vmatmul.mubr.f32.gmra.mrb[0].mxu0 %v2372
    %v2374 = vpop.f32.mrb[0].mxu0
    %v2375 = vadd.f32 %v2210, %v2374
    %v2376 = vpop.f32.mrb[0].mxu0
    %2377 = vmatprep.mubr.f32.mxu0 0.0
    %v2378 = vand.u32 %v2082, 4294901760
    %2379 = vmatmul.mubr.f32.gmra.mrb[0].mxu0 %v2378
    %v2380 = vpop.f32.mrb[0].mxu0
    %v2381 = vadd.f32 %v2220, %v2380
    %v2382 = vpop.f32.mrb[0].mxu0
    %2383 = vmatprep.mubr.f32.mxu0 0.0
    %v2384 = vand.u32 %v2085, 4294901760
    %2385 = vmatmul.mubr.f32.gmra.mrb[0].mxu0 %v2384
    %v2386 = vpop.f32.mrb[0].mxu0
    %v2387 = vadd.f32 %v2230, %v2386
    %v2388 = vpop.f32.mrb[0].mxu0
    %2389 = vmatprep.mubr.f32.mxu0 0.0
    %v2390 = vand.u32 %v2088, 4294901760
    %2391 = vmatmul.mubr.f32.gmra.mrb[0].mxu0 %v2390
    %v2392 = vpop.f32.mrb[0].mxu0
    %v2393 = vadd.f32 %v2240, %v2392
    %v2394 = vpop.f32.mrb[0].mxu0
    %2395 = vdwg.mxu0
    %2396 = vmatprep.subr.mxu0 0.0
    %v2397 = vand.u32 %v2058, 4294901760
    %v2398 = vsub.f32 %v2058, %v2397
    %2399 = vmatpush1.msra.mxu0 %v2398
    %2400 = vmatprep.subr.mxu0 0.0
    %v2401 = vand.u32 %v2059, 4294901760
    %v2402 = vsub.f32 %v2059, %v2401
    %2403 = vmatpush1.msra.mxu0 %v2402
    %2404 = vmatprep.subr.mxu0 0.0
    %v2405 = vand.u32 %v2060, 4294901760
    %v2406 = vsub.f32 %v2060, %v2405
    %2407 = vmatpush1.msra.mxu0 %v2406
    %2408 = vmatprep.subr.mxu0 0.0
    %v2409 = vand.u32 %v2061, 4294901760
    %v2410 = vsub.f32 %v2061, %v2409
    %2411 = vmatpush1.msra.mxu0 %v2410
    %2412 = vmatprep.subr.mxu0 0.0
    %v2413 = vand.u32 %v2062, 4294901760
    %v2414 = vsub.f32 %v2062, %v2413
    %2415 = vmatpush1.msra.mxu0 %v2414
    %2416 = vmatprep.subr.mxu0 0.0
    %v2417 = vand.u32 %v2063, 4294901760
    %v2418 = vsub.f32 %v2063, %v2417
    %2419 = vmatpush1.msra.mxu0 %v2418
    %2420 = vmatprep.subr.mxu0 0.0
    %v2421 = vand.u32 %v2064, 4294901760
    %v2422 = vsub.f32 %v2064, %v2421
    %2423 = vmatpush1.msra.mxu0 %v2422
    %2424 = vmatprep.subr.mxu0 0.0
    %v2425 = vand.u32 %v2065, 4294901760
    %v2426 = vsub.f32 %v2065, %v2425
    %2427 = vmatpush1.msra.mxu0 %v2426
    %2428 = vmatprep.subr.mxu0 0.0
    %2429 = vmatpush1.msra.mxu0 0.0
    %2430 = vmatprep.subr.mxu0 0.0
    %2431 = vmatpush1.msra.mxu0 0.0
    %2432 = vmatprep.subr.mxu0 0.0
    %2433 = vmatpush1.msra.mxu0 0.0
    %2434 = vmatprep.subr.mxu0 0.0
    %2435 = vmatpush1.msra.mxu0 0.0
    %2436 = vmatprep.subr.mxu0 0.0
    %2437 = vmatpush1.msra.mxu0 0.0
    %2438 = vmatprep.subr.mxu0 0.0
    %2439 = vmatpush1.msra.mxu0 0.0
    %2440 = vmatprep.subr.mxu0 0.0
    %2441 = vmatpush1.msra.mxu0 0.0
    %2442 = vmatprep.subr.mxu0 0.0
    %2443 = vmatpush1.msra.mxu0 0.0
    %2444 = vmatprep.subr.mxu0 0.0
    %2445 = vmatpush1.msra.mxu0 0.0
    %2446 = vmatprep.subr.mxu0 0.0
    %2447 = vmatpush1.msra.mxu0 0.0
    %2448 = vmatprep.subr.mxu0 0.0
    %2449 = vmatpush1.msra.mxu0 0.0
    %2450 = vmatprep.subr.mxu0 0.0
    %2451 = vmatpush1.msra.mxu0 0.0
    %2452 = vmatprep.subr.mxu0 0.0
    %2453 = vmatpush1.msra.mxu0 0.0
    %2454 = vmatprep.subr.mxu0 0.0
    %2455 = vmatpush1.msra.mxu0 0.0
    %2456 = vmatprep.subr.mxu0 0.0
    %2457 = vmatpush1.msra.mxu0 0.0
    %2458 = vmatprep.subr.mxu0 0.0
    %2459 = vmatpush1.msra.mxu0 0.0
    %2460 = vmatprep.subr.mxu0 0.0
    %2461 = vmatpush1.msra.mxu0 0.0
    %2462 = vmatprep.subr.mxu0 0.0
    %2463 = vmatpush1.msra.mxu0 0.0
    %2464 = vmatprep.subr.mxu0 0.0
    %2465 = vmatpush1.msra.mxu0 0.0
    %2466 = vmatprep.subr.mxu0 0.0
    %2467 = vmatpush1.msra.mxu0 0.0
    %2468 = vmatprep.subr.mxu0 0.0
    %2469 = vmatpush1.msra.mxu0 0.0
    %2470 = vmatprep.subr.mxu0 0.0
    %2471 = vmatpush1.msra.mxu0 0.0
    %2472 = vmatprep.subr.mxu0 0.0
    %2473 = vmatpush1.msra.mxu0 0.0
    %2474 = vmatprep.subr.mxu0 0.0
    %2475 = vmatpush1.msra.mxu0 0.0
    %2476 = vmatprep.mubr.f32.mxu0 0.0
    %v2477 = vand.u32 %v2067, 4294901760
    %v2478 = vsub.f32 %v2067, %v2477
    %2479 = vmatmul.mubr.f32.gmra.mrb[0].mxu0 %v2478
    %v2480 = vpop.f32.mrb[0].mxu0
    %v2481 = vadd.f32 %v2351, %v2480
    %v2482 = vpop.f32.mrb[0].mxu0
    %2483 = vmatprep.mubr.f32.mxu0 0.0
    %v2484 = vand.u32 %v2070, 4294901760
    %v2485 = vsub.f32 %v2070, %v2484
    %2486 = vmatmul.mubr.f32.gmra.mrb[0].mxu0 %v2485
    %v2487 = vpop.f32.mrb[0].mxu0
    %v2488 = vadd.f32 %v2357, %v2487
    %v2489 = vpop.f32.mrb[0].mxu0
    %2490 = vmatprep.mubr.f32.mxu0 0.0
    %v2491 = vand.u32 %v2073, 4294901760
    %v2492 = vsub.f32 %v2073, %v2491
    %2493 = vmatmul.mubr.f32.gmra.mrb[0].mxu0 %v2492
    %v2494 = vpop.f32.mrb[0].mxu0
    %v2495 = vadd.f32 %v2363, %v2494
    %v2496 = vpop.f32.mrb[0].mxu0
    %2497 = vmatprep.mubr.f32.mxu0 0.0
    %v2498 = vand.u32 %v2076, 4294901760
    %v2499 = vsub.f32 %v2076, %v2498
    %2500 = vmatmul.mubr.f32.gmra.mrb[0].mxu0 %v2499
    %v2501 = vpop.f32.mrb[0].mxu0
    %v2502 = vadd.f32 %v2369, %v2501
    %v2503 = vpop.f32.mrb[0].mxu0
    %2504 = vmatprep.mubr.f32.mxu0 0.0
    %v2505 = vand.u32 %v2079, 4294901760
    %v2506 = vsub.f32 %v2079, %v2505
    %2507 = vmatmul.mubr.f32.gmra.mrb[0].mxu0 %v2506
    %v2508 = vpop.f32.mrb[0].mxu0
    %v2509 = vadd.f32 %v2375, %v2508
    %v2510 = vpop.f32.mrb[0].mxu0
    %2511 = vmatprep.mubr.f32.mxu0 0.0
    %v2512 = vand.u32 %v2082, 4294901760
    %v2513 = vsub.f32 %v2082, %v2512
    %2514 = vmatmul.mubr.f32.gmra.mrb[0].mxu0 %v2513
    %v2515 = vpop.f32.mrb[0].mxu0
    %v2516 = vadd.f32 %v2381, %v2515
    %v2517 = vpop.f32.mrb[0].mxu0
    %2518 = vmatprep.mubr.f32.mxu0 0.0
    %v2519 = vand.u32 %v2085, 4294901760
    %v2520 = vsub.f32 %v2085, %v2519
    %2521 = vmatmul.mubr.f32.gmra.mrb[0].mxu0 %v2520
    %v2522 = vpop.f32.mrb[0].mxu0
    %v2523 = vadd.f32 %v2387, %v2522
    %v2524 = vpop.f32.mrb[0].mxu0
    %2525 = vmatprep.mubr.f32.mxu0 0.0
    %v2526 = vand.u32 %v2088, 4294901760
    %v2527 = vsub.f32 %v2088, %v2526
    %2528 = vmatmul.mubr.f32.gmra.mrb[0].mxu0 %v2527
    %v2529 = vpop.f32.mrb[0].mxu0
    %v2530 = vadd.f32 %v2393, %v2529
    %v2531 = vpop.f32.mrb[0].mxu0
    %2532 = vdwg.mxu0
    %2533 = vmatprep.subr.mxu0 0.0
    %v2534 = vand.u32 %v2058, 4294901760
    %2535 = vmatpush1.msra.mxu0 %v2534
    %2536 = vmatprep.subr.mxu0 0.0
    %v2537 = vand.u32 %v2059, 4294901760
    %2538 = vmatpush1.msra.mxu0 %v2537
    %2539 = vmatprep.subr.mxu0 0.0
    %v2540 = vand.u32 %v2060, 4294901760
    %2541 = vmatpush1.msra.mxu0 %v2540
    %2542 = vmatprep.subr.mxu0 0.0
    %v2543 = vand.u32 %v2061, 4294901760
    %2544 = vmatpush1.msra.mxu0 %v2543
    %2545 = vmatprep.subr.mxu0 0.0
    %v2546 = vand.u32 %v2062, 4294901760
    %2547 = vmatpush1.msra.mxu0 %v2546
    %2548 = vmatprep.subr.mxu0 0.0
    %v2549 = vand.u32 %v2063, 4294901760
    %2550 = vmatpush1.msra.mxu0 %v2549
    %2551 = vmatprep.subr.mxu0 0.0
    %v2552 = vand.u32 %v2064, 4294901760
    %2553 = vmatpush1.msra.mxu0 %v2552
    %2554 = vmatprep.subr.mxu0 0.0
    %v2555 = vand.u32 %v2065, 4294901760
    %2556 = vmatpush1.msra.mxu0 %v2555
    %2557 = vmatprep.subr.mxu0 0.0
    %2558 = vmatpush1.msra.mxu0 0.0
    %2559 = vmatprep.subr.mxu0 0.0
    %2560 = vmatpush1.msra.mxu0 0.0
    %2561 = vmatprep.subr.mxu0 0.0
    %2562 = vmatpush1.msra.mxu0 0.0
    %2563 = vmatprep.subr.mxu0 0.0
    %2564 = vmatpush1.msra.mxu0 0.0
    %2565 = vmatprep.subr.mxu0 0.0
    %2566 = vmatpush1.msra.mxu0 0.0
    %2567 = vmatprep.subr.mxu0 0.0
    %2568 = vmatpush1.msra.mxu0 0.0
    %2569 = vmatprep.subr.mxu0 0.0
    %2570 = vmatpush1.msra.mxu0 0.0
    %2571 = vmatprep.subr.mxu0 0.0
    %2572 = vmatpush1.msra.mxu0 0.0
    %2573 = vmatprep.subr.mxu0 0.0
    %2574 = vmatpush1.msra.mxu0 0.0
    %2575 = vmatprep.subr.mxu0 0.0
    %2576 = vmatpush1.msra.mxu0 0.0
    %2577 = vmatprep.subr.mxu0 0.0
    %2578 = vmatpush1.msra.mxu0 0.0
    %2579 = vmatprep.subr.mxu0 0.0
    %2580 = vmatpush1.msra.mxu0 0.0
    %2581 = vmatprep.subr.mxu0 0.0
    %2582 = vmatpush1.msra.mxu0 0.0
    %2583 = vmatprep.subr.mxu0 0.0
    %2584 = vmatpush1.msra.mxu0 0.0
    %2585 = vmatprep.subr.mxu0 0.0
    %2586 = vmatpush1.msra.mxu0 0.0
    %2587 = vmatprep.subr.mxu0 0.0
    %2588 = vmatpush1.msra.mxu0 0.0
    %2589 = vmatprep.subr.mxu0 0.0
    %2590 = vmatpush1.msra.mxu0 0.0
    %2591 = vmatprep.subr.mxu0 0.0
    %2592 = vmatpush1.msra.mxu0 0.0
    %2593 = vmatprep.subr.mxu0 0.0
    %2594 = vmatpush1.msra.mxu0 0.0
    %2595 = vmatprep.subr.mxu0 0.0
    %2596 = vmatpush1.msra.mxu0 0.0
    %2597 = vmatprep.subr.mxu0 0.0
    %2598 = vmatpush1.msra.mxu0 0.0
    %2599 = vmatprep.subr.mxu0 0.0
    %2600 = vmatpush1.msra.mxu0 0.0
    %2601 = vmatprep.subr.mxu0 0.0
    %2602 = vmatpush1.msra.mxu0 0.0
    %2603 = vmatprep.subr.mxu0 0.0
    %2604 = vmatpush1.msra.mxu0 0.0
    %2605 = vmatprep.mubr.f32.mxu0 0.0
    %v2606 = vand.u32 %v2067, 4294901760
    %v2607 = vsub.f32 %v2067, %v2606
    %v2608 = vand.u32 %v2607, 4294901760
    %2609 = vmatmul.mubr.f32.gmra.mrb[0].mxu0 %v2608
    %v2610 = vpop.f32.mrb[0].mxu0
    %v2611 = vadd.f32 %v2481, %v2610
    %v2612 = vpop.f32.mrb[0].mxu0
    %2613 = vmatprep.mubr.f32.mxu0 0.0
    %v2614 = vand.u32 %v2070, 4294901760
    %v2615 = vsub.f32 %v2070, %v2614
    %v2616 = vand.u32 %v2615, 4294901760
    %2617 = vmatmul.mubr.f32.gmra.mrb[0].mxu0 %v2616
    %v2618 = vpop.f32.mrb[0].mxu0
    %v2619 = vadd.f32 %v2488, %v2618
    %v2620 = vpop.f32.mrb[0].mxu0
    %2621 = vmatprep.mubr.f32.mxu0 0.0
    %v2622 = vand.u32 %v2073, 4294901760
    %v2623 = vsub.f32 %v2073, %v2622
    %v2624 = vand.u32 %v2623, 4294901760
    %2625 = vmatmul.mubr.f32.gmra.mrb[0].mxu0 %v2624
    %v2626 = vpop.f32.mrb[0].mxu0
    %v2627 = vadd.f32 %v2495, %v2626
    %v2628 = vpop.f32.mrb[0].mxu0
    %2629 = vmatprep.mubr.f32.mxu0 0.0
    %v2630 = vand.u32 %v2076, 4294901760
    %v2631 = vsub.f32 %v2076, %v2630
    %v2632 = vand.u32 %v2631, 4294901760
    %2633 = vmatmul.mubr.f32.gmra.mrb[0].mxu0 %v2632
    %v2634 = vpop.f32.mrb[0].mxu0
    %v2635 = vadd.f32 %v2502, %v2634
    %v2636 = vpop.f32.mrb[0].mxu0
    %2637 = vmatprep.mubr.f32.mxu0 0.0
    %v2638 = vand.u32 %v2079, 4294901760
    %v2639 = vsub.f32 %v2079, %v2638
    %v2640 = vand.u32 %v2639, 4294901760
    %2641 = vmatmul.mubr.f32.gmra.mrb[0].mxu0 %v2640
    %v2642 = vpop.f32.mrb[0].mxu0
    %v2643 = vadd.f32 %v2509, %v2642
    %v2644 = vpop.f32.mrb[0].mxu0
    %2645 = vmatprep.mubr.f32.mxu0 0.0
    %v2646 = vand.u32 %v2082, 4294901760
    %v2647 = vsub.f32 %v2082, %v2646
    %v2648 = vand.u32 %v2647, 4294901760
    %2649 = vmatmul.mubr.f32.gmra.mrb[0].mxu0 %v2648
    %v2650 = vpop.f32.mrb[0].mxu0
    %v2651 = vadd.f32 %v2516, %v2650
    %v2652 = vpop.f32.mrb[0].mxu0
    %2653 = vmatprep.mubr.f32.mxu0 0.0
    %v2654 = vand.u32 %v2085, 4294901760
    %v2655 = vsub.f32 %v2085, %v2654
    %v2656 = vand.u32 %v2655, 4294901760
    %2657 = vmatmul.mubr.f32.gmra.mrb[0].mxu0 %v2656
    %v2658 = vpop.f32.mrb[0].mxu0
    %v2659 = vadd.f32 %v2523, %v2658
    %v2660 = vpop.f32.mrb[0].mxu0
    %2661 = vmatprep.mubr.f32.mxu0 0.0
    %v2662 = vand.u32 %v2088, 4294901760
    %v2663 = vsub.f32 %v2088, %v2662
    %v2664 = vand.u32 %v2663, 4294901760
    %2665 = vmatmul.mubr.f32.gmra.mrb[0].mxu0 %v2664
    %v2666 = vpop.f32.mrb[0].mxu0
    %v2667 = vadd.f32 %v2530, %v2666
    %v2668 = vpop.f32.mrb[0].mxu0
    %2669 = vdwg.mxu0
    %2670 = vmatprep.subr.mxu0 0.0
    %v2671 = vand.u32 %v2058, 4294901760
    %v2672 = vsub.f32 %v2058, %v2671
    %v2673 = vand.u32 %v2672, 4294901760
    %2674 = vmatpush1.msra.mxu0 %v2673
    %2675 = vmatprep.subr.mxu0 0.0
    %v2676 = vand.u32 %v2059, 4294901760
    %v2677 = vsub.f32 %v2059, %v2676
    %v2678 = vand.u32 %v2677, 4294901760
    %2679 = vmatpush1.msra.mxu0 %v2678
    %2680 = vmatprep.subr.mxu0 0.0
    %v2681 = vand.u32 %v2060, 4294901760
    %v2682 = vsub.f32 %v2060, %v2681
    %v2683 = vand.u32 %v2682, 4294901760
    %2684 = vmatpush1.msra.mxu0 %v2683
    %2685 = vmatprep.subr.mxu0 0.0
    %v2686 = vand.u32 %v2061, 4294901760
    %v2687 = vsub.f32 %v2061, %v2686
    %v2688 = vand.u32 %v2687, 4294901760
    %2689 = vmatpush1.msra.mxu0 %v2688
    %2690 = vmatprep.subr.mxu0 0.0
    %v2691 = vand.u32 %v2062, 4294901760
    %v2692 = vsub.f32 %v2062, %v2691
    %v2693 = vand.u32 %v2692, 4294901760
    %2694 = vmatpush1.msra.mxu0 %v2693
    %2695 = vmatprep.subr.mxu0 0.0
    %v2696 = vand.u32 %v2063, 4294901760
    %v2697 = vsub.f32 %v2063, %v2696
    %v2698 = vand.u32 %v2697, 4294901760
    %2699 = vmatpush1.msra.mxu0 %v2698
    %2700 = vmatprep.subr.mxu0 0.0
    %v2701 = vand.u32 %v2064, 4294901760
    %v2702 = vsub.f32 %v2064, %v2701
    %v2703 = vand.u32 %v2702, 4294901760
    %2704 = vmatpush1.msra.mxu0 %v2703
    %2705 = vmatprep.subr.mxu0 0.0
    %v2706 = vand.u32 %v2065, 4294901760
    %v2707 = vsub.f32 %v2065, %v2706
    %v2708 = vand.u32 %v2707, 4294901760
    %2709 = vmatpush1.msra.mxu0 %v2708
    %2710 = vmatprep.subr.mxu0 0.0
    %2711 = vmatpush1.msra.mxu0 0.0
    %2712 = vmatprep.subr.mxu0 0.0
    %2713 = vmatpush1.msra.mxu0 0.0
    %2714 = vmatprep.subr.mxu0 0.0
    %2715 = vmatpush1.msra.mxu0 0.0
    %2716 = vmatprep.subr.mxu0 0.0
    %2717 = vmatpush1.msra.mxu0 0.0
    %2718 = vmatprep.subr.mxu0 0.0
    %2719 = vmatpush1.msra.mxu0 0.0
    %2720 = vmatprep.subr.mxu0 0.0
    %2721 = vmatpush1.msra.mxu0 0.0
    %2722 = vmatprep.subr.mxu0 0.0
    %2723 = vmatpush1.msra.mxu0 0.0
    %2724 = vmatprep.subr.mxu0 0.0
    %2725 = vmatpush1.msra.mxu0 0.0
    %2726 = vmatprep.subr.mxu0 0.0
    %2727 = vmatpush1.msra.mxu0 0.0
    %2728 = vmatprep.subr.mxu0 0.0
    %2729 = vmatpush1.msra.mxu0 0.0
    %2730 = vmatprep.subr.mxu0 0.0
    %2731 = vmatpush1.msra.mxu0 0.0
    %2732 = vmatprep.subr.mxu0 0.0
    %2733 = vmatpush1.msra.mxu0 0.0
    %2734 = vmatprep.subr.mxu0 0.0
    %2735 = vmatpush1.msra.mxu0 0.0
    %2736 = vmatprep.subr.mxu0 0.0
    %2737 = vmatpush1.msra.mxu0 0.0
    %2738 = vmatprep.subr.mxu0 0.0
    %2739 = vmatpush1.msra.mxu0 0.0
    %2740 = vmatprep.subr.mxu0 0.0
    %2741 = vmatpush1.msra.mxu0 0.0
    %2742 = vmatprep.subr.mxu0 0.0
    %2743 = vmatpush1.msra.mxu0 0.0
    %2744 = vmatprep.subr.mxu0 0.0
    %2745 = vmatpush1.msra.mxu0 0.0
    %2746 = vmatprep.subr.mxu0 0.0
    %2747 = vmatpush1.msra.mxu0 0.0
    %2748 = vmatprep.subr.mxu0 0.0
    %2749 = vmatpush1.msra.mxu0 0.0
    %2750 = vmatprep.subr.mxu0 0.0
    %2751 = vmatpush1.msra.mxu0 0.0
    %2752 = vmatprep.subr.mxu0 0.0
    %2753 = vmatpush1.msra.mxu0 0.0
    %2754 = vmatprep.subr.mxu0 0.0
    %2755 = vmatpush1.msra.mxu0 0.0
    %2756 = vmatprep.subr.mxu0 0.0
    %2757 = vmatpush1.msra.mxu0 0.0
    %2758 = vmatprep.mubr.f32.mxu0 0.0
    %v2759 = vand.u32 %v2067, 4294901760
    %2760 = vmatmul.mubr.f32.gmra.mrb[0].mxu0 %v2759
    %v2761 = vpop.f32.mrb[0].mxu0
    %v2762 = vadd.f32 %v2611, %v2761
    %v2763 = vpop.f32.mrb[0].mxu0
    %2764 = vmatprep.mubr.f32.mxu0 0.0
    %v2765 = vand.u32 %v2070, 4294901760
    %2766 = vmatmul.mubr.f32.gmra.mrb[0].mxu0 %v2765
    %v2767 = vpop.f32.mrb[0].mxu0
    %v2768 = vadd.f32 %v2619, %v2767
    %v2769 = vpop.f32.mrb[0].mxu0
    %2770 = vmatprep.mubr.f32.mxu0 0.0
    %v2771 = vand.u32 %v2073, 4294901760
    %2772 = vmatmul.mubr.f32.gmra.mrb[0].mxu0 %v2771
    %v2773 = vpop.f32.mrb[0].mxu0
    %v2774 = vadd.f32 %v2627, %v2773
    %v2775 = vpop.f32.mrb[0].mxu0
    %2776 = vmatprep.mubr.f32.mxu0 0.0
    %v2777 = vand.u32 %v2076, 4294901760
    %2778 = vmatmul.mubr.f32.gmra.mrb[0].mxu0 %v2777
    %v2779 = vpop.f32.mrb[0].mxu0
    %v2780 = vadd.f32 %v2635, %v2779
    %v2781 = vpop.f32.mrb[0].mxu0
    %2782 = vmatprep.mubr.f32.mxu0 0.0
    %v2783 = vand.u32 %v2079, 4294901760
    %2784 = vmatmul.mubr.f32.gmra.mrb[0].mxu0 %v2783
    %v2785 = vpop.f32.mrb[0].mxu0
    %v2786 = vadd.f32 %v2643, %v2785
    %v2787 = vpop.f32.mrb[0].mxu0
    %2788 = vmatprep.mubr.f32.mxu0 0.0
    %v2789 = vand.u32 %v2082, 4294901760
    %2790 = vmatmul.mubr.f32.gmra.mrb[0].mxu0 %v2789
    %v2791 = vpop.f32.mrb[0].mxu0
    %v2792 = vadd.f32 %v2651, %v2791
    %v2793 = vpop.f32.mrb[0].mxu0
    %2794 = vmatprep.mubr.f32.mxu0 0.0
    %v2795 = vand.u32 %v2085, 4294901760
    %2796 = vmatmul.mubr.f32.gmra.mrb[0].mxu0 %v2795
    %v2797 = vpop.f32.mrb[0].mxu0
    %v2798 = vadd.f32 %v2659, %v2797
    %v2799 = vpop.f32.mrb[0].mxu0
    %2800 = vmatprep.mubr.f32.mxu0 0.0
    %v2801 = vand.u32 %v2088, 4294901760
    %2802 = vmatmul.mubr.f32.gmra.mrb[0].mxu0 %v2801
    %v2803 = vpop.f32.mrb[0].mxu0
    %v2804 = vadd.f32 %v2667, %v2803
    %v2805 = vpop.f32.mrb[0].mxu0
    %2806 = vdwg.mxu0
    %2807 = vmatprep.subr.mxu0 0.0
    %v2808 = vand.u32 %v2058, 4294901760
    %2809 = vmatpush1.msra.mxu0 %v2808
    %2810 = vmatprep.subr.mxu0 0.0
    %v2811 = vand.u32 %v2059, 4294901760
    %2812 = vmatpush1.msra.mxu0 %v2811
    %2813 = vmatprep.subr.mxu0 0.0
    %v2814 = vand.u32 %v2060, 4294901760
    %2815 = vmatpush1.msra.mxu0 %v2814
    %2816 = vmatprep.subr.mxu0 0.0
    %v2817 = vand.u32 %v2061, 4294901760
    %2818 = vmatpush1.msra.mxu0 %v2817
    %2819 = vmatprep.subr.mxu0 0.0
    %v2820 = vand.u32 %v2062, 4294901760
    %2821 = vmatpush1.msra.mxu0 %v2820
    %2822 = vmatprep.subr.mxu0 0.0
    %v2823 = vand.u32 %v2063, 4294901760
    %2824 = vmatpush1.msra.mxu0 %v2823
    %2825 = vmatprep.subr.mxu0 0.0
    %v2826 = vand.u32 %v2064, 4294901760
    %2827 = vmatpush1.msra.mxu0 %v2826
    %2828 = vmatprep.subr.mxu0 0.0
    %v2829 = vand.u32 %v2065, 4294901760
    %2830 = vmatpush1.msra.mxu0 %v2829
    %2831 = vmatprep.subr.mxu0 0.0
    %2832 = vmatpush1.msra.mxu0 0.0
    %2833 = vmatprep.subr.mxu0 0.0
    %2834 = vmatpush1.msra.mxu0 0.0
    %2835 = vmatprep.subr.mxu0 0.0
    %2836 = vmatpush1.msra.mxu0 0.0
    %2837 = vmatprep.subr.mxu0 0.0
    %2838 = vmatpush1.msra.mxu0 0.0
    %2839 = vmatprep.subr.mxu0 0.0
    %2840 = vmatpush1.msra.mxu0 0.0
    %2841 = vmatprep.subr.mxu0 0.0
    %2842 = vmatpush1.msra.mxu0 0.0
    %2843 = vmatprep.subr.mxu0 0.0
    %2844 = vmatpush1.msra.mxu0 0.0
    %2845 = vmatprep.subr.mxu0 0.0
    %2846 = vmatpush1.msra.mxu0 0.0
    %2847 = vmatprep.subr.mxu0 0.0
    %2848 = vmatpush1.msra.mxu0 0.0
    %2849 = vmatprep.subr.mxu0 0.0
    %2850 = vmatpush1.msra.mxu0 0.0
    %2851 = vmatprep.subr.mxu0 0.0
    %2852 = vmatpush1.msra.mxu0 0.0
    %2853 = vmatprep.subr.mxu0 0.0
    %2854 = vmatpush1.msra.mxu0 0.0
    %2855 = vmatprep.subr.mxu0 0.0
    %2856 = vmatpush1.msra.mxu0 0.0
    %2857 = vmatprep.subr.mxu0 0.0
    %2858 = vmatpush1.msra.mxu0 0.0
    %2859 = vmatprep.subr.mxu0 0.0
    %2860 = vmatpush1.msra.mxu0 0.0
    %2861 = vmatprep.subr.mxu0 0.0
    %2862 = vmatpush1.msra.mxu0 0.0
    %2863 = vmatprep.subr.mxu0 0.0
    %2864 = vmatpush1.msra.mxu0 0.0
    %2865 = vmatprep.subr.mxu0 0.0
    %2866 = vmatpush1.msra.mxu0 0.0
    %2867 = vmatprep.subr.mxu0 0.0
    %2868 = vmatpush1.msra.mxu0 0.0
    %2869 = vmatprep.subr.mxu0 0.0
    %2870 = vmatpush1.msra.mxu0 0.0
    %2871 = vmatprep.subr.mxu0 0.0
    %2872 = vmatpush1.msra.mxu0 0.0
    %2873 = vmatprep.subr.mxu0 0.0
    %2874 = vmatpush1.msra.mxu0 0.0
    %2875 = vmatprep.subr.mxu0 0.0
    %2876 = vmatpush1.msra.mxu0 0.0
    %2877 = vmatprep.subr.mxu0 0.0
    %2878 = vmatpush1.msra.mxu0 0.0
    %2879 = vmatprep.mubr.f32.mxu0 0.0
    %v2880 = vand.u32 %v2067, 4294901760
    %2881 = vmatmul.mubr.f32.gmra.mrb[0].mxu0 %v2880
    %v2882 = vpop.f32.mrb[0].mxu0
    %v2883 = vadd.f32 %v2762, %v2882
    %v2884 = vpop.f32.mrb[0].mxu0
    %2885 = vmatprep.mubr.f32.mxu0 0.0
    %v2886 = vand.u32 %v2070, 4294901760
    %2887 = vmatmul.mubr.f32.gmra.mrb[0].mxu0 %v2886
    %v2888 = vpop.f32.mrb[0].mxu0
    %v2889 = vadd.f32 %v2768, %v2888
    %v2890 = vpop.f32.mrb[0].mxu0
    %2891 = vmatprep.mubr.f32.mxu0 0.0
    %v2892 = vand.u32 %v2073, 4294901760
    %2893 = vmatmul.mubr.f32.gmra.mrb[0].mxu0 %v2892
    %v2894 = vpop.f32.mrb[0].mxu0
    %v2895 = vadd.f32 %v2774, %v2894
    %v2896 = vpop.f32.mrb[0].mxu0
    %2897 = vmatprep.mubr.f32.mxu0 0.0
    %v2898 = vand.u32 %v2076, 4294901760
    %2899 = vmatmul.mubr.f32.gmra.mrb[0].mxu0 %v2898
    %v2900 = vpop.f32.mrb[0].mxu0
    %v2901 = vadd.f32 %v2780, %v2900
    %v2902 = vpop.f32.mrb[0].mxu0
    %2903 = vmatprep.mubr.f32.mxu0 0.0
    %v2904 = vand.u32 %v2079, 4294901760
    %2905 = vmatmul.mubr.f32.gmra.mrb[0].mxu0 %v2904
    %v2906 = vpop.f32.mrb[0].mxu0
    %v2907 = vadd.f32 %v2786, %v2906
    %v2908 = vpop.f32.mrb[0].mxu0
    %2909 = vmatprep.mubr.f32.mxu0 0.0
    %v2910 = vand.u32 %v2082, 4294901760
    %2911 = vmatmul.mubr.f32.gmra.mrb[0].mxu0 %v2910
    %v2912 = vpop.f32.mrb[0].mxu0
    %v2913 = vadd.f32 %v2792, %v2912
    %v2914 = vpop.f32.mrb[0].mxu0
    %2915 = vmatprep.mubr.f32.mxu0 0.0
    %v2916 = vand.u32 %v2085, 4294901760
    %2917 = vmatmul.mubr.f32.gmra.mrb[0].mxu0 %v2916
    %v2918 = vpop.f32.mrb[0].mxu0
    %v2919 = vadd.f32 %v2798, %v2918
    %v2920 = vpop.f32.mrb[0].mxu0
    %2921 = vmatprep.mubr.f32.mxu0 0.0
    %v2922 = vand.u32 %v2088, 4294901760
    %2923 = vmatmul.mubr.f32.gmra.mrb[0].mxu0 %v2922
    %v2924 = vpop.f32.mrb[0].mxu0
    %v2925 = vadd.f32 %v2804, %v2924
    %v2926 = vpop.f32.mrb[0].mxu0
    %2927 = vdwg.mxu0
    %vm2928 = vcmask 7168
    %v2929 = vsel %vm2928, %v2883, -inf
    %v2930 = vsel %vm2928, %v2889, -inf
    %v2931 = vsel %vm2928, %v2895, -inf
    %v2932 = vsel %vm2928, %v2901, -inf
    %v2933 = vsel %vm2928, %v2907, -inf
    %v2934 = vmax.f32 %v2929, %v2933
    %v2935 = vsel %vm2928, %v2913, -inf
    %v2936 = vmax.f32 %v2930, %v2935
    %v2937 = vsel %vm2928, %v2919, -inf
    %v2938 = vmax.f32 %v2931, %v2937
    %v2939 = vsel %vm2928, %v2925, -inf
    %v2940 = vmax.f32 %v2932, %v2939
    %v2941 = vmax.f32 %v2934, %v2936
    %v2942 = vmax.f32 %v2938, %v2940
    %v2943 = vmax.f32 %v2941, %v2942
    %v2944 = vsub.f32 %v2883, %v2943
    %v2945 = vsub.f32 %v2889, %v2943
    %v2946 = vsub.f32 %v2895, %v2943
    %v2947 = vsub.f32 %v2901, %v2943
    %v2948 = vsub.f32 %v2907, %v2943
    %v2949 = vsub.f32 %v2913, %v2943
    %v2950 = vsub.f32 %v2919, %v2943
    %v2951 = vsub.f32 %v2925, %v2943
    %v2952 = vmul.f32 %v2944, 1.442695
    %v2953 = vpow.pop %v2952
    %v2954 = vmul.f32 %v2945, 1.442695
    %v2955 = vpow.pop %v2954
    %v2956 = vmul.f32 %v2946, 1.442695
    %v2957 = vpow.pop %v2956
    %v2958 = vmul.f32 %v2947, 1.442695
    %v2959 = vpow.pop %v2958
    %v2960 = vmul.f32 %v2948, 1.442695
    %v2961 = vpow.pop %v2960
    %v2962 = vmul.f32 %v2949, 1.442695
    %v2963 = vpow.pop %v2962
    %v2964 = vmul.f32 %v2950, 1.442695
    %v2965 = vpow.pop %v2964
    %v2966 = vmul.f32 %v2951, 1.442695
    %v2967 = vpow.pop %v2966
    %v2968 = vsel %vm2928, %v2953, 0.0
    %v2969 = vsel %vm2928, %v2955, 0.0
    %v2970 = vadd.f32 %v2968, %v2969
    %v2971 = vsel %vm2928, %v2957, 0.0
    %v2972 = vadd.f32 %v2970, %v2971
    %v2973 = vsel %vm2928, %v2959, 0.0
    %v2974 = vadd.f32 %v2972, %v2973
    %v2975 = vsel %vm2928, %v2961, 0.0
    %v2976 = vadd.f32 %v2974, %v2975
    %v2977 = vsel %vm2928, %v2963, 0.0
    %v2978 = vadd.f32 %v2976, %v2977
    %v2979 = vsel %vm2928, %v2965, 0.0
    %v2980 = vadd.f32 %v2978, %v2979
    %v2981 = vsel %vm2928, %v2967, 0.0
    %v2982 = vadd.f32 %v2980, %v2981
    %v2983 = vrcp.pop %v2982
    %v2984 = vmul.f32 %v2953, %v2983
    %v2985 = vmul.f32 %v2955, %v2983
    %v2986 = vmul.f32 %v2957, %v2983
    %v2987 = vmul.f32 %v2959, %v2983
    %v2988 = vmul.f32 %v2961, %v2983
    %v2989 = vmul.f32 %v2963, %v2983
    %v2990 = vmul.f32 %v2965, %v2983
    %v2991 = vmul.f32 %v2967, %v2983
    %2993 = vset.pattern.permute.xlu0 0
    %2994 = vperm.xlu0 %2993, %v2984
    %v2995 = vpop.permute.xlu0 %2994
    %2998 = vset.pattern.permute.xlu0 0
    %2999 = vperm.xlu0 %2998, %v2985
    %v3000 = vpop.permute.xlu0 %2999
    %3003 = vset.pattern.permute.xlu0 0
    %3004 = vperm.xlu0 %3003, %v2986
    %v3005 = vpop.permute.xlu0 %3004
    %3008 = vset.pattern.permute.xlu0 0
    %3009 = vperm.xlu0 %3008, %v2987
    %v3010 = vpop.permute.xlu0 %3009
    %3013 = vset.pattern.permute.xlu0 0
    %3014 = vperm.xlu0 %3013, %v2988
    %v3015 = vpop.permute.xlu0 %3014
    %3018 = vset.pattern.permute.xlu0 0
    %3019 = vperm.xlu0 %3018, %v2989
    %v3020 = vpop.permute.xlu0 %3019
    %3023 = vset.pattern.permute.xlu0 0
    %3024 = vperm.xlu0 %3023, %v2990
    %v3025 = vpop.permute.xlu0 %3024
    %3028 = vset.pattern.permute.xlu0 0
    %3029 = vperm.xlu0 %3028, %v2991
    %v3030 = vpop.permute.xlu0 %3029
    %v3032 = vmul.f32 %v2995, %v120
    %v3033 = vmul.f32 %v3000, %v121
    %v3034 = vmul.f32 %v3005, %v122
    %v3035 = vmul.f32 %v3010, %v123
    %v3036 = vmul.f32 %v3015, %v124
    %v3037 = vmul.f32 %v3020, %v125
    %v3038 = vmul.f32 %v3025, %v126
    %v3039 = vmul.f32 %v3030, %v127
    %v3040 = vsel %vm624, %v3032, 0.0
    %v3041 = vsel %vm624, %v3033, 0.0
    %v3042 = vadd.f32 %v3040, %v3041
    %v3043 = vsel %vm624, %v3034, 0.0
    %v3044 = vadd.f32 %v3042, %v3043
    %v3045 = vsel %vm624, %v3035, 0.0
    %v3046 = vadd.f32 %v3044, %v3045
    %v3047 = vsel %vm624, %v3036, 0.0
    %v3048 = vadd.f32 %v3046, %v3047
    %v3049 = vsel %vm624, %v3037, 0.0
    %v3050 = vadd.f32 %v3048, %v3049
    %v3051 = vsel %vm624, %v3038, 0.0
    %v3052 = vadd.f32 %v3050, %v3051
    %v3053 = vsel %vm624, %v3039, 0.0
    %v3054 = vadd.f32 %v3052, %v3053
    %3056 = vrot.lane.b32.xlu0 %v3054, 32
    %v3057 = vpop.permute.xlu0 %3056
    %vm3059 = vcmask 261120
    %v3060 = vsel %vm3059, %v613, %v3057
    %v3061 = vld [vmem:[#allocation7] sm:$0xff]
    %v3062 = vld [vmem:[#allocation7 + $0x8] sm:$0xff]
    %v3063 = vld [vmem:[#allocation7 + $0x10] sm:$0xff]
    %v3064 = vld [vmem:[#allocation7 + $0x18] sm:$0xff]
    %v3065 = vld [vmem:[#allocation7 + $0x20] sm:$0xff]
    %v3066 = vld [vmem:[#allocation7 + $0x28] sm:$0xff]
    %v3067 = vld [vmem:[#allocation7 + $0x30] sm:$0xff]
    %v3068 = vld [vmem:[#allocation7 + $0x38] sm:$0xff]
    %v3069 = vld [vmem:[#allocation7 + $0x40] sm:$0xff]
    %v3070 = vld [vmem:[#allocation7 + $0x48] sm:$0xff]
    %v3071 = vld [vmem:[#allocation7 + $0x50] sm:$0xff]
    %v3072 = vld [vmem:[#allocation7 + $0x58] sm:$0xff]
    %v3073 = vld [vmem:[#allocation7 + $0x60] sm:$0xff]
    %v3074 = vld [vmem:[#allocation7 + $0x68] sm:$0xff]
    %v3075 = vld [vmem:[#allocation7 + $0x70] sm:$0xff]
    %v3076 = vld [vmem:[#allocation7 + $0x78] sm:$0xff]
    %v3077 = vld [vmem:[#allocation7 + $0x80] sm:$0xff]
    %v3078 = vld [vmem:[#allocation7 + $0x88] sm:$0xff]
    %v3079 = vld [vmem:[#allocation7 + $0x90] sm:$0xff]
    %v3080 = vld [vmem:[#allocation7 + $0x98] sm:$0xff]
    %v3081 = vld [vmem:[#allocation7 + $0xa0] sm:$0xff]
    %v3082 = vld [vmem:[#allocation7 + $0xa8] sm:$0xff]
    %v3083 = vld [vmem:[#allocation7 + $0xb0] sm:$0xff]
    %v3084 = vld [vmem:[#allocation7 + $0xb8] sm:$0xff]
    %v3085 = vld [vmem:[%s9] sm:$0x3]
    %v3087 = vlaneseq
    %v3088 = vshrl.u32 %v3087, 7
    %v3089 = vsub.s32 0, %v3088
    %v3090 = vrot.slane %v3085, %v3089
    %v3091 = vlaneseq
    %v3092 = vshrl.u32 %v3091, 7
    %v3093 = vsub.s32 1, %v3092
    %v3094 = vrot.slane %v3085, %v3093
    %vm3097 = vcmask 785408
    %v3099 = vsel %vm3097, %v3060, 0
    %v3101 = vand.u32 %v3062, 4294901760
    %3102 = vmatprep.subr.mxu0 %v3101
    %v3103 = vand.u32 %v3061, 4294901760
    %3104 = vmatpush1.msra.mxu0 %v3103
    %v3105 = vand.u32 %v3064, 4294901760
    %3106 = vmatprep.subr.mxu0 %v3105
    %v3107 = vand.u32 %v3063, 4294901760
    %3108 = vmatpush1.msra.mxu0 %v3107
    %v3109 = vand.u32 %v3066, 4294901760
    %3110 = vmatprep.subr.mxu0 %v3109
    %v3111 = vand.u32 %v3065, 4294901760
    %3112 = vmatpush1.msra.mxu0 %v3111
    %v3113 = vand.u32 %v3068, 4294901760
    %3114 = vmatprep.subr.mxu0 %v3113
    %v3115 = vand.u32 %v3067, 4294901760
    %3116 = vmatpush1.msra.mxu0 %v3115
    %v3117 = vand.u32 %v3070, 4294901760
    %3118 = vmatprep.subr.mxu0 %v3117
    %v3119 = vand.u32 %v3069, 4294901760
    %3120 = vmatpush1.msra.mxu0 %v3119
    %v3121 = vand.u32 %v3072, 4294901760
    %3122 = vmatprep.subr.mxu0 %v3121
    %v3123 = vand.u32 %v3071, 4294901760
    %3124 = vmatpush1.msra.mxu0 %v3123
    %v3125 = vand.u32 %v3074, 4294901760
    %3126 = vmatprep.subr.mxu0 %v3125
    %v3127 = vand.u32 %v3073, 4294901760
    %3128 = vmatpush1.msra.mxu0 %v3127
    %v3129 = vand.u32 %v3076, 4294901760
    %3130 = vmatprep.subr.mxu0 %v3129
    %v3131 = vand.u32 %v3075, 4294901760
    %3132 = vmatpush1.msra.mxu0 %v3131
    %v3133 = vand.u32 %v3078, 4294901760
    %3134 = vmatprep.subr.mxu0 %v3133
    %v3135 = vand.u32 %v3077, 4294901760
    %3136 = vmatpush1.msra.mxu0 %v3135
    %v3137 = vand.u32 %v3080, 4294901760
    %3138 = vmatprep.subr.mxu0 %v3137
    %v3139 = vand.u32 %v3079, 4294901760
    %3140 = vmatpush1.msra.mxu0 %v3139
    %v3141 = vand.u32 %v3082, 4294901760
    %3142 = vmatprep.subr.mxu0 %v3141
    %v3143 = vand.u32 %v3081, 4294901760
    %3144 = vmatpush1.msra.mxu0 %v3143
    %v3145 = vand.u32 %v3084, 4294901760
    %3146 = vmatprep.subr.mxu0 %v3145
    %v3147 = vand.u32 %v3083, 4294901760
    %3148 = vmatpush1.msra.mxu0 %v3147
    %3149 = vmatprep.subr.mxu0 0.0
    %3150 = vmatpush1.msra.mxu0 0.0
    %3151 = vmatprep.subr.mxu0 0.0
    %3152 = vmatpush1.msra.mxu0 0.0
    %3153 = vmatprep.subr.mxu0 0.0
    %3154 = vmatpush1.msra.mxu0 0.0
    %3155 = vmatprep.subr.mxu0 0.0
    %3156 = vmatpush1.msra.mxu0 0.0
    %3157 = vmatprep.subr.mxu0 0.0
    %3158 = vmatpush1.msra.mxu0 0.0
    %3159 = vmatprep.subr.mxu0 0.0
    %3160 = vmatpush1.msra.mxu0 0.0
    %3161 = vmatprep.subr.mxu0 0.0
    %3162 = vmatpush1.msra.mxu0 0.0
    %3163 = vmatprep.subr.mxu0 0.0
    %3164 = vmatpush1.msra.mxu0 0.0
    %3165 = vmatprep.subr.mxu0 0.0
    %3166 = vmatpush1.msra.mxu0 0.0
    %3167 = vmatprep.subr.mxu0 0.0
    %3168 = vmatpush1.msra.mxu0 0.0
    %3169 = vmatprep.subr.mxu0 0.0
    %3170 = vmatpush1.msra.mxu0 0.0
    %3171 = vmatprep.subr.mxu0 0.0
    %3172 = vmatpush1.msra.mxu0 0.0
    %3173 = vmatprep.subr.mxu0 0.0
    %3174 = vmatpush1.msra.mxu0 0.0
    %3175 = vmatprep.subr.mxu0 0.0
    %3176 = vmatpush1.msra.mxu0 0.0
    %3177 = vmatprep.subr.mxu0 0.0
    %3178 = vmatpush1.msra.mxu0 0.0
    %3179 = vmatprep.subr.mxu0 0.0
    %3180 = vmatpush1.msra.mxu0 0.0
    %3181 = vmatprep.subr.mxu0 0.0
    %3182 = vmatpush1.msra.mxu0 0.0
    %3183 = vmatprep.subr.mxu0 0.0
    %3184 = vmatpush1.msra.mxu0 0.0
    %3185 = vmatprep.subr.mxu0 0.0
    %3186 = vmatpush1.msra.mxu0 0.0
    %3187 = vmatprep.subr.mxu0 0.0
    %3188 = vmatpush1.msra.mxu0 0.0
    %3189 = vmatprep.mubr.f32.mxu0 0.0
    %v3190 = vand.u32 %v3099, 4294901760
    %v3191 = vsub.f32 %v3099, %v3190
    %v3192 = vand.u32 %v3191, 4294901760
    %v3193 = vsub.f32 %v3191, %v3192
    %v3194 = vand.u32 %v3193, 4294901760
    %3195 = vmatmul.mubr.f32.gmra.mrb[0].mxu0 %v3194
    %v3196 = vpop.f32.mrb[0].mxu0
    %v3197 = vadd.f32 %v3090, %v3196
    %v3198 = vpop.f32.mrb[0].mxu0
    %v3199 = vadd.f32 %v3094, %v3198
    %3200 = vdwg.mxu0
    %v3201 = vand.u32 %v3062, 4294901760
    %v3202 = vsub.f32 %v3062, %v3201
    %v3203 = vand.u32 %v3202, 4294901760
    %v3204 = vsub.f32 %v3202, %v3203
    %v3205 = vand.u32 %v3204, 4294901760
    %3206 = vmatprep.subr.mxu0 %v3205
    %v3207 = vand.u32 %v3061, 4294901760
    %v3208 = vsub.f32 %v3061, %v3207
    %v3209 = vand.u32 %v3208, 4294901760
    %v3210 = vsub.f32 %v3208, %v3209
    %v3211 = vand.u32 %v3210, 4294901760
    %3212 = vmatpush1.msra.mxu0 %v3211
    %v3213 = vand.u32 %v3064, 4294901760
    %v3214 = vsub.f32 %v3064, %v3213
    %v3215 = vand.u32 %v3214, 4294901760
    %v3216 = vsub.f32 %v3214, %v3215
    %v3217 = vand.u32 %v3216, 4294901760
    %3218 = vmatprep.subr.mxu0 %v3217
    %v3219 = vand.u32 %v3063, 4294901760
    %v3220 = vsub.f32 %v3063, %v3219
    %v3221 = vand.u32 %v3220, 4294901760
    %v3222 = vsub.f32 %v3220, %v3221
    %v3223 = vand.u32 %v3222, 4294901760
    %3224 = vmatpush1.msra.mxu0 %v3223
    %v3225 = vand.u32 %v3066, 4294901760
    %v3226 = vsub.f32 %v3066, %v3225
    %v3227 = vand.u32 %v3226, 4294901760
    %v3228 = vsub.f32 %v3226, %v3227
    %v3229 = vand.u32 %v3228, 4294901760
    %3230 = vmatprep.subr.mxu0 %v3229
    %v3231 = vand.u32 %v3065, 4294901760
    %v3232 = vsub.f32 %v3065, %v3231
    %v3233 = vand.u32 %v3232, 4294901760
    %v3234 = vsub.f32 %v3232, %v3233
    %v3235 = vand.u32 %v3234, 4294901760
    %3236 = vmatpush1.msra.mxu0 %v3235
    %v3237 = vand.u32 %v3068, 4294901760
    %v3238 = vsub.f32 %v3068, %v3237
    %v3239 = vand.u32 %v3238, 4294901760
    %v3240 = vsub.f32 %v3238, %v3239
    %v3241 = vand.u32 %v3240, 4294901760
    %3242 = vmatprep.subr.mxu0 %v3241
    %v3243 = vand.u32 %v3067, 4294901760
    %v3244 = vsub.f32 %v3067, %v3243
    %v3245 = vand.u32 %v3244, 4294901760
    %v3246 = vsub.f32 %v3244, %v3245
    %v3247 = vand.u32 %v3246, 4294901760
    %3248 = vmatpush1.msra.mxu0 %v3247
    %v3249 = vand.u32 %v3070, 4294901760
    %v3250 = vsub.f32 %v3070, %v3249
    %v3251 = vand.u32 %v3250, 4294901760
    %v3252 = vsub.f32 %v3250, %v3251
    %v3253 = vand.u32 %v3252, 4294901760
    %3254 = vmatprep.subr.mxu0 %v3253
    %v3255 = vand.u32 %v3069, 4294901760
    %v3256 = vsub.f32 %v3069, %v3255
    %v3257 = vand.u32 %v3256, 4294901760
    %v3258 = vsub.f32 %v3256, %v3257
    %v3259 = vand.u32 %v3258, 4294901760
    %3260 = vmatpush1.msra.mxu0 %v3259
    %v3261 = vand.u32 %v3072, 4294901760
    %v3262 = vsub.f32 %v3072, %v3261
    %v3263 = vand.u32 %v3262, 4294901760
    %v3264 = vsub.f32 %v3262, %v3263
    %v3265 = vand.u32 %v3264, 4294901760
    %3266 = vmatprep.subr.mxu0 %v3265
    %v3267 = vand.u32 %v3071, 4294901760
    %v3268 = vsub.f32 %v3071, %v3267
    %v3269 = vand.u32 %v3268, 4294901760
    %v3270 = vsub.f32 %v3268, %v3269
    %v3271 = vand.u32 %v3270, 4294901760
    %3272 = vmatpush1.msra.mxu0 %v3271
    %v3273 = vand.u32 %v3074, 4294901760
    %v3274 = vsub.f32 %v3074, %v3273
    %v3275 = vand.u32 %v3274, 4294901760
    %v3276 = vsub.f32 %v3274, %v3275
    %v3277 = vand.u32 %v3276, 4294901760
    %3278 = vmatprep.subr.mxu0 %v3277
    %v3279 = vand.u32 %v3073, 4294901760
    %v3280 = vsub.f32 %v3073, %v3279
    %v3281 = vand.u32 %v3280, 4294901760
    %v3282 = vsub.f32 %v3280, %v3281
    %v3283 = vand.u32 %v3282, 4294901760
    %3284 = vmatpush1.msra.mxu0 %v3283
    %v3285 = vand.u32 %v3076, 4294901760
    %v3286 = vsub.f32 %v3076, %v3285
    %v3287 = vand.u32 %v3286, 4294901760
    %v3288 = vsub.f32 %v3286, %v3287
    %v3289 = vand.u32 %v3288, 4294901760
    %3290 = vmatprep.subr.mxu0 %v3289
    %v3291 = vand.u32 %v3075, 4294901760
    %v3292 = vsub.f32 %v3075, %v3291
    %v3293 = vand.u32 %v3292, 4294901760
    %v3294 = vsub.f32 %v3292, %v3293
    %v3295 = vand.u32 %v3294, 4294901760
    %3296 = vmatpush1.msra.mxu0 %v3295
    %v3297 = vand.u32 %v3078, 4294901760
    %v3298 = vsub.f32 %v3078, %v3297
    %v3299 = vand.u32 %v3298, 4294901760
    %v3300 = vsub.f32 %v3298, %v3299
    %v3301 = vand.u32 %v3300, 4294901760
    %3302 = vmatprep.subr.mxu0 %v3301
    %v3303 = vand.u32 %v3077, 4294901760
    %v3304 = vsub.f32 %v3077, %v3303
    %v3305 = vand.u32 %v3304, 4294901760
    %v3306 = vsub.f32 %v3304, %v3305
    %v3307 = vand.u32 %v3306, 4294901760
    %3308 = vmatpush1.msra.mxu0 %v3307
    %v3309 = vand.u32 %v3080, 4294901760
    %v3310 = vsub.f32 %v3080, %v3309
    %v3311 = vand.u32 %v3310, 4294901760
    %v3312 = vsub.f32 %v3310, %v3311
    %v3313 = vand.u32 %v3312, 4294901760
    %3314 = vmatprep.subr.mxu0 %v3313
    %v3315 = vand.u32 %v3079, 4294901760
    %v3316 = vsub.f32 %v3079, %v3315
    %v3317 = vand.u32 %v3316, 4294901760
    %v3318 = vsub.f32 %v3316, %v3317
    %v3319 = vand.u32 %v3318, 4294901760
    %3320 = vmatpush1.msra.mxu0 %v3319
    %v3321 = vand.u32 %v3082, 4294901760
    %v3322 = vsub.f32 %v3082, %v3321
    %v3323 = vand.u32 %v3322, 4294901760
    %v3324 = vsub.f32 %v3322, %v3323
    %v3325 = vand.u32 %v3324, 4294901760
    %3326 = vmatprep.subr.mxu0 %v3325
    %v3327 = vand.u32 %v3081, 4294901760
    %v3328 = vsub.f32 %v3081, %v3327
    %v3329 = vand.u32 %v3328, 4294901760
    %v3330 = vsub.f32 %v3328, %v3329
    %v3331 = vand.u32 %v3330, 4294901760
    %3332 = vmatpush1.msra.mxu0 %v3331
    %v3333 = vand.u32 %v3084, 4294901760
    %v3334 = vsub.f32 %v3084, %v3333
    %v3335 = vand.u32 %v3334, 4294901760
    %v3336 = vsub.f32 %v3334, %v3335
    %v3337 = vand.u32 %v3336, 4294901760
    %3338 = vmatprep.subr.mxu0 %v3337
    %v3339 = vand.u32 %v3083, 4294901760
    %v3340 = vsub.f32 %v3083, %v3339
    %v3341 = vand.u32 %v3340, 4294901760
    %v3342 = vsub.f32 %v3340, %v3341
    %v3343 = vand.u32 %v3342, 4294901760
    %3344 = vmatpush1.msra.mxu0 %v3343
    %3345 = vmatprep.subr.mxu0 0.0
    %3346 = vmatpush1.msra.mxu0 0.0
    %3347 = vmatprep.subr.mxu0 0.0
    %3348 = vmatpush1.msra.mxu0 0.0
    %3349 = vmatprep.subr.mxu0 0.0
    %3350 = vmatpush1.msra.mxu0 0.0
    %3351 = vmatprep.subr.mxu0 0.0
    %3352 = vmatpush1.msra.mxu0 0.0
    %3353 = vmatprep.subr.mxu0 0.0
    %3354 = vmatpush1.msra.mxu0 0.0
    %3355 = vmatprep.subr.mxu0 0.0
    %3356 = vmatpush1.msra.mxu0 0.0
    %3357 = vmatprep.subr.mxu0 0.0
    %3358 = vmatpush1.msra.mxu0 0.0
    %3359 = vmatprep.subr.mxu0 0.0
    %3360 = vmatpush1.msra.mxu0 0.0
    %3361 = vmatprep.subr.mxu0 0.0
    %3362 = vmatpush1.msra.mxu0 0.0
    %3363 = vmatprep.subr.mxu0 0.0
    %3364 = vmatpush1.msra.mxu0 0.0
    %3365 = vmatprep.subr.mxu0 0.0
    %3366 = vmatpush1.msra.mxu0 0.0
    %3367 = vmatprep.subr.mxu0 0.0
    %3368 = vmatpush1.msra.mxu0 0.0
    %3369 = vmatprep.subr.mxu0 0.0
    %3370 = vmatpush1.msra.mxu0 0.0
    %3371 = vmatprep.subr.mxu0 0.0
    %3372 = vmatpush1.msra.mxu0 0.0
    %3373 = vmatprep.subr.mxu0 0.0
    %3374 = vmatpush1.msra.mxu0 0.0
    %3375 = vmatprep.subr.mxu0 0.0
    %3376 = vmatpush1.msra.mxu0 0.0
    %3377 = vmatprep.subr.mxu0 0.0
    %3378 = vmatpush1.msra.mxu0 0.0
    %3379 = vmatprep.subr.mxu0 0.0
    %3380 = vmatpush1.msra.mxu0 0.0
    %3381 = vmatprep.subr.mxu0 0.0
    %3382 = vmatpush1.msra.mxu0 0.0
    %3383 = vmatprep.subr.mxu0 0.0
    %3384 = vmatpush1.msra.mxu0 0.0
    %3385 = vmatprep.mubr.f32.mxu0 0.0
    %v3386 = vand.u32 %v3099, 4294901760
    %3387 = vmatmul.mubr.f32.gmra.mrb[0].mxu0 %v3386
    %v3388 = vpop.f32.mrb[0].mxu0
    %v3389 = vadd.f32 %v3197, %v3388
    %v3390 = vpop.f32.mrb[0].mxu0
    %v3391 = vadd.f32 %v3199, %v3390
    %3392 = vdwg.mxu0
    %v3393 = vand.u32 %v3062, 4294901760
    %v3394 = vsub.f32 %v3062, %v3393
    %3395 = vmatprep.subr.mxu0 %v3394
    %v3396 = vand.u32 %v3061, 4294901760
    %v3397 = vsub.f32 %v3061, %v3396
    %3398 = vmatpush1.msra.mxu0 %v3397
    %v3399 = vand.u32 %v3064, 4294901760
    %v3400 = vsub.f32 %v3064, %v3399
    %3401 = vmatprep.subr.mxu0 %v3400
    %v3402 = vand.u32 %v3063, 4294901760
    %v3403 = vsub.f32 %v3063, %v3402
    %3404 = vmatpush1.msra.mxu0 %v3403
    %v3405 = vand.u32 %v3066, 4294901760
    %v3406 = vsub.f32 %v3066, %v3405
    %3407 = vmatprep.subr.mxu0 %v3406
    %v3408 = vand.u32 %v3065, 4294901760
    %v3409 = vsub.f32 %v3065, %v3408
    %3410 = vmatpush1.msra.mxu0 %v3409
    %v3411 = vand.u32 %v3068, 4294901760
    %v3412 = vsub.f32 %v3068, %v3411
    %3413 = vmatprep.subr.mxu0 %v3412
    %v3414 = vand.u32 %v3067, 4294901760
    %v3415 = vsub.f32 %v3067, %v3414
    %3416 = vmatpush1.msra.mxu0 %v3415
    %v3417 = vand.u32 %v3070, 4294901760
    %v3418 = vsub.f32 %v3070, %v3417
    %3419 = vmatprep.subr.mxu0 %v3418
    %v3420 = vand.u32 %v3069, 4294901760
    %v3421 = vsub.f32 %v3069, %v3420
    %3422 = vmatpush1.msra.mxu0 %v3421
    %v3423 = vand.u32 %v3072, 4294901760
    %v3424 = vsub.f32 %v3072, %v3423
    %3425 = vmatprep.subr.mxu0 %v3424
    %v3426 = vand.u32 %v3071, 4294901760
    %v3427 = vsub.f32 %v3071, %v3426
    %3428 = vmatpush1.msra.mxu0 %v3427
    %v3429 = vand.u32 %v3074, 4294901760
    %v3430 = vsub.f32 %v3074, %v3429
    %3431 = vmatprep.subr.mxu0 %v3430
    %v3432 = vand.u32 %v3073, 4294901760
    %v3433 = vsub.f32 %v3073, %v3432
    %3434 = vmatpush1.msra.mxu0 %v3433
    %v3435 = vand.u32 %v3076, 4294901760
    %v3436 = vsub.f32 %v3076, %v3435
    %3437 = vmatprep.subr.mxu0 %v3436
    %v3438 = vand.u32 %v3075, 4294901760
    %v3439 = vsub.f32 %v3075, %v3438
    %3440 = vmatpush1.msra.mxu0 %v3439
    %v3441 = vand.u32 %v3078, 4294901760
    %v3442 = vsub.f32 %v3078, %v3441
    %3443 = vmatprep.subr.mxu0 %v3442
    %v3444 = vand.u32 %v3077, 4294901760
    %v3445 = vsub.f32 %v3077, %v3444
    %3446 = vmatpush1.msra.mxu0 %v3445
    %v3447 = vand.u32 %v3080, 4294901760
    %v3448 = vsub.f32 %v3080, %v3447
    %3449 = vmatprep.subr.mxu0 %v3448
    %v3450 = vand.u32 %v3079, 4294901760
    %v3451 = vsub.f32 %v3079, %v3450
    %3452 = vmatpush1.msra.mxu0 %v3451
    %v3453 = vand.u32 %v3082, 4294901760
    %v3454 = vsub.f32 %v3082, %v3453
    %3455 = vmatprep.subr.mxu0 %v3454
    %v3456 = vand.u32 %v3081, 4294901760
    %v3457 = vsub.f32 %v3081, %v3456
    %3458 = vmatpush1.msra.mxu0 %v3457
    %v3459 = vand.u32 %v3084, 4294901760
    %v3460 = vsub.f32 %v3084, %v3459
    %3461 = vmatprep.subr.mxu0 %v3460
    %v3462 = vand.u32 %v3083, 4294901760
    %v3463 = vsub.f32 %v3083, %v3462
    %3464 = vmatpush1.msra.mxu0 %v3463
    %3465 = vmatprep.subr.mxu0 0.0
    %3466 = vmatpush1.msra.mxu0 0.0
    %3467 = vmatprep.subr.mxu0 0.0
    %3468 = vmatpush1.msra.mxu0 0.0
    %3469 = vmatprep.subr.mxu0 0.0
    %3470 = vmatpush1.msra.mxu0 0.0
    %3471 = vmatprep.subr.mxu0 0.0
    %3472 = vmatpush1.msra.mxu0 0.0
    %3473 = vmatprep.subr.mxu0 0.0
    %3474 = vmatpush1.msra.mxu0 0.0
    %3475 = vmatprep.subr.mxu0 0.0
    %3476 = vmatpush1.msra.mxu0 0.0
    %3477 = vmatprep.subr.mxu0 0.0
    %3478 = vmatpush1.msra.mxu0 0.0
    %3479 = vmatprep.subr.mxu0 0.0
    %3480 = vmatpush1.msra.mxu0 0.0
    %3481 = vmatprep.subr.mxu0 0.0
    %3482 = vmatpush1.msra.mxu0 0.0
    %3483 = vmatprep.subr.mxu0 0.0
    %3484 = vmatpush1.msra.mxu0 0.0
    %3485 = vmatprep.subr.mxu0 0.0
    %3486 = vmatpush1.msra.mxu0 0.0
    %3487 = vmatprep.subr.mxu0 0.0
    %3488 = vmatpush1.msra.mxu0 0.0
    %3489 = vmatprep.subr.mxu0 0.0
    %3490 = vmatpush1.msra.mxu0 0.0
    %3491 = vmatprep.subr.mxu0 0.0
    %3492 = vmatpush1.msra.mxu0 0.0
    %3493 = vmatprep.subr.mxu0 0.0
    %3494 = vmatpush1.msra.mxu0 0.0
    %3495 = vmatprep.subr.mxu0 0.0
    %3496 = vmatpush1.msra.mxu0 0.0
    %3497 = vmatprep.subr.mxu0 0.0
    %3498 = vmatpush1.msra.mxu0 0.0
    %3499 = vmatprep.subr.mxu0 0.0
    %3500 = vmatpush1.msra.mxu0 0.0
    %3501 = vmatprep.subr.mxu0 0.0
    %3502 = vmatpush1.msra.mxu0 0.0
    %3503 = vmatprep.subr.mxu0 0.0
    %3504 = vmatpush1.msra.mxu0 0.0
    %3505 = vmatprep.mubr.f32.mxu0 0.0
    %v3506 = vand.u32 %v3099, 4294901760
    %v3507 = vsub.f32 %v3099, %v3506
    %3508 = vmatmul.mubr.f32.gmra.mrb[0].mxu0 %v3507
    %v3509 = vpop.f32.mrb[0].mxu0
    %v3510 = vadd.f32 %v3389, %v3509
    %v3511 = vpop.f32.mrb[0].mxu0
    %v3512 = vadd.f32 %v3391, %v3511
    %3513 = vdwg.mxu0
    %v3514 = vand.u32 %v3062, 4294901760
    %3515 = vmatprep.subr.mxu0 %v3514
    %v3516 = vand.u32 %v3061, 4294901760
    %3517 = vmatpush1.msra.mxu0 %v3516
    %v3518 = vand.u32 %v3064, 4294901760
    %3519 = vmatprep.subr.mxu0 %v3518
    %v3520 = vand.u32 %v3063, 4294901760
    %3521 = vmatpush1.msra.mxu0 %v3520
    %v3522 = vand.u32 %v3066, 4294901760
    %3523 = vmatprep.subr.mxu0 %v3522
    %v3524 = vand.u32 %v3065, 4294901760
    %3525 = vmatpush1.msra.mxu0 %v3524
    %v3526 = vand.u32 %v3068, 4294901760
    %3527 = vmatprep.subr.mxu0 %v3526
    %v3528 = vand.u32 %v3067, 4294901760
    %3529 = vmatpush1.msra.mxu0 %v3528
    %v3530 = vand.u32 %v3070, 4294901760
    %3531 = vmatprep.subr.mxu0 %v3530
    %v3532 = vand.u32 %v3069, 4294901760
    %3533 = vmatpush1.msra.mxu0 %v3532
    %v3534 = vand.u32 %v3072, 4294901760
    %3535 = vmatprep.subr.mxu0 %v3534
    %v3536 = vand.u32 %v3071, 4294901760
    %3537 = vmatpush1.msra.mxu0 %v3536
    %v3538 = vand.u32 %v3074, 4294901760
    %3539 = vmatprep.subr.mxu0 %v3538
    %v3540 = vand.u32 %v3073, 4294901760
    %3541 = vmatpush1.msra.mxu0 %v3540
    %v3542 = vand.u32 %v3076, 4294901760
    %3543 = vmatprep.subr.mxu0 %v3542
    %v3544 = vand.u32 %v3075, 4294901760
    %3545 = vmatpush1.msra.mxu0 %v3544
    %v3546 = vand.u32 %v3078, 4294901760
    %3547 = vmatprep.subr.mxu0 %v3546
    %v3548 = vand.u32 %v3077, 4294901760
    %3549 = vmatpush1.msra.mxu0 %v3548
    %v3550 = vand.u32 %v3080, 4294901760
    %3551 = vmatprep.subr.mxu0 %v3550
    %v3552 = vand.u32 %v3079, 4294901760
    %3553 = vmatpush1.msra.mxu0 %v3552
    %v3554 = vand.u32 %v3082, 4294901760
    %3555 = vmatprep.subr.mxu0 %v3554
    %v3556 = vand.u32 %v3081, 4294901760
    %3557 = vmatpush1.msra.mxu0 %v3556
    %v3558 = vand.u32 %v3084, 4294901760
    %3559 = vmatprep.subr.mxu0 %v3558
    %v3560 = vand.u32 %v3083, 4294901760
    %3561 = vmatpush1.msra.mxu0 %v3560
    %3562 = vmatprep.subr.mxu0 0.0
    %3563 = vmatpush1.msra.mxu0 0.0
    %3564 = vmatprep.subr.mxu0 0.0
    %3565 = vmatpush1.msra.mxu0 0.0
    %3566 = vmatprep.subr.mxu0 0.0
    %3567 = vmatpush1.msra.mxu0 0.0
    %3568 = vmatprep.subr.mxu0 0.0
    %3569 = vmatpush1.msra.mxu0 0.0
    %3570 = vmatprep.subr.mxu0 0.0
    %3571 = vmatpush1.msra.mxu0 0.0
    %3572 = vmatprep.subr.mxu0 0.0
    %3573 = vmatpush1.msra.mxu0 0.0
    %3574 = vmatprep.subr.mxu0 0.0
    %3575 = vmatpush1.msra.mxu0 0.0
    %3576 = vmatprep.subr.mxu0 0.0
    %3577 = vmatpush1.msra.mxu0 0.0
    %3578 = vmatprep.subr.mxu0 0.0
    %3579 = vmatpush1.msra.mxu0 0.0
    %3580 = vmatprep.subr.mxu0 0.0
    %3581 = vmatpush1.msra.mxu0 0.0
    %3582 = vmatprep.subr.mxu0 0.0
    %3583 = vmatpush1.msra.mxu0 0.0
    %3584 = vmatprep.subr.mxu0 0.0
    %3585 = vmatpush1.msra.mxu0 0.0
    %3586 = vmatprep.subr.mxu0 0.0
    %3587 = vmatpush1.msra.mxu0 0.0
    %3588 = vmatprep.subr.mxu0 0.0
    %3589 = vmatpush1.msra.mxu0 0.0
    %3590 = vmatprep.subr.mxu0 0.0
    %3591 = vmatpush1.msra.mxu0 0.0
    %3592 = vmatprep.subr.mxu0 0.0
    %3593 = vmatpush1.msra.mxu0 0.0
    %3594 = vmatprep.subr.mxu0 0.0
    %3595 = vmatpush1.msra.mxu0 0.0
    %3596 = vmatprep.subr.mxu0 0.0
    %3597 = vmatpush1.msra.mxu0 0.0
    %3598 = vmatprep.subr.mxu0 0.0
    %3599 = vmatpush1.msra.mxu0 0.0
    %3600 = vmatprep.subr.mxu0 0.0
    %3601 = vmatpush1.msra.mxu0 0.0
    %3602 = vmatprep.mubr.f32.mxu0 0.0
    %v3603 = vand.u32 %v3099, 4294901760
    %v3604 = vsub.f32 %v3099, %v3603
    %v3605 = vand.u32 %v3604, 4294901760
    %3606 = vmatmul.mubr.f32.gmra.mrb[0].mxu0 %v3605
    %v3607 = vpop.f32.mrb[0].mxu0
    %v3608 = vadd.f32 %v3510, %v3607
    %v3609 = vpop.f32.mrb[0].mxu0
    %v3610 = vadd.f32 %v3512, %v3609
    %3611 = vdwg.mxu0
    %v3612 = vand.u32 %v3062, 4294901760
    %v3613 = vsub.f32 %v3062, %v3612
    %v3614 = vand.u32 %v3613, 4294901760
    %3615 = vmatprep.subr.mxu0 %v3614
    %v3616 = vand.u32 %v3061, 4294901760
    %v3617 = vsub.f32 %v3061, %v3616
    %v3618 = vand.u32 %v3617, 4294901760
    %3619 = vmatpush1.msra.mxu0 %v3618
    %v3620 = vand.u32 %v3064, 4294901760
    %v3621 = vsub.f32 %v3064, %v3620
    %v3622 = vand.u32 %v3621, 4294901760
    %3623 = vmatprep.subr.mxu0 %v3622
    %v3624 = vand.u32 %v3063, 4294901760
    %v3625 = vsub.f32 %v3063, %v3624
    %v3626 = vand.u32 %v3625, 4294901760
    %3627 = vmatpush1.msra.mxu0 %v3626
    %v3628 = vand.u32 %v3066, 4294901760
    %v3629 = vsub.f32 %v3066, %v3628
    %v3630 = vand.u32 %v3629, 4294901760
    %3631 = vmatprep.subr.mxu0 %v3630
    %v3632 = vand.u32 %v3065, 4294901760
    %v3633 = vsub.f32 %v3065, %v3632
    %v3634 = vand.u32 %v3633, 4294901760
    %3635 = vmatpush1.msra.mxu0 %v3634
    %v3636 = vand.u32 %v3068, 4294901760
    %v3637 = vsub.f32 %v3068, %v3636
    %v3638 = vand.u32 %v3637, 4294901760
    %3639 = vmatprep.subr.mxu0 %v3638
    %v3640 = vand.u32 %v3067, 4294901760
    %v3641 = vsub.f32 %v3067, %v3640
    %v3642 = vand.u32 %v3641, 4294901760
    %3643 = vmatpush1.msra.mxu0 %v3642
    %v3644 = vand.u32 %v3070, 4294901760
    %v3645 = vsub.f32 %v3070, %v3644
    %v3646 = vand.u32 %v3645, 4294901760
    %3647 = vmatprep.subr.mxu0 %v3646
    %v3648 = vand.u32 %v3069, 4294901760
    %v3649 = vsub.f32 %v3069, %v3648
    %v3650 = vand.u32 %v3649, 4294901760
    %3651 = vmatpush1.msra.mxu0 %v3650
    %v3652 = vand.u32 %v3072, 4294901760
    %v3653 = vsub.f32 %v3072, %v3652
    %v3654 = vand.u32 %v3653, 4294901760
    %3655 = vmatprep.subr.mxu0 %v3654
    %v3656 = vand.u32 %v3071, 4294901760
    %v3657 = vsub.f32 %v3071, %v3656
    %v3658 = vand.u32 %v3657, 4294901760
    %3659 = vmatpush1.msra.mxu0 %v3658
    %v3660 = vand.u32 %v3074, 4294901760
    %v3661 = vsub.f32 %v3074, %v3660
    %v3662 = vand.u32 %v3661, 4294901760
    %3663 = vmatprep.subr.mxu0 %v3662
    %v3664 = vand.u32 %v3073, 4294901760
    %v3665 = vsub.f32 %v3073, %v3664
    %v3666 = vand.u32 %v3665, 4294901760
    %3667 = vmatpush1.msra.mxu0 %v3666
    %v3668 = vand.u32 %v3076, 4294901760
    %v3669 = vsub.f32 %v3076, %v3668
    %v3670 = vand.u32 %v3669, 4294901760
    %3671 = vmatprep.subr.mxu0 %v3670
    %v3672 = vand.u32 %v3075, 4294901760
    %v3673 = vsub.f32 %v3075, %v3672
    %v3674 = vand.u32 %v3673, 4294901760
    %3675 = vmatpush1.msra.mxu0 %v3674
    %v3676 = vand.u32 %v3078, 4294901760
    %v3677 = vsub.f32 %v3078, %v3676
    %v3678 = vand.u32 %v3677, 4294901760
    %3679 = vmatprep.subr.mxu0 %v3678
    %v3680 = vand.u32 %v3077, 4294901760
    %v3681 = vsub.f32 %v3077, %v3680
    %v3682 = vand.u32 %v3681, 4294901760
    %3683 = vmatpush1.msra.mxu0 %v3682
    %v3684 = vand.u32 %v3080, 4294901760
    %v3685 = vsub.f32 %v3080, %v3684
    %v3686 = vand.u32 %v3685, 4294901760
    %3687 = vmatprep.subr.mxu0 %v3686
    %v3688 = vand.u32 %v3079, 4294901760
    %v3689 = vsub.f32 %v3079, %v3688
    %v3690 = vand.u32 %v3689, 4294901760
    %3691 = vmatpush1.msra.mxu0 %v3690
    %v3692 = vand.u32 %v3082, 4294901760
    %v3693 = vsub.f32 %v3082, %v3692
    %v3694 = vand.u32 %v3693, 4294901760
    %3695 = vmatprep.subr.mxu0 %v3694
    %v3696 = vand.u32 %v3081, 4294901760
    %v3697 = vsub.f32 %v3081, %v3696
    %v3698 = vand.u32 %v3697, 4294901760
    %3699 = vmatpush1.msra.mxu0 %v3698
    %v3700 = vand.u32 %v3084, 4294901760
    %v3701 = vsub.f32 %v3084, %v3700
    %v3702 = vand.u32 %v3701, 4294901760
    %3703 = vmatprep.subr.mxu0 %v3702
    %v3704 = vand.u32 %v3083, 4294901760
    %v3705 = vsub.f32 %v3083, %v3704
    %v3706 = vand.u32 %v3705, 4294901760
    %3707 = vmatpush1.msra.mxu0 %v3706
    %3708 = vmatprep.subr.mxu0 0.0
    %3709 = vmatpush1.msra.mxu0 0.0
    %3710 = vmatprep.subr.mxu0 0.0
    %3711 = vmatpush1.msra.mxu0 0.0
    %3712 = vmatprep.subr.mxu0 0.0
    %3713 = vmatpush1.msra.mxu0 0.0
    %3714 = vmatprep.subr.mxu0 0.0
    %3715 = vmatpush1.msra.mxu0 0.0
    %3716 = vmatprep.subr.mxu0 0.0
    %3717 = vmatpush1.msra.mxu0 0.0
    %3718 = vmatprep.subr.mxu0 0.0
    %3719 = vmatpush1.msra.mxu0 0.0
    %3720 = vmatprep.subr.mxu0 0.0
    %3721 = vmatpush1.msra.mxu0 0.0
    %3722 = vmatprep.subr.mxu0 0.0
    %3723 = vmatpush1.msra.mxu0 0.0
    %3724 = vmatprep.subr.mxu0 0.0
    %3725 = vmatpush1.msra.mxu0 0.0
    %3726 = vmatprep.subr.mxu0 0.0
    %3727 = vmatpush1.msra.mxu0 0.0
    %3728 = vmatprep.subr.mxu0 0.0
    %3729 = vmatpush1.msra.mxu0 0.0
    %3730 = vmatprep.subr.mxu0 0.0
    %3731 = vmatpush1.msra.mxu0 0.0
    %3732 = vmatprep.subr.mxu0 0.0
    %3733 = vmatpush1.msra.mxu0 0.0
    %3734 = vmatprep.subr.mxu0 0.0
    %3735 = vmatpush1.msra.mxu0 0.0
    %3736 = vmatprep.subr.mxu0 0.0
    %3737 = vmatpush1.msra.mxu0 0.0
    %3738 = vmatprep.subr.mxu0 0.0
    %3739 = vmatpush1.msra.mxu0 0.0
    %3740 = vmatprep.subr.mxu0 0.0
    %3741 = vmatpush1.msra.mxu0 0.0
    %3742 = vmatprep.subr.mxu0 0.0
    %3743 = vmatpush1.msra.mxu0 0.0
    %3744 = vmatprep.subr.mxu0 0.0
    %3745 = vmatpush1.msra.mxu0 0.0
    %3746 = vmatprep.subr.mxu0 0.0
    %3747 = vmatpush1.msra.mxu0 0.0
    %3748 = vmatprep.mubr.f32.mxu0 0.0
    %v3749 = vand.u32 %v3099, 4294901760
    %3750 = vmatmul.mubr.f32.gmra.mrb[0].mxu0 %v3749
    %v3751 = vpop.f32.mrb[0].mxu0
    %v3752 = vadd.f32 %v3608, %v3751
    %v3753 = vpop.f32.mrb[0].mxu0
    %v3754 = vadd.f32 %v3610, %v3753
    %3755 = vdwg.mxu0
    %v3756 = vand.u32 %v3062, 4294901760
    %3757 = vmatprep.subr.mxu0 %v3756
    %v3758 = vand.u32 %v3061, 4294901760
    %3759 = vmatpush1.msra.mxu0 %v3758
    %v3760 = vand.u32 %v3064, 4294901760
    %3761 = vmatprep.subr.mxu0 %v3760
    %v3762 = vand.u32 %v3063, 4294901760
    %3763 = vmatpush1.msra.mxu0 %v3762
    %v3764 = vand.u32 %v3066, 4294901760
    %3765 = vmatprep.subr.mxu0 %v3764
    %v3766 = vand.u32 %v3065, 4294901760
    %3767 = vmatpush1.msra.mxu0 %v3766
    %v3768 = vand.u32 %v3068, 4294901760
    %3769 = vmatprep.subr.mxu0 %v3768
    %v3770 = vand.u32 %v3067, 4294901760
    %3771 = vmatpush1.msra.mxu0 %v3770
    %v3772 = vand.u32 %v3070, 4294901760
    %3773 = vmatprep.subr.mxu0 %v3772
    %v3774 = vand.u32 %v3069, 4294901760
    %3775 = vmatpush1.msra.mxu0 %v3774
    %v3776 = vand.u32 %v3072, 4294901760
    %3777 = vmatprep.subr.mxu0 %v3776
    %v3778 = vand.u32 %v3071, 4294901760
    %3779 = vmatpush1.msra.mxu0 %v3778
    %v3780 = vand.u32 %v3074, 4294901760
    %3781 = vmatprep.subr.mxu0 %v3780
    %v3782 = vand.u32 %v3073, 4294901760
    %3783 = vmatpush1.msra.mxu0 %v3782
    %v3784 = vand.u32 %v3076, 4294901760
    %3785 = vmatprep.subr.mxu0 %v3784
    %v3786 = vand.u32 %v3075, 4294901760
    %3787 = vmatpush1.msra.mxu0 %v3786
    %v3788 = vand.u32 %v3078, 4294901760
    %3789 = vmatprep.subr.mxu0 %v3788
    %v3790 = vand.u32 %v3077, 4294901760
    %3791 = vmatpush1.msra.mxu0 %v3790
    %v3792 = vand.u32 %v3080, 4294901760
    %3793 = vmatprep.subr.mxu0 %v3792
    %v3794 = vand.u32 %v3079, 4294901760
    %3795 = vmatpush1.msra.mxu0 %v3794
    %v3796 = vand.u32 %v3082, 4294901760
    %3797 = vmatprep.subr.mxu0 %v3796
    %v3798 = vand.u32 %v3081, 4294901760
    %3799 = vmatpush1.msra.mxu0 %v3798
    %v3800 = vand.u32 %v3084, 4294901760
    %3801 = vmatprep.subr.mxu0 %v3800
    %v3802 = vand.u32 %v3083, 4294901760
    %3803 = vmatpush1.msra.mxu0 %v3802
    %3804 = vmatprep.subr.mxu0 0.0
    %3805 = vmatpush1.msra.mxu0 0.0
    %3806 = vmatprep.subr.mxu0 0.0
    %3807 = vmatpush1.msra.mxu0 0.0
    %3808 = vmatprep.subr.mxu0 0.0
    %3809 = vmatpush1.msra.mxu0 0.0
    %3810 = vmatprep.subr.mxu0 0.0
    %3811 = vmatpush1.msra.mxu0 0.0
    %3812 = vmatprep.subr.mxu0 0.0
    %3813 = vmatpush1.msra.mxu0 0.0
    %3814 = vmatprep.subr.mxu0 0.0
    %3815 = vmatpush1.msra.mxu0 0.0
    %3816 = vmatprep.subr.mxu0 0.0
    %3817 = vmatpush1.msra.mxu0 0.0
    %3818 = vmatprep.subr.mxu0 0.0
    %3819 = vmatpush1.msra.mxu0 0.0
    %3820 = vmatprep.subr.mxu0 0.0
    %3821 = vmatpush1.msra.mxu0 0.0
    %3822 = vmatprep.subr.mxu0 0.0
    %3823 = vmatpush1.msra.mxu0 0.0
    %3824 = vmatprep.subr.mxu0 0.0
    %3825 = vmatpush1.msra.mxu0 0.0
    %3826 = vmatprep.subr.mxu0 0.0
    %3827 = vmatpush1.msra.mxu0 0.0
    %3828 = vmatprep.subr.mxu0 0.0
    %3829 = vmatpush1.msra.mxu0 0.0
    %3830 = vmatprep.subr.mxu0 0.0
    %3831 = vmatpush1.msra.mxu0 0.0
    %3832 = vmatprep.subr.mxu0 0.0
    %3833 = vmatpush1.msra.mxu0 0.0
    %3834 = vmatprep.subr.mxu0 0.0
    %3835 = vmatpush1.msra.mxu0 0.0
    %3836 = vmatprep.subr.mxu0 0.0
    %3837 = vmatpush1.msra.mxu0 0.0
    %3838 = vmatprep.subr.mxu0 0.0
    %3839 = vmatpush1.msra.mxu0 0.0
    %3840 = vmatprep.subr.mxu0 0.0
    %3841 = vmatpush1.msra.mxu0 0.0
    %3842 = vmatprep.subr.mxu0 0.0
    %3843 = vmatpush1.msra.mxu0 0.0
    %3844 = vmatprep.mubr.f32.mxu0 0.0
    %v3845 = vand.u32 %v3099, 4294901760
    %3846 = vmatmul.mubr.f32.gmra.mrb[0].mxu0 %v3845
    %v3847 = vpop.f32.mrb[0].mxu0
    %v3848 = vadd.f32 %v3752, %v3847
    %v3849 = vpop.f32.mrb[0].mxu0
    %v3850 = vadd.f32 %v3754, %v3849
    %3851 = vdwg.mxu0
    %v3852 = vld [vmem:[#allocation8] sm:$0xff]
    %v3853 = vld [vmem:[#allocation8 + $0x8] sm:$0xff]
    %v3854 = vld [vmem:[#allocation8 + $0x10] sm:$0xff]
    %v3855 = vld [vmem:[#allocation8 + $0x18] sm:$0xff]
    %v3856 = vld [vmem:[#allocation8 + $0x20] sm:$0xff]
    %v3857 = vld [vmem:[#allocation8 + $0x28] sm:$0xff]
    %v3858 = vld [vmem:[#allocation8 + $0x30] sm:$0xff]
    %v3859 = vld [vmem:[#allocation8 + $0x38] sm:$0xff]
    %v3860 = vld [vmem:[#allocation8 + $0x40] sm:$0xff]
    %v3861 = vld [vmem:[#allocation8 + $0x48] sm:$0xff]
    %v3862 = vld [vmem:[#allocation8 + $0x50] sm:$0xff]
    %v3863 = vld [vmem:[#allocation8 + $0x58] sm:$0xff]
    %v3864 = vld [vmem:[#allocation8 + $0x60] sm:$0xff]
    %v3865 = vld [vmem:[#allocation8 + $0x68] sm:$0xff]
    %v3866 = vld [vmem:[#allocation8 + $0x70] sm:$0xff]
    %v3867 = vld [vmem:[#allocation8 + $0x78] sm:$0xff]
    %v3868 = vld [vmem:[%s11] sm:$0x3]
    %v3870 = vlaneseq
    %v3871 = vshrl.u32 %v3870, 7
    %v3872 = vsub.s32 0, %v3871
    %v3873 = vrot.slane %v3868, %v3872
    %v3874 = vlaneseq
    %v3875 = vshrl.u32 %v3874, 7
    %v3876 = vsub.s32 1, %v3875
    %v3877 = vrot.slane %v3868, %v3876
    %v3880 = vand.u32 %v3853, 4294901760
    %3881 = vmatprep.subr.mxu0 %v3880
    %v3882 = vand.u32 %v3852, 4294901760
    %3883 = vmatpush1.msra.mxu0 %v3882
    %v3884 = vand.u32 %v3855, 4294901760
    %3885 = vmatprep.subr.mxu0 %v3884
    %v3886 = vand.u32 %v3854, 4294901760
    %3887 = vmatpush1.msra.mxu0 %v3886
    %v3888 = vand.u32 %v3857, 4294901760
    %3889 = vmatprep.subr.mxu0 %v3888
    %v3890 = vand.u32 %v3856, 4294901760
    %3891 = vmatpush1.msra.mxu0 %v3890
    %v3892 = vand.u32 %v3859, 4294901760
    %3893 = vmatprep.subr.mxu0 %v3892
    %v3894 = vand.u32 %v3858, 4294901760
    %3895 = vmatpush1.msra.mxu0 %v3894
    %v3896 = vand.u32 %v3861, 4294901760
    %3897 = vmatprep.subr.mxu0 %v3896
    %v3898 = vand.u32 %v3860, 4294901760
    %3899 = vmatpush1.msra.mxu0 %v3898
    %v3900 = vand.u32 %v3863, 4294901760
    %3901 = vmatprep.subr.mxu0 %v3900
    %v3902 = vand.u32 %v3862, 4294901760
    %3903 = vmatpush1.msra.mxu0 %v3902
    %v3904 = vand.u32 %v3865, 4294901760
    %3905 = vmatprep.subr.mxu0 %v3904
    %v3906 = vand.u32 %v3864, 4294901760
    %3907 = vmatpush1.msra.mxu0 %v3906
    %v3908 = vand.u32 %v3867, 4294901760
    %3909 = vmatprep.subr.mxu0 %v3908
    %v3910 = vand.u32 %v3866, 4294901760
    %3911 = vmatpush1.msra.mxu0 %v3910
    %3912 = vmatprep.subr.mxu0 0.0
    %3913 = vmatpush1.msra.mxu0 0.0
    %3914 = vmatprep.subr.mxu0 0.0
    %3915 = vmatpush1.msra.mxu0 0.0
    %3916 = vmatprep.subr.mxu0 0.0
    %3917 = vmatpush1.msra.mxu0 0.0
    %3918 = vmatprep.subr.mxu0 0.0
    %3919 = vmatpush1.msra.mxu0 0.0
    %3920 = vmatprep.subr.mxu0 0.0
    %3921 = vmatpush1.msra.mxu0 0.0
    %3922 = vmatprep.subr.mxu0 0.0
    %3923 = vmatpush1.msra.mxu0 0.0
    %3924 = vmatprep.subr.mxu0 0.0
    %3925 = vmatpush1.msra.mxu0 0.0
    %3926 = vmatprep.subr.mxu0 0.0
    %3927 = vmatpush1.msra.mxu0 0.0
    %3928 = vmatprep.subr.mxu0 0.0
    %3929 = vmatpush1.msra.mxu0 0.0
    %3930 = vmatprep.subr.mxu0 0.0
    %3931 = vmatpush1.msra.mxu0 0.0
    %3932 = vmatprep.subr.mxu0 0.0
    %3933 = vmatpush1.msra.mxu0 0.0
    %3934 = vmatprep.subr.mxu0 0.0
    %3935 = vmatpush1.msra.mxu0 0.0
    %3936 = vmatprep.subr.mxu0 0.0
    %3937 = vmatpush1.msra.mxu0 0.0
    %3938 = vmatprep.subr.mxu0 0.0
    %3939 = vmatpush1.msra.mxu0 0.0
    %3940 = vmatprep.subr.mxu0 0.0
    %3941 = vmatpush1.msra.mxu0 0.0
    %3942 = vmatprep.subr.mxu0 0.0
    %3943 = vmatpush1.msra.mxu0 0.0
    %3944 = vmatprep.subr.mxu0 0.0
    %3945 = vmatpush1.msra.mxu0 0.0
    %3946 = vmatprep.subr.mxu0 0.0
    %3947 = vmatpush1.msra.mxu0 0.0
    %3948 = vmatprep.subr.mxu0 0.0
    %3949 = vmatpush1.msra.mxu0 0.0
    %3950 = vmatprep.subr.mxu0 0.0
    %3951 = vmatpush1.msra.mxu0 0.0
    %3952 = vmatprep.subr.mxu0 0.0
    %3953 = vmatpush1.msra.mxu0 0.0
    %3954 = vmatprep.subr.mxu0 0.0
    %3955 = vmatpush1.msra.mxu0 0.0
    %3956 = vmatprep.subr.mxu0 0.0
    %3957 = vmatpush1.msra.mxu0 0.0
    %3958 = vmatprep.subr.mxu0 0.0
    %3959 = vmatpush1.msra.mxu0 0.0
    %3960 = vmatprep.mubr.f32.mxu0 0.0
    %v3961 = vand.u32 %v1503, 4294901760
    %v3962 = vsub.f32 %v1503, %v3961
    %v3963 = vand.u32 %v3962, 4294901760
    %v3964 = vsub.f32 %v3962, %v3963
    %v3965 = vand.u32 %v3964, 4294901760
    %3966 = vmatmul.mubr.f32.gmra.mrb[0].mxu0 %v3965
    %v3967 = vpop.f32.mrb[0].mxu0
    %v3968 = vadd.f32 %v3873, %v3967
    %v3969 = vpop.f32.mrb[0].mxu0
    %v3970 = vadd.f32 %v3877, %v3969
    %3971 = vdwg.mxu0
    %v3972 = vand.u32 %v3853, 4294901760
    %v3973 = vsub.f32 %v3853, %v3972
    %v3974 = vand.u32 %v3973, 4294901760
    %v3975 = vsub.f32 %v3973, %v3974
    %v3976 = vand.u32 %v3975, 4294901760
    %3977 = vmatprep.subr.mxu0 %v3976
    %v3978 = vand.u32 %v3852, 4294901760
    %v3979 = vsub.f32 %v3852, %v3978
    %v3980 = vand.u32 %v3979, 4294901760
    %v3981 = vsub.f32 %v3979, %v3980
    %v3982 = vand.u32 %v3981, 4294901760
    %3983 = vmatpush1.msra.mxu0 %v3982
    %v3984 = vand.u32 %v3855, 4294901760
    %v3985 = vsub.f32 %v3855, %v3984
    %v3986 = vand.u32 %v3985, 4294901760
    %v3987 = vsub.f32 %v3985, %v3986
    %v3988 = vand.u32 %v3987, 4294901760
    %3989 = vmatprep.subr.mxu0 %v3988
    %v3990 = vand.u32 %v3854, 4294901760
    %v3991 = vsub.f32 %v3854, %v3990
    %v3992 = vand.u32 %v3991, 4294901760
    %v3993 = vsub.f32 %v3991, %v3992
    %v3994 = vand.u32 %v3993, 4294901760
    %3995 = vmatpush1.msra.mxu0 %v3994
    %v3996 = vand.u32 %v3857, 4294901760
    %v3997 = vsub.f32 %v3857, %v3996
    %v3998 = vand.u32 %v3997, 4294901760
    %v3999 = vsub.f32 %v3997, %v3998
    %v4000 = vand.u32 %v3999, 4294901760
    %4001 = vmatprep.subr.mxu0 %v4000
    %v4002 = vand.u32 %v3856, 4294901760
    %v4003 = vsub.f32 %v3856, %v4002
    %v4004 = vand.u32 %v4003, 4294901760
    %v4005 = vsub.f32 %v4003, %v4004
    %v4006 = vand.u32 %v4005, 4294901760
    %4007 = vmatpush1.msra.mxu0 %v4006
    %v4008 = vand.u32 %v3859, 4294901760
    %v4009 = vsub.f32 %v3859, %v4008
    %v4010 = vand.u32 %v4009, 4294901760
    %v4011 = vsub.f32 %v4009, %v4010
    %v4012 = vand.u32 %v4011, 4294901760
    %4013 = vmatprep.subr.mxu0 %v4012
    %v4014 = vand.u32 %v3858, 4294901760
    %v4015 = vsub.f32 %v3858, %v4014
    %v4016 = vand.u32 %v4015, 4294901760
    %v4017 = vsub.f32 %v4015, %v4016
    %v4018 = vand.u32 %v4017, 4294901760
    %4019 = vmatpush1.msra.mxu0 %v4018
    %v4020 = vand.u32 %v3861, 4294901760
    %v4021 = vsub.f32 %v3861, %v4020
    %v4022 = vand.u32 %v4021, 4294901760
    %v4023 = vsub.f32 %v4021, %v4022
    %v4024 = vand.u32 %v4023, 4294901760
    %4025 = vmatprep.subr.mxu0 %v4024
    %v4026 = vand.u32 %v3860, 4294901760
    %v4027 = vsub.f32 %v3860, %v4026
    %v4028 = vand.u32 %v4027, 4294901760
    %v4029 = vsub.f32 %v4027, %v4028
    %v4030 = vand.u32 %v4029, 4294901760
    %4031 = vmatpush1.msra.mxu0 %v4030
    %v4032 = vand.u32 %v3863, 4294901760
    %v4033 = vsub.f32 %v3863, %v4032
    %v4034 = vand.u32 %v4033, 4294901760
    %v4035 = vsub.f32 %v4033, %v4034
    %v4036 = vand.u32 %v4035, 4294901760
    %4037 = vmatprep.subr.mxu0 %v4036
    %v4038 = vand.u32 %v3862, 4294901760
    %v4039 = vsub.f32 %v3862, %v4038
    %v4040 = vand.u32 %v4039, 4294901760
    %v4041 = vsub.f32 %v4039, %v4040
    %v4042 = vand.u32 %v4041, 4294901760
    %4043 = vmatpush1.msra.mxu0 %v4042
    %v4044 = vand.u32 %v3865, 4294901760
    %v4045 = vsub.f32 %v3865, %v4044
    %v4046 = vand.u32 %v4045, 4294901760
    %v4047 = vsub.f32 %v4045, %v4046
    %v4048 = vand.u32 %v4047, 4294901760
    %4049 = vmatprep.subr.mxu0 %v4048
    %v4050 = vand.u32 %v3864, 4294901760
    %v4051 = vsub.f32 %v3864, %v4050
    %v4052 = vand.u32 %v4051, 4294901760
    %v4053 = vsub.f32 %v4051, %v4052
    %v4054 = vand.u32 %v4053, 4294901760
    %4055 = vmatpush1.msra.mxu0 %v4054
    %v4056 = vand.u32 %v3867, 4294901760
    %v4057 = vsub.f32 %v3867, %v4056
    %v4058 = vand.u32 %v4057, 4294901760
    %v4059 = vsub.f32 %v4057, %v4058
    %v4060 = vand.u32 %v4059, 4294901760
    %4061 = vmatprep.subr.mxu0 %v4060
    %v4062 = vand.u32 %v3866, 4294901760
    %v4063 = vsub.f32 %v3866, %v4062
    %v4064 = vand.u32 %v4063, 4294901760
    %v4065 = vsub.f32 %v4063, %v4064
    %v4066 = vand.u32 %v4065, 4294901760
    %4067 = vmatpush1.msra.mxu0 %v4066
    %4068 = vmatprep.subr.mxu0 0.0
    %4069 = vmatpush1.msra.mxu0 0.0
    %4070 = vmatprep.subr.mxu0 0.0
    %4071 = vmatpush1.msra.mxu0 0.0
    %4072 = vmatprep.subr.mxu0 0.0
    %4073 = vmatpush1.msra.mxu0 0.0
    %4074 = vmatprep.subr.mxu0 0.0
    %4075 = vmatpush1.msra.mxu0 0.0
    %4076 = vmatprep.subr.mxu0 0.0
    %4077 = vmatpush1.msra.mxu0 0.0
    %4078 = vmatprep.subr.mxu0 0.0
    %4079 = vmatpush1.msra.mxu0 0.0
    %4080 = vmatprep.subr.mxu0 0.0
    %4081 = vmatpush1.msra.mxu0 0.0
    %4082 = vmatprep.subr.mxu0 0.0
    %4083 = vmatpush1.msra.mxu0 0.0
    %4084 = vmatprep.subr.mxu0 0.0
    %4085 = vmatpush1.msra.mxu0 0.0
    %4086 = vmatprep.subr.mxu0 0.0
    %4087 = vmatpush1.msra.mxu0 0.0
    %4088 = vmatprep.subr.mxu0 0.0
    %4089 = vmatpush1.msra.mxu0 0.0
    %4090 = vmatprep.subr.mxu0 0.0
    %4091 = vmatpush1.msra.mxu0 0.0
    %4092 = vmatprep.subr.mxu0 0.0
    %4093 = vmatpush1.msra.mxu0 0.0
    %4094 = vmatprep.subr.mxu0 0.0
    %4095 = vmatpush1.msra.mxu0 0.0
    %4096 = vmatprep.subr.mxu0 0.0
    %4097 = vmatpush1.msra.mxu0 0.0
    %4098 = vmatprep.subr.mxu0 0.0
    %4099 = vmatpush1.msra.mxu0 0.0
    %4100 = vmatprep.subr.mxu0 0.0
    %4101 = vmatpush1.msra.mxu0 0.0
    %4102 = vmatprep.subr.mxu0 0.0
    %4103 = vmatpush1.msra.mxu0 0.0
    %4104 = vmatprep.subr.mxu0 0.0
    %4105 = vmatpush1.msra.mxu0 0.0
    %4106 = vmatprep.subr.mxu0 0.0
    %4107 = vmatpush1.msra.mxu0 0.0
    %4108 = vmatprep.subr.mxu0 0.0
    %4109 = vmatpush1.msra.mxu0 0.0
    %4110 = vmatprep.subr.mxu0 0.0
    %4111 = vmatpush1.msra.mxu0 0.0
    %4112 = vmatprep.subr.mxu0 0.0
    %4113 = vmatpush1.msra.mxu0 0.0
    %4114 = vmatprep.subr.mxu0 0.0
    %4115 = vmatpush1.msra.mxu0 0.0
    %4116 = vmatprep.mubr.f32.mxu0 0.0
    %v4117 = vand.u32 %v1503, 4294901760
    %4118 = vmatmul.mubr.f32.gmra.mrb[0].mxu0 %v4117
    %v4119 = vpop.f32.mrb[0].mxu0
    %v4120 = vadd.f32 %v3968, %v4119
    %v4121 = vpop.f32.mrb[0].mxu0
    %v4122 = vadd.f32 %v3970, %v4121
    %4123 = vdwg.mxu0
    %v4124 = vand.u32 %v3853, 4294901760
    %v4125 = vsub.f32 %v3853, %v4124
    %4126 = vmatprep.subr.mxu0 %v4125
    %v4127 = vand.u32 %v3852, 4294901760
    %v4128 = vsub.f32 %v3852, %v4127
    %4129 = vmatpush1.msra.mxu0 %v4128
    %v4130 = vand.u32 %v3855, 4294901760
    %v4131 = vsub.f32 %v3855, %v4130
    %4132 = vmatprep.subr.mxu0 %v4131
    %v4133 = vand.u32 %v3854, 4294901760
    %v4134 = vsub.f32 %v3854, %v4133
    %4135 = vmatpush1.msra.mxu0 %v4134
    %v4136 = vand.u32 %v3857, 4294901760
    %v4137 = vsub.f32 %v3857, %v4136
    %4138 = vmatprep.subr.mxu0 %v4137
    %v4139 = vand.u32 %v3856, 4294901760
    %v4140 = vsub.f32 %v3856, %v4139
    %4141 = vmatpush1.msra.mxu0 %v4140
    %v4142 = vand.u32 %v3859, 4294901760
    %v4143 = vsub.f32 %v3859, %v4142
    %4144 = vmatprep.subr.mxu0 %v4143
    %v4145 = vand.u32 %v3858, 4294901760
    %v4146 = vsub.f32 %v3858, %v4145
    %4147 = vmatpush1.msra.mxu0 %v4146
    %v4148 = vand.u32 %v3861, 4294901760
    %v4149 = vsub.f32 %v3861, %v4148
    %4150 = vmatprep.subr.mxu0 %v4149
    %v4151 = vand.u32 %v3860, 4294901760
    %v4152 = vsub.f32 %v3860, %v4151
    %4153 = vmatpush1.msra.mxu0 %v4152
    %v4154 = vand.u32 %v3863, 4294901760
    %v4155 = vsub.f32 %v3863, %v4154
    %4156 = vmatprep.subr.mxu0 %v4155
    %v4157 = vand.u32 %v3862, 4294901760
    %v4158 = vsub.f32 %v3862, %v4157
    %4159 = vmatpush1.msra.mxu0 %v4158
    %v4160 = vand.u32 %v3865, 4294901760
    %v4161 = vsub.f32 %v3865, %v4160
    %4162 = vmatprep.subr.mxu0 %v4161
    %v4163 = vand.u32 %v3864, 4294901760
    %v4164 = vsub.f32 %v3864, %v4163
    %4165 = vmatpush1.msra.mxu0 %v4164
    %v4166 = vand.u32 %v3867, 4294901760
    %v4167 = vsub.f32 %v3867, %v4166
    %4168 = vmatprep.subr.mxu0 %v4167
    %v4169 = vand.u32 %v3866, 4294901760
    %v4170 = vsub.f32 %v3866, %v4169
    %4171 = vmatpush1.msra.mxu0 %v4170
    %4172 = vmatprep.subr.mxu0 0.0
    %4173 = vmatpush1.msra.mxu0 0.0
    %4174 = vmatprep.subr.mxu0 0.0
    %4175 = vmatpush1.msra.mxu0 0.0
    %4176 = vmatprep.subr.mxu0 0.0
    %4177 = vmatpush1.msra.mxu0 0.0
    %4178 = vmatprep.subr.mxu0 0.0
    %4179 = vmatpush1.msra.mxu0 0.0
    %4180 = vmatprep.subr.mxu0 0.0
    %4181 = vmatpush1.msra.mxu0 0.0
    %4182 = vmatprep.subr.mxu0 0.0
    %4183 = vmatpush1.msra.mxu0 0.0
    %4184 = vmatprep.subr.mxu0 0.0
    %4185 = vmatpush1.msra.mxu0 0.0
    %4186 = vmatprep.subr.mxu0 0.0
    %4187 = vmatpush1.msra.mxu0 0.0
    %4188 = vmatprep.subr.mxu0 0.0
    %4189 = vmatpush1.msra.mxu0 0.0
    %4190 = vmatprep.subr.mxu0 0.0
    %4191 = vmatpush1.msra.mxu0 0.0
    %4192 = vmatprep.subr.mxu0 0.0
    %4193 = vmatpush1.msra.mxu0 0.0
    %4194 = vmatprep.subr.mxu0 0.0
    %4195 = vmatpush1.msra.mxu0 0.0
    %4196 = vmatprep.subr.mxu0 0.0
    %4197 = vmatpush1.msra.mxu0 0.0
    %4198 = vmatprep.subr.mxu0 0.0
    %4199 = vmatpush1.msra.mxu0 0.0
    %4200 = vmatprep.subr.mxu0 0.0
    %4201 = vmatpush1.msra.mxu0 0.0
    %4202 = vmatprep.subr.mxu0 0.0
    %4203 = vmatpush1.msra.mxu0 0.0
    %4204 = vmatprep.subr.mxu0 0.0
    %4205 = vmatpush1.msra.mxu0 0.0
    %4206 = vmatprep.subr.mxu0 0.0
    %4207 = vmatpush1.msra.mxu0 0.0
    %4208 = vmatprep.subr.mxu0 0.0
    %4209 = vmatpush1.msra.mxu0 0.0
    %4210 = vmatprep.subr.mxu0 0.0
    %4211 = vmatpush1.msra.mxu0 0.0
    %4212 = vmatprep.subr.mxu0 0.0
    %4213 = vmatpush1.msra.mxu0 0.0
    %4214 = vmatprep.subr.mxu0 0.0
    %4215 = vmatpush1.msra.mxu0 0.0
    %4216 = vmatprep.subr.mxu0 0.0
    %4217 = vmatpush1.msra.mxu0 0.0
    %4218 = vmatprep.subr.mxu0 0.0
    %4219 = vmatpush1.msra.mxu0 0.0
    %4220 = vmatprep.mubr.f32.mxu0 0.0
    %v4221 = vand.u32 %v1503, 4294901760
    %v4222 = vsub.f32 %v1503, %v4221
    %4223 = vmatmul.mubr.f32.gmra.mrb[0].mxu0 %v4222
    %v4224 = vpop.f32.mrb[0].mxu0
    %v4225 = vadd.f32 %v4120, %v4224
    %v4226 = vpop.f32.mrb[0].mxu0
    %v4227 = vadd.f32 %v4122, %v4226
    %4228 = vdwg.mxu0
    %v4229 = vand.u32 %v3853, 4294901760
    %4230 = vmatprep.subr.mxu0 %v4229
    %v4231 = vand.u32 %v3852, 4294901760
    %4232 = vmatpush1.msra.mxu0 %v4231
    %v4233 = vand.u32 %v3855, 4294901760
    %4234 = vmatprep.subr.mxu0 %v4233
    %v4235 = vand.u32 %v3854, 4294901760
    %4236 = vmatpush1.msra.mxu0 %v4235
    %v4237 = vand.u32 %v3857, 4294901760
    %4238 = vmatprep.subr.mxu0 %v4237
    %v4239 = vand.u32 %v3856, 4294901760
    %4240 = vmatpush1.msra.mxu0 %v4239
    %v4241 = vand.u32 %v3859, 4294901760
    %4242 = vmatprep.subr.mxu0 %v4241
    %v4243 = vand.u32 %v3858, 4294901760
    %4244 = vmatpush1.msra.mxu0 %v4243
    %v4245 = vand.u32 %v3861, 4294901760
    %4246 = vmatprep.subr.mxu0 %v4245
    %v4247 = vand.u32 %v3860, 4294901760
    %4248 = vmatpush1.msra.mxu0 %v4247
    %v4249 = vand.u32 %v3863, 4294901760
    %4250 = vmatprep.subr.mxu0 %v4249
    %v4251 = vand.u32 %v3862, 4294901760
    %4252 = vmatpush1.msra.mxu0 %v4251
    %v4253 = vand.u32 %v3865, 4294901760
    %4254 = vmatprep.subr.mxu0 %v4253
    %v4255 = vand.u32 %v3864, 4294901760
    %4256 = vmatpush1.msra.mxu0 %v4255
    %v4257 = vand.u32 %v3867, 4294901760
    %4258 = vmatprep.subr.mxu0 %v4257
    %v4259 = vand.u32 %v3866, 4294901760
    %4260 = vmatpush1.msra.mxu0 %v4259
    %4261 = vmatprep.subr.mxu0 0.0
    %4262 = vmatpush1.msra.mxu0 0.0
    %4263 = vmatprep.subr.mxu0 0.0
    %4264 = vmatpush1.msra.mxu0 0.0
    %4265 = vmatprep.subr.mxu0 0.0
    %4266 = vmatpush1.msra.mxu0 0.0
    %4267 = vmatprep.subr.mxu0 0.0
    %4268 = vmatpush1.msra.mxu0 0.0
    %4269 = vmatprep.subr.mxu0 0.0
    %4270 = vmatpush1.msra.mxu0 0.0
    %4271 = vmatprep.subr.mxu0 0.0
    %4272 = vmatpush1.msra.mxu0 0.0
    %4273 = vmatprep.subr.mxu0 0.0
    %4274 = vmatpush1.msra.mxu0 0.0
    %4275 = vmatprep.subr.mxu0 0.0
    %4276 = vmatpush1.msra.mxu0 0.0
    %4277 = vmatprep.subr.mxu0 0.0
    %4278 = vmatpush1.msra.mxu0 0.0
    %4279 = vmatprep.subr.mxu0 0.0
    %4280 = vmatpush1.msra.mxu0 0.0
    %4281 = vmatprep.subr.mxu0 0.0
    %4282 = vmatpush1.msra.mxu0 0.0
    %4283 = vmatprep.subr.mxu0 0.0
    %4284 = vmatpush1.msra.mxu0 0.0
    %4285 = vmatprep.subr.mxu0 0.0
    %4286 = vmatpush1.msra.mxu0 0.0
    %4287 = vmatprep.subr.mxu0 0.0
    %4288 = vmatpush1.msra.mxu0 0.0
    %4289 = vmatprep.subr.mxu0 0.0
    %4290 = vmatpush1.msra.mxu0 0.0
    %4291 = vmatprep.subr.mxu0 0.0
    %4292 = vmatpush1.msra.mxu0 0.0
    %4293 = vmatprep.subr.mxu0 0.0
    %4294 = vmatpush1.msra.mxu0 0.0
    %4295 = vmatprep.subr.mxu0 0.0
    %4296 = vmatpush1.msra.mxu0 0.0
    %4297 = vmatprep.subr.mxu0 0.0
    %4298 = vmatpush1.msra.mxu0 0.0
    %4299 = vmatprep.subr.mxu0 0.0
    %4300 = vmatpush1.msra.mxu0 0.0
    %4301 = vmatprep.subr.mxu0 0.0
    %4302 = vmatpush1.msra.mxu0 0.0
    %4303 = vmatprep.subr.mxu0 0.0
    %4304 = vmatpush1.msra.mxu0 0.0
    %4305 = vmatprep.subr.mxu0 0.0
    %4306 = vmatpush1.msra.mxu0 0.0
    %4307 = vmatprep.subr.mxu0 0.0
    %4308 = vmatpush1.msra.mxu0 0.0
    %4309 = vmatprep.mubr.f32.mxu0 0.0
    %v4310 = vand.u32 %v1503, 4294901760
    %v4311 = vsub.f32 %v1503, %v4310
    %v4312 = vand.u32 %v4311, 4294901760
    %4313 = vmatmul.mubr.f32.gmra.mrb[0].mxu0 %v4312
    %v4314 = vpop.f32.mrb[0].mxu0
    %v4315 = vadd.f32 %v4225, %v4314
    %v4316 = vpop.f32.mrb[0].mxu0
    %v4317 = vadd.f32 %v4227, %v4316
    %4318 = vdwg.mxu0
    %v4319 = vand.u32 %v3853, 4294901760
    %v4320 = vsub.f32 %v3853, %v4319
    %v4321 = vand.u32 %v4320, 4294901760
    %4322 = vmatprep.subr.mxu0 %v4321
    %v4323 = vand.u32 %v3852, 4294901760
    %v4324 = vsub.f32 %v3852, %v4323
    %v4325 = vand.u32 %v4324, 4294901760
    %4326 = vmatpush1.msra.mxu0 %v4325
    %v4327 = vand.u32 %v3855, 4294901760
    %v4328 = vsub.f32 %v3855, %v4327
    %v4329 = vand.u32 %v4328, 4294901760
    %4330 = vmatprep.subr.mxu0 %v4329
    %v4331 = vand.u32 %v3854, 4294901760
    %v4332 = vsub.f32 %v3854, %v4331
    %v4333 = vand.u32 %v4332, 4294901760
    %4334 = vmatpush1.msra.mxu0 %v4333
    %v4335 = vand.u32 %v3857, 4294901760
    %v4336 = vsub.f32 %v3857, %v4335
    %v4337 = vand.u32 %v4336, 4294901760
    %4338 = vmatprep.subr.mxu0 %v4337
    %v4339 = vand.u32 %v3856, 4294901760
    %v4340 = vsub.f32 %v3856, %v4339
    %v4341 = vand.u32 %v4340, 4294901760
    %4342 = vmatpush1.msra.mxu0 %v4341
    %v4343 = vand.u32 %v3859, 4294901760
    %v4344 = vsub.f32 %v3859, %v4343
    %v4345 = vand.u32 %v4344, 4294901760
    %4346 = vmatprep.subr.mxu0 %v4345
    %v4347 = vand.u32 %v3858, 4294901760
    %v4348 = vsub.f32 %v3858, %v4347
    %v4349 = vand.u32 %v4348, 4294901760
    %4350 = vmatpush1.msra.mxu0 %v4349
    %v4351 = vand.u32 %v3861, 4294901760
    %v4352 = vsub.f32 %v3861, %v4351
    %v4353 = vand.u32 %v4352, 4294901760
    %4354 = vmatprep.subr.mxu0 %v4353
    %v4355 = vand.u32 %v3860, 4294901760
    %v4356 = vsub.f32 %v3860, %v4355
    %v4357 = vand.u32 %v4356, 4294901760
    %4358 = vmatpush1.msra.mxu0 %v4357
    %v4359 = vand.u32 %v3863, 4294901760
    %v4360 = vsub.f32 %v3863, %v4359
    %v4361 = vand.u32 %v4360, 4294901760
    %4362 = vmatprep.subr.mxu0 %v4361
    %v4363 = vand.u32 %v3862, 4294901760
    %v4364 = vsub.f32 %v3862, %v4363
    %v4365 = vand.u32 %v4364, 4294901760
    %4366 = vmatpush1.msra.mxu0 %v4365
    %v4367 = vand.u32 %v3865, 4294901760
    %v4368 = vsub.f32 %v3865, %v4367
    %v4369 = vand.u32 %v4368, 4294901760
    %4370 = vmatprep.subr.mxu0 %v4369
    %v4371 = vand.u32 %v3864, 4294901760
    %v4372 = vsub.f32 %v3864, %v4371
    %v4373 = vand.u32 %v4372, 4294901760
    %4374 = vmatpush1.msra.mxu0 %v4373
    %v4375 = vand.u32 %v3867, 4294901760
    %v4376 = vsub.f32 %v3867, %v4375
    %v4377 = vand.u32 %v4376, 4294901760
    %4378 = vmatprep.subr.mxu0 %v4377
    %v4379 = vand.u32 %v3866, 4294901760
    %v4380 = vsub.f32 %v3866, %v4379
    %v4381 = vand.u32 %v4380, 4294901760
    %4382 = vmatpush1.msra.mxu0 %v4381
    %4383 = vmatprep.subr.mxu0 0.0
    %4384 = vmatpush1.msra.mxu0 0.0
    %4385 = vmatprep.subr.mxu0 0.0
    %4386 = vmatpush1.msra.mxu0 0.0
    %4387 = vmatprep.subr.mxu0 0.0
    %4388 = vmatpush1.msra.mxu0 0.0
    %4389 = vmatprep.subr.mxu0 0.0
    %4390 = vmatpush1.msra.mxu0 0.0
    %4391 = vmatprep.subr.mxu0 0.0
    %4392 = vmatpush1.msra.mxu0 0.0
    %4393 = vmatprep.subr.mxu0 0.0
    %4394 = vmatpush1.msra.mxu0 0.0
    %4395 = vmatprep.subr.mxu0 0.0
    %4396 = vmatpush1.msra.mxu0 0.0
    %4397 = vmatprep.subr.mxu0 0.0
    %4398 = vmatpush1.msra.mxu0 0.0
    %4399 = vmatprep.subr.mxu0 0.0
    %4400 = vmatpush1.msra.mxu0 0.0
    %4401 = vmatprep.subr.mxu0 0.0
    %4402 = vmatpush1.msra.mxu0 0.0
    %4403 = vmatprep.subr.mxu0 0.0
    %4404 = vmatpush1.msra.mxu0 0.0
    %4405 = vmatprep.subr.mxu0 0.0
    %4406 = vmatpush1.msra.mxu0 0.0
    %4407 = vmatprep.subr.mxu0 0.0
    %4408 = vmatpush1.msra.mxu0 0.0
    %4409 = vmatprep.subr.mxu0 0.0
    %4410 = vmatpush1.msra.mxu0 0.0
    %4411 = vmatprep.subr.mxu0 0.0
    %4412 = vmatpush1.msra.mxu0 0.0
    %4413 = vmatprep.subr.mxu0 0.0
    %4414 = vmatpush1.msra.mxu0 0.0
    %4415 = vmatprep.subr.mxu0 0.0
    %4416 = vmatpush1.msra.mxu0 0.0
    %4417 = vmatprep.subr.mxu0 0.0
    %4418 = vmatpush1.msra.mxu0 0.0
    %4419 = vmatprep.subr.mxu0 0.0
    %4420 = vmatpush1.msra.mxu0 0.0
    %4421 = vmatprep.subr.mxu0 0.0
    %4422 = vmatpush1.msra.mxu0 0.0
    %4423 = vmatprep.subr.mxu0 0.0
    %4424 = vmatpush1.msra.mxu0 0.0
    %4425 = vmatprep.subr.mxu0 0.0
    %4426 = vmatpush1.msra.mxu0 0.0
    %4427 = vmatprep.subr.mxu0 0.0
    %4428 = vmatpush1.msra.mxu0 0.0
    %4429 = vmatprep.subr.mxu0 0.0
    %4430 = vmatpush1.msra.mxu0 0.0
    %4431 = vmatprep.mubr.f32.mxu0 0.0
    %v4432 = vand.u32 %v1503, 4294901760
    %4433 = vmatmul.mubr.f32.gmra.mrb[0].mxu0 %v4432
    %v4434 = vpop.f32.mrb[0].mxu0
    %v4435 = vadd.f32 %v4315, %v4434
    %v4436 = vpop.f32.mrb[0].mxu0
    %v4437 = vadd.f32 %v4317, %v4436
    %4438 = vdwg.mxu0
    %v4439 = vand.u32 %v3853, 4294901760
    %4440 = vmatprep.subr.mxu0 %v4439
    %v4441 = vand.u32 %v3852, 4294901760
    %4442 = vmatpush1.msra.mxu0 %v4441
    %v4443 = vand.u32 %v3855, 4294901760
    %4444 = vmatprep.subr.mxu0 %v4443
    %v4445 = vand.u32 %v3854, 4294901760
    %4446 = vmatpush1.msra.mxu0 %v4445
    %v4447 = vand.u32 %v3857, 4294901760
    %4448 = vmatprep.subr.mxu0 %v4447
    %v4449 = vand.u32 %v3856, 4294901760
    %4450 = vmatpush1.msra.mxu0 %v4449
    %v4451 = vand.u32 %v3859, 4294901760
    %4452 = vmatprep.subr.mxu0 %v4451
    %v4453 = vand.u32 %v3858, 4294901760
    %4454 = vmatpush1.msra.mxu0 %v4453
    %v4455 = vand.u32 %v3861, 4294901760
    %4456 = vmatprep.subr.mxu0 %v4455
    %v4457 = vand.u32 %v3860, 4294901760
    %4458 = vmatpush1.msra.mxu0 %v4457
    %v4459 = vand.u32 %v3863, 4294901760
    %4460 = vmatprep.subr.mxu0 %v4459
    %v4461 = vand.u32 %v3862, 4294901760
    %4462 = vmatpush1.msra.mxu0 %v4461
    %v4463 = vand.u32 %v3865, 4294901760
    %4464 = vmatprep.subr.mxu0 %v4463
    %v4465 = vand.u32 %v3864, 4294901760
    %4466 = vmatpush1.msra.mxu0 %v4465
    %v4467 = vand.u32 %v3867, 4294901760
    %4468 = vmatprep.subr.mxu0 %v4467
    %v4469 = vand.u32 %v3866, 4294901760
    %4470 = vmatpush1.msra.mxu0 %v4469
    %4471 = vmatprep.subr.mxu0 0.0
    %4472 = vmatpush1.msra.mxu0 0.0
    %4473 = vmatprep.subr.mxu0 0.0
    %4474 = vmatpush1.msra.mxu0 0.0
    %4475 = vmatprep.subr.mxu0 0.0
    %4476 = vmatpush1.msra.mxu0 0.0
    %4477 = vmatprep.subr.mxu0 0.0
    %4478 = vmatpush1.msra.mxu0 0.0
    %4479 = vmatprep.subr.mxu0 0.0
    %4480 = vmatpush1.msra.mxu0 0.0
    %4481 = vmatprep.subr.mxu0 0.0
    %4482 = vmatpush1.msra.mxu0 0.0
    %4483 = vmatprep.subr.mxu0 0.0
    %4484 = vmatpush1.msra.mxu0 0.0
    %4485 = vmatprep.subr.mxu0 0.0
    %4486 = vmatpush1.msra.mxu0 0.0
    %4487 = vmatprep.subr.mxu0 0.0
    %4488 = vmatpush1.msra.mxu0 0.0
    %4489 = vmatprep.subr.mxu0 0.0
    %4490 = vmatpush1.msra.mxu0 0.0
    %4491 = vmatprep.subr.mxu0 0.0
    %4492 = vmatpush1.msra.mxu0 0.0
    %4493 = vmatprep.subr.mxu0 0.0
    %4494 = vmatpush1.msra.mxu0 0.0
    %4495 = vmatprep.subr.mxu0 0.0
    %4496 = vmatpush1.msra.mxu0 0.0
    %4497 = vmatprep.subr.mxu0 0.0
    %4498 = vmatpush1.msra.mxu0 0.0
    %4499 = vmatprep.subr.mxu0 0.0
    %4500 = vmatpush1.msra.mxu0 0.0
    %4501 = vmatprep.subr.mxu0 0.0
    %4502 = vmatpush1.msra.mxu0 0.0
    %4503 = vmatprep.subr.mxu0 0.0
    %4504 = vmatpush1.msra.mxu0 0.0
    %4505 = vmatprep.subr.mxu0 0.0
    %4506 = vmatpush1.msra.mxu0 0.0
    %4507 = vmatprep.subr.mxu0 0.0
    %4508 = vmatpush1.msra.mxu0 0.0
    %4509 = vmatprep.subr.mxu0 0.0
    %4510 = vmatpush1.msra.mxu0 0.0
    %4511 = vmatprep.subr.mxu0 0.0
    %4512 = vmatpush1.msra.mxu0 0.0
    %4513 = vmatprep.subr.mxu0 0.0
    %4514 = vmatpush1.msra.mxu0 0.0
    %4515 = vmatprep.subr.mxu0 0.0
    %4516 = vmatpush1.msra.mxu0 0.0
    %4517 = vmatprep.subr.mxu0 0.0
    %4518 = vmatpush1.msra.mxu0 0.0
    %4519 = vmatprep.mubr.f32.mxu0 0.0
    %v4520 = vand.u32 %v1503, 4294901760
    %4521 = vmatmul.mubr.f32.gmra.mrb[0].mxu0 %v4520
    %v4522 = vpop.f32.mrb[0].mxu0
    %v4523 = vadd.f32 %v4435, %v4522
    %v4524 = vpop.f32.mrb[0].mxu0
    %v4525 = vadd.f32 %v4437, %v4524
    %4526 = vdwg.mxu0
    %v4527 = vadd.f32 %v3848, %v4523
    %v4528 = vxor.u32 %v4527, 2147483648
    %v4529 = vmul.f32 %v4528, 1.442695
    %v4530 = vpow.pop %v4529
    %v4531 = vadd.f32 %v4530, 1.0
    %v4532 = vrcp.pop %v4531
    %v4533 = vmul.f32 1.0, %v4532
    %v4534 = vmul.f32 %v4533, %v4525
    %v4535 = vadd.f32 %v3850, %v4534
    %v4536 = vtanh.pop %v4535
    %v4537 = vsub.f32 1.0, %v4533
    %4539 = vrot.lane.b32.xlu0 %v4536, 64
    %v4540 = vpop.permute.xlu0 %4539
    %v4542 = vmul.f32 %v4537, %v4540
    %4543 = vrot.lane.b32.xlu0 %v119, 64
    %v4544 = vpop.permute.xlu0 %4543
    %v4546 = vmul.f32 %v4533, %v4544
    %v4547 = vadd.f32 %v4542, %v4546
    %4549 = vrot.lane.b32.xlu0 %v4547, 64
    %v4550 = vpop.permute.xlu0 %4549
    %4552 = vrot.lane.b32.xlu0 %v3054, 64
    %v4553 = vpop.permute.xlu0 %4552
    %v4555 = vsel %vm624, %v4550, %v4553
    %v4556 = vld [vmem:[#allocation10] sm:$0xff]
    %v4557 = vld [vmem:[#allocation10 + $0x8] sm:$0xff]
    %v4558 = vld [vmem:[#allocation10 + $0x10] sm:$0xff]
    %v4559 = vld [vmem:[#allocation10 + $0x18] sm:$0xff]
    %v4560 = vld [vmem:[#allocation10 + $0x20] sm:$0xff]
    %v4561 = vld [vmem:[#allocation10 + $0x28] sm:$0xff]
    %v4562 = vld [vmem:[#allocation10 + $0x30] sm:$0xff]
    %v4563 = vld [vmem:[#allocation10 + $0x38] sm:$0xff]
    %v4564 = vld [vmem:[#allocation10 + $0x40] sm:$0xff]
    %v4565 = vld [vmem:[#allocation10 + $0x48] sm:$0xff]
    %v4566 = vld [vmem:[#allocation10 + $0x50] sm:$0xff]
    %v4567 = vld [vmem:[#allocation10 + $0x58] sm:$0xff]
    %v4568 = vld [vmem:[#allocation10 + $0x60] sm:$0xff]
    %v4569 = vld [vmem:[#allocation10 + $0x68] sm:$0xff]
    %v4570 = vld [vmem:[#allocation10 + $0x70] sm:$0xff]
    %v4571 = vld [vmem:[#allocation10 + $0x78] sm:$0xff]
    %v4572 = vld [vmem:[#allocation10 + $0x80] sm:$0xff]
    %v4573 = vld [vmem:[#allocation10 + $0x88] sm:$0xff]
    %v4574 = vld [vmem:[#allocation10 + $0x90] sm:$0xff]
    %v4575 = vld [vmem:[#allocation10 + $0x98] sm:$0xff]
    %v4576 = vld [vmem:[%s13] sm:$0x1]
    %v4578 = vlaneseq
    %v4579 = vshrl.u32 %v4578, 7
    %v4580 = vsub.s32 0, %v4579
    %v4581 = vrot.slane %v4576, %v4580
    %v4584 = vsel %vm3059, %v613, 0
    %4586 = vmatprep.subr.mxu0 0.0
    %v4587 = vand.u32 %v4556, 4294901760
    %4588 = vmatpush1.msra.mxu0 %v4587
    %4589 = vmatprep.subr.mxu0 0.0
    %v4590 = vand.u32 %v4557, 4294901760
    %4591 = vmatpush1.msra.mxu0 %v4590
    %4592 = vmatprep.subr.mxu0 0.0
    %v4593 = vand.u32 %v4558, 4294901760
    %4594 = vmatpush1.msra.mxu0 %v4593
    %4595 = vmatprep.subr.mxu0 0.0
    %v4596 = vand.u32 %v4559, 4294901760
    %4597 = vmatpush1.msra.mxu0 %v4596
    %4598 = vmatprep.subr.mxu0 0.0
    %v4599 = vand.u32 %v4560, 4294901760
    %4600 = vmatpush1.msra.mxu0 %v4599
    %4601 = vmatprep.subr.mxu0 0.0
    %v4602 = vand.u32 %v4561, 4294901760
    %4603 = vmatpush1.msra.mxu0 %v4602
    %4604 = vmatprep.subr.mxu0 0.0
    %v4605 = vand.u32 %v4562, 4294901760
    %4606 = vmatpush1.msra.mxu0 %v4605
    %4607 = vmatprep.subr.mxu0 0.0
    %v4608 = vand.u32 %v4563, 4294901760
    %4609 = vmatpush1.msra.mxu0 %v4608
    %4610 = vmatprep.subr.mxu0 0.0
    %v4611 = vand.u32 %v4564, 4294901760
    %4612 = vmatpush1.msra.mxu0 %v4611
    %4613 = vmatprep.subr.mxu0 0.0
    %v4614 = vand.u32 %v4565, 4294901760
    %4615 = vmatpush1.msra.mxu0 %v4614
    %4616 = vmatprep.subr.mxu0 0.0
    %v4617 = vand.u32 %v4566, 4294901760
    %4618 = vmatpush1.msra.mxu0 %v4617
    %4619 = vmatprep.subr.mxu0 0.0
    %v4620 = vand.u32 %v4567, 4294901760
    %4621 = vmatpush1.msra.mxu0 %v4620
    %4622 = vmatprep.subr.mxu0 0.0
    %v4623 = vand.u32 %v4568, 4294901760
    %4624 = vmatpush1.msra.mxu0 %v4623
    %4625 = vmatprep.subr.mxu0 0.0
    %v4626 = vand.u32 %v4569, 4294901760
    %4627 = vmatpush1.msra.mxu0 %v4626
    %4628 = vmatprep.subr.mxu0 0.0
    %v4629 = vand.u32 %v4570, 4294901760
    %4630 = vmatpush1.msra.mxu0 %v4629
    %4631 = vmatprep.subr.mxu0 0.0
    %v4632 = vand.u32 %v4571, 4294901760
    %4633 = vmatpush1.msra.mxu0 %v4632
    %4634 = vmatprep.subr.mxu0 0.0
    %v4635 = vand.u32 %v4572, 4294901760
    %4636 = vmatpush1.msra.mxu0 %v4635
    %4637 = vmatprep.subr.mxu0 0.0
    %v4638 = vand.u32 %v4573, 4294901760
    %4639 = vmatpush1.msra.mxu0 %v4638
    %4640 = vmatprep.subr.mxu0 0.0
    %v4641 = vand.u32 %v4574, 4294901760
    %4642 = vmatpush1.msra.mxu0 %v4641
    %4643 = vmatprep.subr.mxu0 0.0
    %v4644 = vand.u32 %v4575, 4294901760
    %4645 = vmatpush1.msra.mxu0 %v4644
    %4646 = vmatprep.subr.mxu0 0.0
    %4647 = vmatpush1.msra.mxu0 0.0
    %4648 = vmatprep.subr.mxu0 0.0
    %4649 = vmatpush1.msra.mxu0 0.0
    %4650 = vmatprep.subr.mxu0 0.0
    %4651 = vmatpush1.msra.mxu0 0.0
    %4652 = vmatprep.subr.mxu0 0.0
    %4653 = vmatpush1.msra.mxu0 0.0
    %4654 = vmatprep.subr.mxu0 0.0
    %4655 = vmatpush1.msra.mxu0 0.0
    %4656 = vmatprep.subr.mxu0 0.0
    %4657 = vmatpush1.msra.mxu0 0.0
    %4658 = vmatprep.subr.mxu0 0.0
    %4659 = vmatpush1.msra.mxu0 0.0
    %4660 = vmatprep.subr.mxu0 0.0
    %4661 = vmatpush1.msra.mxu0 0.0
    %4662 = vmatprep.subr.mxu0 0.0
    %4663 = vmatpush1.msra.mxu0 0.0
    %4664 = vmatprep.subr.mxu0 0.0
    %4665 = vmatpush1.msra.mxu0 0.0
    %4666 = vmatprep.subr.mxu0 0.0
    %4667 = vmatpush1.msra.mxu0 0.0
    %4668 = vmatprep.subr.mxu0 0.0
    %4669 = vmatpush1.msra.mxu0 0.0
    %v4670 = vand.u32 %v4584, 4294901760
    %v4671 = vsub.f32 %v4584, %v4670
    %v4672 = vand.u32 %v4671, 4294901760
    %v4673 = vsub.f32 %v4671, %v4672
    %v4674 = vand.u32 %v4673, 4294901760
    %4675 = vmatprep.mubr.f32.mxu0 %v4674
    %v4676 = vand.u32 %v4555, 4294901760
    %v4677 = vsub.f32 %v4555, %v4676
    %v4678 = vand.u32 %v4677, 4294901760
    %v4679 = vsub.f32 %v4677, %v4678
    %v4680 = vand.u32 %v4679, 4294901760
    %4681 = vmatmul.mubr.f32.gmra.mrb[0].mxu0 %v4680
    %v4682 = vpop.f32.mrb[0].mxu0
    %v4683 = vadd.f32 %v4581, %v4682
    %v4684 = vpop.f32.mrb[0].mxu0
    %4685 = vdwg.mxu0
    %4686 = vmatprep.subr.mxu0 0.0
    %v4687 = vand.u32 %v4556, 4294901760
    %v4688 = vsub.f32 %v4556, %v4687
    %v4689 = vand.u32 %v4688, 4294901760
    %v4690 = vsub.f32 %v4688, %v4689
    %v4691 = vand.u32 %v4690, 4294901760
    %4692 = vmatpush1.msra.mxu0 %v4691
    %4693 = vmatprep.subr.mxu0 0.0
    %v4694 = vand.u32 %v4557, 4294901760
    %v4695 = vsub.f32 %v4557, %v4694
    %v4696 = vand.u32 %v4695, 4294901760
    %v4697 = vsub.f32 %v4695, %v4696
    %v4698 = vand.u32 %v4697, 4294901760
    %4699 = vmatpush1.msra.mxu0 %v4698
    %4700 = vmatprep.subr.mxu0 0.0
    %v4701 = vand.u32 %v4558, 4294901760
    %v4702 = vsub.f32 %v4558, %v4701
    %v4703 = vand.u32 %v4702, 4294901760
    %v4704 = vsub.f32 %v4702, %v4703
    %v4705 = vand.u32 %v4704, 4294901760
    %4706 = vmatpush1.msra.mxu0 %v4705
    %4707 = vmatprep.subr.mxu0 0.0
    %v4708 = vand.u32 %v4559, 4294901760
    %v4709 = vsub.f32 %v4559, %v4708
    %v4710 = vand.u32 %v4709, 4294901760
    %v4711 = vsub.f32 %v4709, %v4710
    %v4712 = vand.u32 %v4711, 4294901760
    %4713 = vmatpush1.msra.mxu0 %v4712
    %4714 = vmatprep.subr.mxu0 0.0
    %v4715 = vand.u32 %v4560, 4294901760
    %v4716 = vsub.f32 %v4560, %v4715
    %v4717 = vand.u32 %v4716, 4294901760
    %v4718 = vsub.f32 %v4716, %v4717
    %v4719 = vand.u32 %v4718, 4294901760
    %4720 = vmatpush1.msra.mxu0 %v4719
    %4721 = vmatprep.subr.mxu0 0.0
    %v4722 = vand.u32 %v4561, 4294901760
    %v4723 = vsub.f32 %v4561, %v4722
    %v4724 = vand.u32 %v4723, 4294901760
    %v4725 = vsub.f32 %v4723, %v4724
    %v4726 = vand.u32 %v4725, 4294901760
    %4727 = vmatpush1.msra.mxu0 %v4726
    %4728 = vmatprep.subr.mxu0 0.0
    %v4729 = vand.u32 %v4562, 4294901760
    %v4730 = vsub.f32 %v4562, %v4729
    %v4731 = vand.u32 %v4730, 4294901760
    %v4732 = vsub.f32 %v4730, %v4731
    %v4733 = vand.u32 %v4732, 4294901760
    %4734 = vmatpush1.msra.mxu0 %v4733
    %4735 = vmatprep.subr.mxu0 0.0
    %v4736 = vand.u32 %v4563, 4294901760
    %v4737 = vsub.f32 %v4563, %v4736
    %v4738 = vand.u32 %v4737, 4294901760
    %v4739 = vsub.f32 %v4737, %v4738
    %v4740 = vand.u32 %v4739, 4294901760
    %4741 = vmatpush1.msra.mxu0 %v4740
    %4742 = vmatprep.subr.mxu0 0.0
    %v4743 = vand.u32 %v4564, 4294901760
    %v4744 = vsub.f32 %v4564, %v4743
    %v4745 = vand.u32 %v4744, 4294901760
    %v4746 = vsub.f32 %v4744, %v4745
    %v4747 = vand.u32 %v4746, 4294901760
    %4748 = vmatpush1.msra.mxu0 %v4747
    %4749 = vmatprep.subr.mxu0 0.0
    %v4750 = vand.u32 %v4565, 4294901760
    %v4751 = vsub.f32 %v4565, %v4750
    %v4752 = vand.u32 %v4751, 4294901760
    %v4753 = vsub.f32 %v4751, %v4752
    %v4754 = vand.u32 %v4753, 4294901760
    %4755 = vmatpush1.msra.mxu0 %v4754
    %4756 = vmatprep.subr.mxu0 0.0
    %v4757 = vand.u32 %v4566, 4294901760
    %v4758 = vsub.f32 %v4566, %v4757
    %v4759 = vand.u32 %v4758, 4294901760
    %v4760 = vsub.f32 %v4758, %v4759
    %v4761 = vand.u32 %v4760, 4294901760
    %4762 = vmatpush1.msra.mxu0 %v4761
    %4763 = vmatprep.subr.mxu0 0.0
    %v4764 = vand.u32 %v4567, 4294901760
    %v4765 = vsub.f32 %v4567, %v4764
    %v4766 = vand.u32 %v4765, 4294901760
    %v4767 = vsub.f32 %v4765, %v4766
    %v4768 = vand.u32 %v4767, 4294901760
    %4769 = vmatpush1.msra.mxu0 %v4768
    %4770 = vmatprep.subr.mxu0 0.0
    %v4771 = vand.u32 %v4568, 4294901760
    %v4772 = vsub.f32 %v4568, %v4771
    %v4773 = vand.u32 %v4772, 4294901760
    %v4774 = vsub.f32 %v4772, %v4773
    %v4775 = vand.u32 %v4774, 4294901760
    %4776 = vmatpush1.msra.mxu0 %v4775
    %4777 = vmatprep.subr.mxu0 0.0
    %v4778 = vand.u32 %v4569, 4294901760
    %v4779 = vsub.f32 %v4569, %v4778
    %v4780 = vand.u32 %v4779, 4294901760
    %v4781 = vsub.f32 %v4779, %v4780
    %v4782 = vand.u32 %v4781, 4294901760
    %4783 = vmatpush1.msra.mxu0 %v4782
    %4784 = vmatprep.subr.mxu0 0.0
    %v4785 = vand.u32 %v4570, 4294901760
    %v4786 = vsub.f32 %v4570, %v4785
    %v4787 = vand.u32 %v4786, 4294901760
    %v4788 = vsub.f32 %v4786, %v4787
    %v4789 = vand.u32 %v4788, 4294901760
    %4790 = vmatpush1.msra.mxu0 %v4789
    %4791 = vmatprep.subr.mxu0 0.0
    %v4792 = vand.u32 %v4571, 4294901760
    %v4793 = vsub.f32 %v4571, %v4792
    %v4794 = vand.u32 %v4793, 4294901760
    %v4795 = vsub.f32 %v4793, %v4794
    %v4796 = vand.u32 %v4795, 4294901760
    %4797 = vmatpush1.msra.mxu0 %v4796
    %4798 = vmatprep.subr.mxu0 0.0
    %v4799 = vand.u32 %v4572, 4294901760
    %v4800 = vsub.f32 %v4572, %v4799
    %v4801 = vand.u32 %v4800, 4294901760
    %v4802 = vsub.f32 %v4800, %v4801
    %v4803 = vand.u32 %v4802, 4294901760
    %4804 = vmatpush1.msra.mxu0 %v4803
    %4805 = vmatprep.subr.mxu0 0.0
    %v4806 = vand.u32 %v4573, 4294901760
    %v4807 = vsub.f32 %v4573, %v4806
    %v4808 = vand.u32 %v4807, 4294901760
    %v4809 = vsub.f32 %v4807, %v4808
    %v4810 = vand.u32 %v4809, 4294901760
    %4811 = vmatpush1.msra.mxu0 %v4810
    %4812 = vmatprep.subr.mxu0 0.0
    %v4813 = vand.u32 %v4574, 4294901760
    %v4814 = vsub.f32 %v4574, %v4813
    %v4815 = vand.u32 %v4814, 4294901760
    %v4816 = vsub.f32 %v4814, %v4815
    %v4817 = vand.u32 %v4816, 4294901760
    %4818 = vmatpush1.msra.mxu0 %v4817
    %4819 = vmatprep.subr.mxu0 0.0
    %v4820 = vand.u32 %v4575, 4294901760
    %v4821 = vsub.f32 %v4575, %v4820
    %v4822 = vand.u32 %v4821, 4294901760
    %v4823 = vsub.f32 %v4821, %v4822
    %v4824 = vand.u32 %v4823, 4294901760
    %4825 = vmatpush1.msra.mxu0 %v4824
    %4826 = vmatprep.subr.mxu0 0.0
    %4827 = vmatpush1.msra.mxu0 0.0
    %4828 = vmatprep.subr.mxu0 0.0
    %4829 = vmatpush1.msra.mxu0 0.0
    %4830 = vmatprep.subr.mxu0 0.0
    %4831 = vmatpush1.msra.mxu0 0.0
    %4832 = vmatprep.subr.mxu0 0.0
    %4833 = vmatpush1.msra.mxu0 0.0
    %4834 = vmatprep.subr.mxu0 0.0
    %4835 = vmatpush1.msra.mxu0 0.0
    %4836 = vmatprep.subr.mxu0 0.0
    %4837 = vmatpush1.msra.mxu0 0.0
    %4838 = vmatprep.subr.mxu0 0.0
    %4839 = vmatpush1.msra.mxu0 0.0
    %4840 = vmatprep.subr.mxu0 0.0
    %4841 = vmatpush1.msra.mxu0 0.0
    %4842 = vmatprep.subr.mxu0 0.0
    %4843 = vmatpush1.msra.mxu0 0.0
    %4844 = vmatprep.subr.mxu0 0.0
    %4845 = vmatpush1.msra.mxu0 0.0
    %4846 = vmatprep.subr.mxu0 0.0
    %4847 = vmatpush1.msra.mxu0 0.0
    %4848 = vmatprep.subr.mxu0 0.0
    %4849 = vmatpush1.msra.mxu0 0.0
    %v4850 = vand.u32 %v4584, 4294901760
    %4851 = vmatprep.mubr.f32.mxu0 %v4850
    %v4852 = vand.u32 %v4555, 4294901760
    %4853 = vmatmul.mubr.f32.gmra.mrb[0].mxu0 %v4852
    %v4854 = vpop.f32.mrb[0].mxu0
    %v4855 = vadd.f32 %v4683, %v4854
    %v4856 = vpop.f32.mrb[0].mxu0
    %4857 = vdwg.mxu0
    %4858 = vmatprep.subr.mxu0 0.0
    %v4859 = vand.u32 %v4556, 4294901760
    %v4860 = vsub.f32 %v4556, %v4859
    %4861 = vmatpush1.msra.mxu0 %v4860
    %4862 = vmatprep.subr.mxu0 0.0
    %v4863 = vand.u32 %v4557, 4294901760
    %v4864 = vsub.f32 %v4557, %v4863
    %4865 = vmatpush1.msra.mxu0 %v4864
    %4866 = vmatprep.subr.mxu0 0.0
    %v4867 = vand.u32 %v4558, 4294901760
    %v4868 = vsub.f32 %v4558, %v4867
    %4869 = vmatpush1.msra.mxu0 %v4868
    %4870 = vmatprep.subr.mxu0 0.0
    %v4871 = vand.u32 %v4559, 4294901760
    %v4872 = vsub.f32 %v4559, %v4871
    %4873 = vmatpush1.msra.mxu0 %v4872
    %4874 = vmatprep.subr.mxu0 0.0
    %v4875 = vand.u32 %v4560, 4294901760
    %v4876 = vsub.f32 %v4560, %v4875
    %4877 = vmatpush1.msra.mxu0 %v4876
    %4878 = vmatprep.subr.mxu0 0.0
    %v4879 = vand.u32 %v4561, 4294901760
    %v4880 = vsub.f32 %v4561, %v4879
    %4881 = vmatpush1.msra.mxu0 %v4880
    %4882 = vmatprep.subr.mxu0 0.0
    %v4883 = vand.u32 %v4562, 4294901760
    %v4884 = vsub.f32 %v4562, %v4883
    %4885 = vmatpush1.msra.mxu0 %v4884
    %4886 = vmatprep.subr.mxu0 0.0
    %v4887 = vand.u32 %v4563, 4294901760
    %v4888 = vsub.f32 %v4563, %v4887
    %4889 = vmatpush1.msra.mxu0 %v4888
    %4890 = vmatprep.subr.mxu0 0.0
    %v4891 = vand.u32 %v4564, 4294901760
    %v4892 = vsub.f32 %v4564, %v4891
    %4893 = vmatpush1.msra.mxu0 %v4892
    %4894 = vmatprep.subr.mxu0 0.0
    %v4895 = vand.u32 %v4565, 4294901760
    %v4896 = vsub.f32 %v4565, %v4895
    %4897 = vmatpush1.msra.mxu0 %v4896
    %4898 = vmatprep.subr.mxu0 0.0
    %v4899 = vand.u32 %v4566, 4294901760
    %v4900 = vsub.f32 %v4566, %v4899
    %4901 = vmatpush1.msra.mxu0 %v4900
    %4902 = vmatprep.subr.mxu0 0.0
    %v4903 = vand.u32 %v4567, 4294901760
    %v4904 = vsub.f32 %v4567, %v4903
    %4905 = vmatpush1.msra.mxu0 %v4904
    %4906 = vmatprep.subr.mxu0 0.0
    %v4907 = vand.u32 %v4568, 4294901760
    %v4908 = vsub.f32 %v4568, %v4907
    %4909 = vmatpush1.msra.mxu0 %v4908
    %4910 = vmatprep.subr.mxu0 0.0
    %v4911 = vand.u32 %v4569, 4294901760
    %v4912 = vsub.f32 %v4569, %v4911
    %4913 = vmatpush1.msra.mxu0 %v4912
    %4914 = vmatprep.subr.mxu0 0.0
    %v4915 = vand.u32 %v4570, 4294901760
    %v4916 = vsub.f32 %v4570, %v4915
    %4917 = vmatpush1.msra.mxu0 %v4916
    %4918 = vmatprep.subr.mxu0 0.0
    %v4919 = vand.u32 %v4571, 4294901760
    %v4920 = vsub.f32 %v4571, %v4919
    %4921 = vmatpush1.msra.mxu0 %v4920
    %4922 = vmatprep.subr.mxu0 0.0
    %v4923 = vand.u32 %v4572, 4294901760
    %v4924 = vsub.f32 %v4572, %v4923
    %4925 = vmatpush1.msra.mxu0 %v4924
    %4926 = vmatprep.subr.mxu0 0.0
    %v4927 = vand.u32 %v4573, 4294901760
    %v4928 = vsub.f32 %v4573, %v4927
    %4929 = vmatpush1.msra.mxu0 %v4928
    %4930 = vmatprep.subr.mxu0 0.0
    %v4931 = vand.u32 %v4574, 4294901760
    %v4932 = vsub.f32 %v4574, %v4931
    %4933 = vmatpush1.msra.mxu0 %v4932
    %4934 = vmatprep.subr.mxu0 0.0
    %v4935 = vand.u32 %v4575, 4294901760
    %v4936 = vsub.f32 %v4575, %v4935
    %4937 = vmatpush1.msra.mxu0 %v4936
    %4938 = vmatprep.subr.mxu0 0.0
    %4939 = vmatpush1.msra.mxu0 0.0
    %4940 = vmatprep.subr.mxu0 0.0
    %4941 = vmatpush1.msra.mxu0 0.0
    %4942 = vmatprep.subr.mxu0 0.0
    %4943 = vmatpush1.msra.mxu0 0.0
    %4944 = vmatprep.subr.mxu0 0.0
    %4945 = vmatpush1.msra.mxu0 0.0
    %4946 = vmatprep.subr.mxu0 0.0
    %4947 = vmatpush1.msra.mxu0 0.0
    %4948 = vmatprep.subr.mxu0 0.0
    %4949 = vmatpush1.msra.mxu0 0.0
    %4950 = vmatprep.subr.mxu0 0.0
    %4951 = vmatpush1.msra.mxu0 0.0
    %4952 = vmatprep.subr.mxu0 0.0
    %4953 = vmatpush1.msra.mxu0 0.0
    %4954 = vmatprep.subr.mxu0 0.0
    %4955 = vmatpush1.msra.mxu0 0.0
    %4956 = vmatprep.subr.mxu0 0.0
    %4957 = vmatpush1.msra.mxu0 0.0
    %4958 = vmatprep.subr.mxu0 0.0
    %4959 = vmatpush1.msra.mxu0 0.0
    %4960 = vmatprep.subr.mxu0 0.0
    %4961 = vmatpush1.msra.mxu0 0.0
    %v4962 = vand.u32 %v4584, 4294901760
    %v4963 = vsub.f32 %v4584, %v4962
    %4964 = vmatprep.mubr.f32.mxu0 %v4963
    %v4965 = vand.u32 %v4555, 4294901760
    %v4966 = vsub.f32 %v4555, %v4965
    %4967 = vmatmul.mubr.f32.gmra.mrb[0].mxu0 %v4966
    %v4968 = vpop.f32.mrb[0].mxu0
    %v4969 = vadd.f32 %v4855, %v4968
    %v4970 = vpop.f32.mrb[0].mxu0
    %4971 = vdwg.mxu0
    %4972 = vmatprep.subr.mxu0 0.0
    %v4973 = vand.u32 %v4556, 4294901760
    %4974 = vmatpush1.msra.mxu0 %v4973
    %4975 = vmatprep.subr.mxu0 0.0
    %v4976 = vand.u32 %v4557, 4294901760
    %4977 = vmatpush1.msra.mxu0 %v4976
    %4978 = vmatprep.subr.mxu0 0.0
    %v4979 = vand.u32 %v4558, 4294901760
    %4980 = vmatpush1.msra.mxu0 %v4979
    %4981 = vmatprep.subr.mxu0 0.0
    %v4982 = vand.u32 %v4559, 4294901760
    %4983 = vmatpush1.msra.mxu0 %v4982
    %4984 = vmatprep.subr.mxu0 0.0
    %v4985 = vand.u32 %v4560, 4294901760
    %4986 = vmatpush1.msra.mxu0 %v4985
    %4987 = vmatprep.subr.mxu0 0.0
    %v4988 = vand.u32 %v4561, 4294901760
    %4989 = vmatpush1.msra.mxu0 %v4988
    %4990 = vmatprep.subr.mxu0 0.0
    %v4991 = vand.u32 %v4562, 4294901760
    %4992 = vmatpush1.msra.mxu0 %v4991
    %4993 = vmatprep.subr.mxu0 0.0
    %v4994 = vand.u32 %v4563, 4294901760
    %4995 = vmatpush1.msra.mxu0 %v4994
    %4996 = vmatprep.subr.mxu0 0.0
    %v4997 = vand.u32 %v4564, 4294901760
    %4998 = vmatpush1.msra.mxu0 %v4997
    %4999 = vmatprep.subr.mxu0 0.0
    %v5000 = vand.u32 %v4565, 4294901760
    %5001 = vmatpush1.msra.mxu0 %v5000
    %5002 = vmatprep.subr.mxu0 0.0
    %v5003 = vand.u32 %v4566, 4294901760
    %5004 = vmatpush1.msra.mxu0 %v5003
    %5005 = vmatprep.subr.mxu0 0.0
    %v5006 = vand.u32 %v4567, 4294901760
    %5007 = vmatpush1.msra.mxu0 %v5006
    %5008 = vmatprep.subr.mxu0 0.0
    %v5009 = vand.u32 %v4568, 4294901760
    %5010 = vmatpush1.msra.mxu0 %v5009
    %5011 = vmatprep.subr.mxu0 0.0
    %v5012 = vand.u32 %v4569, 4294901760
    %5013 = vmatpush1.msra.mxu0 %v5012
    %5014 = vmatprep.subr.mxu0 0.0
    %v5015 = vand.u32 %v4570, 4294901760
    %5016 = vmatpush1.msra.mxu0 %v5015
    %5017 = vmatprep.subr.mxu0 0.0
    %v5018 = vand.u32 %v4571, 4294901760
    %5019 = vmatpush1.msra.mxu0 %v5018
    %5020 = vmatprep.subr.mxu0 0.0
    %v5021 = vand.u32 %v4572, 4294901760
    %5022 = vmatpush1.msra.mxu0 %v5021
    %5023 = vmatprep.subr.mxu0 0.0
    %v5024 = vand.u32 %v4573, 4294901760
    %5025 = vmatpush1.msra.mxu0 %v5024
    %5026 = vmatprep.subr.mxu0 0.0
    %v5027 = vand.u32 %v4574, 4294901760
    %5028 = vmatpush1.msra.mxu0 %v5027
    %5029 = vmatprep.subr.mxu0 0.0
    %v5030 = vand.u32 %v4575, 4294901760
    %5031 = vmatpush1.msra.mxu0 %v5030
    %5032 = vmatprep.subr.mxu0 0.0
    %5033 = vmatpush1.msra.mxu0 0.0
    %5034 = vmatprep.subr.mxu0 0.0
    %5035 = vmatpush1.msra.mxu0 0.0
    %5036 = vmatprep.subr.mxu0 0.0
    %5037 = vmatpush1.msra.mxu0 0.0
    %5038 = vmatprep.subr.mxu0 0.0
    %5039 = vmatpush1.msra.mxu0 0.0
    %5040 = vmatprep.subr.mxu0 0.0
    %5041 = vmatpush1.msra.mxu0 0.0
    %5042 = vmatprep.subr.mxu0 0.0
    %5043 = vmatpush1.msra.mxu0 0.0
    %5044 = vmatprep.subr.mxu0 0.0
    %5045 = vmatpush1.msra.mxu0 0.0
    %5046 = vmatprep.subr.mxu0 0.0
    %5047 = vmatpush1.msra.mxu0 0.0
    %5048 = vmatprep.subr.mxu0 0.0
    %5049 = vmatpush1.msra.mxu0 0.0
    %5050 = vmatprep.subr.mxu0 0.0
    %5051 = vmatpush1.msra.mxu0 0.0
    %5052 = vmatprep.subr.mxu0 0.0
    %5053 = vmatpush1.msra.mxu0 0.0
    %5054 = vmatprep.subr.mxu0 0.0
    %5055 = vmatpush1.msra.mxu0 0.0
    %v5056 = vand.u32 %v4584, 4294901760
    %v5057 = vsub.f32 %v4584, %v5056
    %v5058 = vand.u32 %v5057, 4294901760
    %5059 = vmatprep.mubr.f32.mxu0 %v5058
    %v5060 = vand.u32 %v4555, 4294901760
    %v5061 = vsub.f32 %v4555, %v5060
    %v5062 = vand.u32 %v5061, 4294901760
    %5063 = vmatmul.mubr.f32.gmra.mrb[0].mxu0 %v5062
    %v5064 = vpop.f32.mrb[0].mxu0
    %v5065 = vadd.f32 %v4969, %v5064
    %v5066 = vpop.f32.mrb[0].mxu0
    %5067 = vdwg.mxu0
    %5068 = vmatprep.subr.mxu0 0.0
    %v5069 = vand.u32 %v4556, 4294901760
    %v5070 = vsub.f32 %v4556, %v5069
    %v5071 = vand.u32 %v5070, 4294901760
    %5072 = vmatpush1.msra.mxu0 %v5071
    %5073 = vmatprep.subr.mxu0 0.0
    %v5074 = vand.u32 %v4557, 4294901760
    %v5075 = vsub.f32 %v4557, %v5074
    %v5076 = vand.u32 %v5075, 4294901760
    %5077 = vmatpush1.msra.mxu0 %v5076
    %5078 = vmatprep.subr.mxu0 0.0
    %v5079 = vand.u32 %v4558, 4294901760
    %v5080 = vsub.f32 %v4558, %v5079
    %v5081 = vand.u32 %v5080, 4294901760
    %5082 = vmatpush1.msra.mxu0 %v5081
    %5083 = vmatprep.subr.mxu0 0.0
    %v5084 = vand.u32 %v4559, 4294901760
    %v5085 = vsub.f32 %v4559, %v5084
    %v5086 = vand.u32 %v5085, 4294901760
    %5087 = vmatpush1.msra.mxu0 %v5086
    %5088 = vmatprep.subr.mxu0 0.0
    %v5089 = vand.u32 %v4560, 4294901760
    %v5090 = vsub.f32 %v4560, %v5089
    %v5091 = vand.u32 %v5090, 4294901760
    %5092 = vmatpush1.msra.mxu0 %v5091
    %5093 = vmatprep.subr.mxu0 0.0
    %v5094 = vand.u32 %v4561, 4294901760
    %v5095 = vsub.f32 %v4561, %v5094
    %v5096 = vand.u32 %v5095, 4294901760
    %5097 = vmatpush1.msra.mxu0 %v5096
    %5098 = vmatprep.subr.mxu0 0.0
    %v5099 = vand.u32 %v4562, 4294901760
    %v5100 = vsub.f32 %v4562, %v5099
    %v5101 = vand.u32 %v5100, 4294901760
    %5102 = vmatpush1.msra.mxu0 %v5101
    %5103 = vmatprep.subr.mxu0 0.0
    %v5104 = vand.u32 %v4563, 4294901760
    %v5105 = vsub.f32 %v4563, %v5104
    %v5106 = vand.u32 %v5105, 4294901760
    %5107 = vmatpush1.msra.mxu0 %v5106
    %5108 = vmatprep.subr.mxu0 0.0
    %v5109 = vand.u32 %v4564, 4294901760
    %v5110 = vsub.f32 %v4564, %v5109
    %v5111 = vand.u32 %v5110, 4294901760
    %5112 = vmatpush1.msra.mxu0 %v5111
    %5113 = vmatprep.subr.mxu0 0.0
    %v5114 = vand.u32 %v4565, 4294901760
    %v5115 = vsub.f32 %v4565, %v5114
    %v5116 = vand.u32 %v5115, 4294901760
    %5117 = vmatpush1.msra.mxu0 %v5116
    %5118 = vmatprep.subr.mxu0 0.0
    %v5119 = vand.u32 %v4566, 4294901760
    %v5120 = vsub.f32 %v4566, %v5119
    %v5121 = vand.u32 %v5120, 4294901760
    %5122 = vmatpush1.msra.mxu0 %v5121
    %5123 = vmatprep.subr.mxu0 0.0
    %v5124 = vand.u32 %v4567, 4294901760
    %v5125 = vsub.f32 %v4567, %v5124
    %v5126 = vand.u32 %v5125, 4294901760
    %5127 = vmatpush1.msra.mxu0 %v5126
    %5128 = vmatprep.subr.mxu0 0.0
    %v5129 = vand.u32 %v4568, 4294901760
    %v5130 = vsub.f32 %v4568, %v5129
    %v5131 = vand.u32 %v5130, 4294901760
    %5132 = vmatpush1.msra.mxu0 %v5131
    %5133 = vmatprep.subr.mxu0 0.0
    %v5134 = vand.u32 %v4569, 4294901760
    %v5135 = vsub.f32 %v4569, %v5134
    %v5136 = vand.u32 %v5135, 4294901760
    %5137 = vmatpush1.msra.mxu0 %v5136
    %5138 = vmatprep.subr.mxu0 0.0
    %v5139 = vand.u32 %v4570, 4294901760
    %v5140 = vsub.f32 %v4570, %v5139
    %v5141 = vand.u32 %v5140, 4294901760
    %5142 = vmatpush1.msra.mxu0 %v5141
    %5143 = vmatprep.subr.mxu0 0.0
    %v5144 = vand.u32 %v4571, 4294901760
    %v5145 = vsub.f32 %v4571, %v5144
    %v5146 = vand.u32 %v5145, 4294901760
    %5147 = vmatpush1.msra.mxu0 %v5146
    %5148 = vmatprep.subr.mxu0 0.0
    %v5149 = vand.u32 %v4572, 4294901760
    %v5150 = vsub.f32 %v4572, %v5149
    %v5151 = vand.u32 %v5150, 4294901760
    %5152 = vmatpush1.msra.mxu0 %v5151
    %5153 = vmatprep.subr.mxu0 0.0
    %v5154 = vand.u32 %v4573, 4294901760
    %v5155 = vsub.f32 %v4573, %v5154
    %v5156 = vand.u32 %v5155, 4294901760
    %5157 = vmatpush1.msra.mxu0 %v5156
    %5158 = vmatprep.subr.mxu0 0.0
    %v5159 = vand.u32 %v4574, 4294901760
    %v5160 = vsub.f32 %v4574, %v5159
    %v5161 = vand.u32 %v5160, 4294901760
    %5162 = vmatpush1.msra.mxu0 %v5161
    %5163 = vmatprep.subr.mxu0 0.0
    %v5164 = vand.u32 %v4575, 4294901760
    %v5165 = vsub.f32 %v4575, %v5164
    %v5166 = vand.u32 %v5165, 4294901760
    %5167 = vmatpush1.msra.mxu0 %v5166
    %5168 = vmatprep.subr.mxu0 0.0
    %5169 = vmatpush1.msra.mxu0 0.0
    %5170 = vmatprep.subr.mxu0 0.0
    %5171 = vmatpush1.msra.mxu0 0.0
    %5172 = vmatprep.subr.mxu0 0.0
    %5173 = vmatpush1.msra.mxu0 0.0
    %5174 = vmatprep.subr.mxu0 0.0
    %5175 = vmatpush1.msra.mxu0 0.0
    %5176 = vmatprep.subr.mxu0 0.0
    %5177 = vmatpush1.msra.mxu0 0.0
    %5178 = vmatprep.subr.mxu0 0.0
    %5179 = vmatpush1.msra.mxu0 0.0
    %5180 = vmatprep.subr.mxu0 0.0
    %5181 = vmatpush1.msra.mxu0 0.0
    %5182 = vmatprep.subr.mxu0 0.0
    %5183 = vmatpush1.msra.mxu0 0.0
    %5184 = vmatprep.subr.mxu0 0.0
    %5185 = vmatpush1.msra.mxu0 0.0
    %5186 = vmatprep.subr.mxu0 0.0
    %5187 = vmatpush1.msra.mxu0 0.0
    %5188 = vmatprep.subr.mxu0 0.0
    %5189 = vmatpush1.msra.mxu0 0.0
    %5190 = vmatprep.subr.mxu0 0.0
    %5191 = vmatpush1.msra.mxu0 0.0
    %v5192 = vand.u32 %v4584, 4294901760
    %5193 = vmatprep.mubr.f32.mxu0 %v5192
    %v5194 = vand.u32 %v4555, 4294901760
    %5195 = vmatmul.mubr.f32.gmra.mrb[0].mxu0 %v5194
    %v5196 = vpop.f32.mrb[0].mxu0
    %v5197 = vadd.f32 %v5065, %v5196
    %v5198 = vpop.f32.mrb[0].mxu0
    %5199 = vdwg.mxu0
    %5200 = vmatprep.subr.mxu0 0.0
    %v5201 = vand.u32 %v4556, 4294901760
    %5202 = vmatpush1.msra.mxu0 %v5201
    %5203 = vmatprep.subr.mxu0 0.0
    %v5204 = vand.u32 %v4557, 4294901760
    %5205 = vmatpush1.msra.mxu0 %v5204
    %5206 = vmatprep.subr.mxu0 0.0
    %v5207 = vand.u32 %v4558, 4294901760
    %5208 = vmatpush1.msra.mxu0 %v5207
    %5209 = vmatprep.subr.mxu0 0.0
    %v5210 = vand.u32 %v4559, 4294901760
    %5211 = vmatpush1.msra.mxu0 %v5210
    %5212 = vmatprep.subr.mxu0 0.0
    %v5213 = vand.u32 %v4560, 4294901760
    %5214 = vmatpush1.msra.mxu0 %v5213
    %5215 = vmatprep.subr.mxu0 0.0
    %v5216 = vand.u32 %v4561, 4294901760
    %5217 = vmatpush1.msra.mxu0 %v5216
    %5218 = vmatprep.subr.mxu0 0.0
    %v5219 = vand.u32 %v4562, 4294901760
    %5220 = vmatpush1.msra.mxu0 %v5219
    %5221 = vmatprep.subr.mxu0 0.0
    %v5222 = vand.u32 %v4563, 4294901760
    %5223 = vmatpush1.msra.mxu0 %v5222
    %5224 = vmatprep.subr.mxu0 0.0
    %v5225 = vand.u32 %v4564, 4294901760
    %5226 = vmatpush1.msra.mxu0 %v5225
    %5227 = vmatprep.subr.mxu0 0.0
    %v5228 = vand.u32 %v4565, 4294901760
    %5229 = vmatpush1.msra.mxu0 %v5228
    %5230 = vmatprep.subr.mxu0 0.0
    %v5231 = vand.u32 %v4566, 4294901760
    %5232 = vmatpush1.msra.mxu0 %v5231
    %5233 = vmatprep.subr.mxu0 0.0
    %v5234 = vand.u32 %v4567, 4294901760
    %5235 = vmatpush1.msra.mxu0 %v5234
    %5236 = vmatprep.subr.mxu0 0.0
    %v5237 = vand.u32 %v4568, 4294901760
    %5238 = vmatpush1.msra.mxu0 %v5237
    %5239 = vmatprep.subr.mxu0 0.0
    %v5240 = vand.u32 %v4569, 4294901760
    %5241 = vmatpush1.msra.mxu0 %v5240
    %5242 = vmatprep.subr.mxu0 0.0
    %v5243 = vand.u32 %v4570, 4294901760
    %5244 = vmatpush1.msra.mxu0 %v5243
    %5245 = vmatprep.subr.mxu0 0.0
    %v5246 = vand.u32 %v4571, 4294901760
    %5247 = vmatpush1.msra.mxu0 %v5246
    %5248 = vmatprep.subr.mxu0 0.0
    %v5249 = vand.u32 %v4572, 4294901760
    %5250 = vmatpush1.msra.mxu0 %v5249
    %5251 = vmatprep.subr.mxu0 0.0
    %v5252 = vand.u32 %v4573, 4294901760
    %5253 = vmatpush1.msra.mxu0 %v5252
    %5254 = vmatprep.subr.mxu0 0.0
    %v5255 = vand.u32 %v4574, 4294901760
    %5256 = vmatpush1.msra.mxu0 %v5255
    %5257 = vmatprep.subr.mxu0 0.0
    %v5258 = vand.u32 %v4575, 4294901760
    %5259 = vmatpush1.msra.mxu0 %v5258
    %5260 = vmatprep.subr.mxu0 0.0
    %5261 = vmatpush1.msra.mxu0 0.0
    %5262 = vmatprep.subr.mxu0 0.0
    %5263 = vmatpush1.msra.mxu0 0.0
    %5264 = vmatprep.subr.mxu0 0.0
    %5265 = vmatpush1.msra.mxu0 0.0
    %5266 = vmatprep.subr.mxu0 0.0
    %5267 = vmatpush1.msra.mxu0 0.0
    %5268 = vmatprep.subr.mxu0 0.0
    %5269 = vmatpush1.msra.mxu0 0.0
    %5270 = vmatprep.subr.mxu0 0.0
    %5271 = vmatpush1.msra.mxu0 0.0
    %5272 = vmatprep.subr.mxu0 0.0
    %5273 = vmatpush1.msra.mxu0 0.0
    %5274 = vmatprep.subr.mxu0 0.0
    %5275 = vmatpush1.msra.mxu0 0.0
    %5276 = vmatprep.subr.mxu0 0.0
    %5277 = vmatpush1.msra.mxu0 0.0
    %5278 = vmatprep.subr.mxu0 0.0
    %5279 = vmatpush1.msra.mxu0 0.0
    %5280 = vmatprep.subr.mxu0 0.0
    %5281 = vmatpush1.msra.mxu0 0.0
    %5282 = vmatprep.subr.mxu0 0.0
    %5283 = vmatpush1.msra.mxu0 0.0
    %v5284 = vand.u32 %v4584, 4294901760
    %5285 = vmatprep.mubr.f32.mxu0 %v5284
    %v5286 = vand.u32 %v4555, 4294901760
    %5287 = vmatmul.mubr.f32.gmra.mrb[0].mxu0 %v5286
    %v5288 = vpop.f32.mrb[0].mxu0
    %v5289 = vadd.f32 %v5197, %v5288
    %v5290 = vpop.f32.mrb[0].mxu0
    %5291 = vdwg.mxu0
    %5292 = vst [vmem:[#allocation11] sm:$0xff] %v5289
    %5293 = vst.msk [vmem:[#allocation12] sm:$0xff] %vm624, %v4550
    // Predicated region
    $region78: #{decoder_forward.1} parent=1 // pred_check
      _
    $region79: #{decoder_forward.1} parent=1 // pred_check_branch
      %5295 = sbr.rel (0) target = $region81
    $region80: #{decoder_forward.1} parent=1 // pred_region
      %s5297 = ssub.s32 128, 128
      %5298 = vsyncadd [#allocation4], %s5297
      %s5300 = sshll.u32 [#allocation11], 4
      %s5301 = int_to_ptr.vmem [resolvable:$true] %s5300
      %5303 = dma.vmem_to_hbm [thread:$0]  %s5301, 128, %s14, [#allocation4]
    $region81: #{decoder_forward.1} parent=1 // pred_fallthru
      _
    // Predicated region
    $region82: #{decoder_forward.1} parent=1 // pred_check
      _
    $region83: #{decoder_forward.1} parent=1 // pred_check_branch
      %5305 = sbr.rel (0) target = $region85
    $region84: #{decoder_forward.1} parent=1 // pred_region
      %s5307 = ssub.s32 128, 128
      %5308 = vsyncadd [#allocation13], %s5307
      %s5310 = sshll.u32 [#allocation12], 4
      %s5311 = int_to_ptr.vmem [resolvable:$true] %s5310
      %5313 = dma.vmem_to_hbm [thread:$0]  %s5311, 128, %s15, [#allocation13]
    $region85: #{decoder_forward.1} parent=1 // pred_fallthru
      _
    // Predicated region
    $region86: #{decoder_forward.1} parent=1 // pred_check
      _
    $region87: #{decoder_forward.1} parent=1 // pred_check_branch
      %5315 = sbr.rel (0) target = $region89
    $region88: #{decoder_forward.1} parent=1 // pred_region
      %5316 = dma.done [#allocation4], 128
    $region89: #{decoder_forward.1} parent=1 // pred_fallthru
      _
    // Predicated region
    $region90: #{decoder_forward.1} parent=1 // pred_check
      _
    $region91: #{decoder_forward.1} parent=1 // pred_check_branch
      %5318 = sbr.rel (0) target = $region93
    $region92: #{decoder_forward.1} parent=1 // pred_region
      %5319 = dma.done [#allocation13], 128
    $region93: #{decoder_forward.1} parent=1 // pred_fallthru
      _
    %5320 = vsyncpa [#allocation3], 1
    %5321 = vsyncpa [#allocation6], 1
    %5322 = vsyncpa [#allocation9], 1
    %5323 = vsyncpa [#allocation4], 1
    %5324 = vsyncpa [#allocation13], 1

</llo_original>
